<compile_context>
chip_gen: v6e
topology: v6e:2x2x1
jax: 0.10.0
libtpu: 0.0.40
codegen_flags: <defaults>
</compile_context>

<pallas_src>
import jax
import jax.numpy as jnp
from jax import lax
from jax.experimental import pallas as pl
from jax.experimental.pallas import tpu as pltpu

LANE = 128
BF16_SUBLANE = 16


def _round_up(x, m):
    return (x + m - 1) // m * m


def bottleneck_kernel(x_ref, s1_ref, b1_ref, w1_ref, s2_ref, b2_ref, w2_ref,
                      o_ref, pad_ref, col_ref):
    """One image per grid step; channel dims padded to multiples of 128.

    x_ref  : (1, H, W, Cin_p)   bf16, x slab of the aliased concat buffer
    s1/b1  : (1, Cin_p)         f32 folded BN1 scale / bias (padded lanes = 0)
    w1_ref : (Cin_p, Cmid_p)    bf16, 1x1 conv as a channel matmul
    s2/b2  : (1, Cmid_p)        f32 folded BN2 scale / bias
    w2_ref : (9*Cmid_p, G_p)    bf16, 3x3 conv as one im2col matmul
    o_ref  : (1, H, W, G_p)     bf16, the new-feature channels of the aliased
                                concat buffer (the x channels are untouched)
    pad_ref: (H+2, Wp, Cmid_p)  bf16 scratch: spatially zero-padded h2,
                                Wp = round_up(W+2, 16) keeps rows tile-aligned
    col_ref: (H*W, 9*Cmid_p)    bf16 scratch: im2col patch matrix
    """
    _, H, W, Cin_p = x_ref.shape
    Cmid_p = w1_ref.shape[1]
    G_p = w2_ref.shape[1]
    Wp = pad_ref.shape[1]

    # ---- BN1 (folded, eval mode) + ReLU: f32 VPU epilogue from a bf16 load --
    xf = x_ref[0].reshape(H * W, Cin_p).astype(jnp.float32)
    h = jnp.maximum(xf * s1_ref[...] + b1_ref[...], 0.0)

    # ---- conv1 (1x1) == channel matmul on the MXU (bf16 operands, f32 acc) --
    y1 = jnp.dot(h.astype(jnp.bfloat16), w1_ref[...],
                 preferred_element_type=jnp.float32)            # (H*W, Cmid_p)

    # ---- BN2 (folded) + ReLU in f32, single cast feeding pad_ref / the MXU --
    h2 = jnp.maximum(y1 * s2_ref[...] + b2_ref[...], 0.0).astype(jnp.bfloat16)

    # ---- 3x3 conv, padding=1 -------------------------------------------------
    # Only the 1-pixel border needs re-zeroing each step: the interior is fully
    # overwritten, and columns >= W+2 of the pitch-padded buffer are never read.
    zrow = jnp.zeros((1, Wp, Cmid_p), jnp.bfloat16)
    zcol = jnp.zeros((H + 2, 1, Cmid_p), jnp.bfloat16)
    pad_ref[0:1, :, :] = zrow
    pad_ref[H + 1:H + 2, :, :] = zrow
    pad_ref[:, 0:1, :] = zcol
    pad_ref[:, W + 1:W + 2, :] = zcol
    pad_ref[1:H + 1, 1:W + 1, :] = h2.reshape(H, W, Cmid_p)

    # im2col: gather the 9 taps once into a (H*W, 9*Cmid_p) patch matrix with
    # lane-aligned stripes, then one big-K MXU matmul.
    for tap in range(9):                      # static unroll over the 3x3 taps
        dy, dx = tap // 3, tap % 3
        col_ref[:, tap * Cmid_p:(tap + 1) * Cmid_p] = (
            pad_ref[dy:dy + H, dx:dx + W, :].reshape(H * W, Cmid_p))

    y2 = jnp.dot(col_ref[...], w2_ref[...],
                 preferred_element_type=jnp.float32)            # (H*W, G_p)

    # ---- lane-dense bf16 store of only the new feature channels --------------
    o_ref[0] = y2.reshape(H, W, G_p).astype(o_ref.dtype)


@jax.jit
def bottleneck_forward(x_nchw, params, *, eps=1e-5):
    """NCHW f32 in / NCHW f32 out wrapper around the NHWC bf16 Pallas kernel.

    In a full DenseNet the NCHW<->NHWC conversion happens once at the network
    boundary and the channel-padded bf16 NHWC concat buffer is carried from
    block to block; it is done per call here only to match the module API.
    BatchNorm uses inference (eval-mode) semantics: running stats are folded
    into per-channel scale/bias before the kernel.
    """
    g1, be1, m1, v1 = params["bn1"]
    g2, be2, m2, v2 = params["bn2"]
    w1 = params["conv1"]          # (Cmid, Cin, 1, 1)  torch OIHW
    w2 = params["conv2"]          # (G, Cmid, 3, 3)    torch OIHW

    N, Cin, H, W = x_nchw.shape
    Cmid = w1.shape[0]
    G = w2.shape[0]

    Cin_p = _round_up(Cin, LANE)
    Cmid_p = _round_up(Cmid, LANE)
    G_p = _round_up(G, LANE)

    # x lives inside the concat buffer at a channel offset that is a multiple
    # of its own block size Cin_p, so a plain blocked index_map can address it.
    x_off = _round_up(G_p, Cin_p)
    C_buf = x_off + Cin_p
    x_blk = x_off // Cin_p

    # Fold eval-mode BatchNorm into per-channel scale/bias (padded lanes = 0,
    # so padded lanes stay exactly 0 through ReLU and the zero weight rows).
    s1 = g1 / jnp.sqrt(v1 + eps)
    b1 = be1 - m1 * s1
    s2 = g2 / jnp.sqrt(v2 + eps)
    b2 = be2 - m2 * s2

    def pad1(v, n):
        return jnp.pad(v, (0, n - v.shape[0])).reshape(1, n)

    s1_p, b1_p = pad1(s1, Cin_p), pad1(b1, Cin_p)
    s2_p, b2_p = pad1(s2, Cmid_p), pad1(b2, Cmid_p)

    # Concat buffer: channels [0, G_p) are written by the kernel (new features),
    # channels [x_off, x_off+Cin) already hold x (bf16); the rest is padding.
    x_nhwc = jnp.transpose(x_nchw, (0, 2, 3, 1)).astype(jnp.bfloat16)
    buf = jnp.pad(x_nhwc, ((0, 0), (0, 0), (0, 0), (x_off, Cin_p - Cin)))

    w1_mat = jnp.transpose(w1.reshape(Cmid, Cin), (1, 0))         # (Cin, Cmid)
    w1_p = jnp.pad(w1_mat, ((0, Cin_p - Cin), (0, Cmid_p - Cmid))
                   ).astype(jnp.bfloat16)                         # (Cin_p, Cmid_p)

    # (ky, kx, Cmid, G) -> pad -> (9*Cmid_p, G_p); row = (ky*3+kx)*Cmid_p + c,
    # matching the kernel's im2col tap/channel packing.
    w2_taps = jnp.transpose(w2, (2, 3, 1, 0))                     # (3,3,Cmid,G)
    w2_p = jnp.pad(w2_taps, ((0, 0), (0, 0), (0, Cmid_p - Cmid), (0, G_p - G))
                   ).astype(jnp.bfloat16).reshape(9 * Cmid_p, G_p)

    Wp = _round_up(W + 2, BF16_SUBLANE)

    flops = 2 * N * H * W * (Cin_p * Cmid_p + 9 * Cmid_p * G_p)
    bytes_accessed = (N * H * W * (Cin_p + G_p) * 2                 # bf16 acts
                      + (Cin_p * Cmid_p + 9 * Cmid_p * G_p) * 2     # bf16 weights
                      + (Cin_p + Cmid_p) * 2 * 4)                   # f32 scale/bias

    const = dict(pipeline_mode=pl.Buffered(1))   # single-buffer invariant operands

    out_buf = pl.pallas_call(
        bottleneck_kernel,
        out_shape=jax.ShapeDtypeStruct((N, H, W, C_buf), jnp.bfloat16),
        grid_spec=pltpu.PrefetchScalarGridSpec(
            num_scalar_prefetch=0,
            grid=(N,),
            in_specs=[
                # x slab of the (aliased) concat buffer, read at channel x_off.
                pl.BlockSpec((1, H, W, Cin_p), lambda n: (n, 0, 0, x_blk)),
                pl.BlockSpec((1, Cin_p), lambda n: (0, 0), **const),
                pl.BlockSpec((1, Cin_p), lambda n: (0, 0), **const),
                pl.BlockSpec((Cin_p, Cmid_p), lambda n: (0, 0), **const),
                pl.BlockSpec((1, Cmid_p), lambda n: (0, 0), **const),
                pl.BlockSpec((1, Cmid_p), lambda n: (0, 0), **const),
                pl.BlockSpec((9 * Cmid_p, G_p), lambda n: (0, 0), **const),
            ],
            # Only the G_p new-feature channels are ever written back; the x
            # slab of the aliased buffer is left untouched => the concat is
            # produced without any extra HBM pass.
            out_specs=pl.BlockSpec((1, H, W, G_p), lambda n: (n, 0, 0, 0)),
            scratch_shapes=[
                pltpu.VMEM((H + 2, Wp, Cmid_p), jnp.bfloat16),
                pltpu.VMEM((H * W, 9 * Cmid_p), jnp.bfloat16),
            ]),
        input_output_aliases={0: 0},
        compiler_params=pltpu.CompilerParams(
            dimension_semantics=("parallel",),
            vmem_limit_bytes=48 * 1024 * 1024),
        cost_estimate=pl.CostEstimate(
            flops=flops, transcendentals=0, bytes_accessed=bytes_accessed),
    )(buf, s1_p, b1_p, w1_p, s2_p, b2_p, w2_p)

    # NCHW f32 adapter (a real DenseNet keeps out_buf as-is for the next block
    # instead of leaving the channel-padded bf16 NHWC layout).
    new = out_buf[..., :G]
    xs = out_buf[..., x_off:x_off + Cin]
    out_nhwc = jnp.concatenate([new, xs], axis=-1).astype(jnp.float32)
    return jnp.transpose(out_nhwc, (0, 3, 1, 2))


def bottleneck_reference(x, params, *, eps=1e-5):
    """Pure-JAX NCHW reference (eval-mode BN) for the correctness check."""
    g1, be1, m1, v1 = params["bn1"]
    g2, be2, m2, v2 = params["bn2"]

    def bn(z, g, b, m, v):
        inv = g / jnp.sqrt(v + eps)
        return z * inv[None, :, None, None] + (b - m * inv)[None, :, None, None]

    dn = ("NCHW", "OIHW", "NCHW")
    h = jax.nn.relu(bn(x, g1, be1, m1, v1))
    y1 = lax.conv_general_dilated(h, params["conv1"], (1, 1), "VALID",
                                  dimension_numbers=dn)
    h2 = jax.nn.relu(bn(y1, g2, be2, m2, v2))
    y2 = lax.conv_general_dilated(h2, params["conv2"], (1, 1),
                                  ((1, 1), (1, 1)), dimension_numbers=dn)
    return jnp.concatenate([y2, x], axis=1)


def init_params(key, in_planes, growth_rate):
    cmid = 4 * growth_rate
    ks = jax.random.split(key, 8)
    params = {
        "bn1": (
            jax.random.uniform(ks[0], (in_planes,), jnp.float32, 0.5, 1.5),   # gamma
            jax.random.normal(ks[1], (in_planes,), jnp.float32) * 0.1,        # beta
            jax.random.normal(ks[2], (in_planes,), jnp.float32) * 0.1,        # running_mean
            jax.random.uniform(ks[3], (in_planes,), jnp.float32, 0.5, 1.5),   # running_var
        ),
        "conv1": jax.random.normal(ks[4], (cmid, in_planes, 1, 1), jnp.float32) * 0.1,
        "bn2": (
            jax.random.uniform(ks[5], (cmid,), jnp.float32, 0.5, 1.5),
            jax.random.normal(ks[6], (cmid,), jnp.float32) * 0.1,
            jnp.zeros((cmid,), jnp.float32),
            jnp.ones((cmid,), jnp.float32),
        ),
        "conv2": jax.random.normal(ks[7], (growth_rate, cmid, 3, 3), jnp.float32) * 0.1,
    }
    return params


if __name__ == "__main__":
    key = jax.random.PRNGKey(0)
    kx, kp = jax.random.split(key)

    N, in_planes, H, W = 2, 4, 16, 16
    growth_rate = 4

    x = jax.random.normal(kx, (N, in_planes, H, W), jnp.float32)
    params = init_params(kp, in_planes, growth_rate)

    out = bottleneck_forward(x, params)
    out = jax.block_until_ready(out)

    ref = bottleneck_reference(x, params)
    assert out.shape == (N, growth_rate + in_planes, H, W), out.shape
    # bf16 MXU operands + bf16 activation storage (f32 accumulation) =>
    # looser tolerance than pure f32.
    max_err = float(jnp.max(jnp.abs(out - ref)))
    assert jnp.allclose(out, ref, rtol=3e-2, atol=3e-2), max_err

    print("KERNEL_OK")
</pallas_src>

<mosaic_0001>
module attributes {stable_mosaic.version = 11 : i64} {
  func.func @bottleneck_kernel(%arg0: i32, %arg1: memref<1x16x16x128xbf16, #tpu.memory_space<vmem>>, %arg2: memref<1x128xf32, #tpu.memory_space<vmem>>, %arg3: memref<1x128xf32, #tpu.memory_space<vmem>>, %arg4: memref<128x128xbf16, #tpu.memory_space<vmem>>, %arg5: memref<1x128xf32, #tpu.memory_space<vmem>>, %arg6: memref<1x128xf32, #tpu.memory_space<vmem>>, %arg7: memref<1152x128xbf16, #tpu.memory_space<vmem>>, %arg8: memref<1x16x16x128xbf16, #tpu.memory_space<vmem>>, %arg9: memref<18x32x128xbf16, #tpu.memory_space<vmem>>, %arg10: memref<256x1152xbf16, #tpu.memory_space<vmem>>) attributes {dimension_semantics = [#tpu.dimension_semantics<parallel>], iteration_bounds = array<i64: 2>, scalar_prefetch = 0 : i64, scratch_operands = 2 : i64, tpu.core_type = #tpu.core_type<tc>, window_params = [{transform_indices = @transform_0, window_bounds = array<i64: 1, 16, 16, 128>}, {pipeline_mode = #tpu.pipeline_mode<synchronous>, transform_indices = @transform_1, window_bounds = array<i64: 1, 128>}, {pipeline_mode = #tpu.pipeline_mode<synchronous>, transform_indices = @transform_2, window_bounds = array<i64: 1, 128>}, {pipeline_mode = #tpu.pipeline_mode<synchronous>, transform_indices = @transform_3, window_bounds = array<i64: 128, 128>}, {pipeline_mode = #tpu.pipeline_mode<synchronous>, transform_indices = @transform_4, window_bounds = array<i64: 1, 128>}, {pipeline_mode = #tpu.pipeline_mode<synchronous>, transform_indices = @transform_5, window_bounds = array<i64: 1, 128>}, {pipeline_mode = #tpu.pipeline_mode<synchronous>, transform_indices = @transform_6, window_bounds = array<i64: 1152, 128>}, {transform_indices = @transform_7, window_bounds = array<i64: 1, 16, 16, 128>}]} {
    %c0 = arith.constant 0 : index
    %c0_0 = arith.constant 0 : index
    %c0_1 = arith.constant 0 : index
    %c0_2 = arith.constant 0 : index
    %0 = vector.load %arg1[%c0, %c0_0, %c0_1, %c0_2] : memref<1x16x16x128xbf16, #tpu.memory_space<vmem>>, vector<1x16x16x128xbf16>
    %1 = vector.shape_cast %0 : vector<1x16x16x128xbf16> to vector<16x16x128xbf16>
    %2 = vector.shape_cast %1 : vector<16x16x128xbf16> to vector<256x128xbf16>
    %3 = arith.extf %2 : vector<256x128xbf16> to vector<256x128xf32>
    %c0_3 = arith.constant 0 : index
    %c0_4 = arith.constant 0 : index
    %4 = vector.load %arg2[%c0_3, %c0_4] : memref<1x128xf32, #tpu.memory_space<vmem>>, vector<1x128xf32>
    %5 = vector.broadcast %4 : vector<1x128xf32> to vector<256x128xf32>
    %6 = arith.mulf %3, %5 : vector<256x128xf32>
    %c0_5 = arith.constant 0 : index
    %c0_6 = arith.constant 0 : index
    %7 = vector.load %arg3[%c0_5, %c0_6] : memref<1x128xf32, #tpu.memory_space<vmem>>, vector<1x128xf32>
    %8 = vector.broadcast %7 : vector<1x128xf32> to vector<256x128xf32>
    %9 = arith.addf %6, %8 : vector<256x128xf32>
    %cst = arith.constant 0.000000e+00 : f32
    %10 = vector.broadcast %cst : f32 to vector<256x128xf32>
    %11 = arith.maximumf %9, %10 : vector<256x128xf32>
    %12 = arith.truncf %11 : vector<256x128xf32> to vector<256x128xbf16>
    %c0_7 = arith.constant 0 : index
    %c0_8 = arith.constant 0 : index
    %13 = vector.load %arg4[%c0_7, %c0_8] : memref<128x128xbf16, #tpu.memory_space<vmem>>, vector<128x128xbf16>
    %cst_9 = arith.constant dense<0.000000e+00> : vector<256x128xf32>
    %14 = tpu.matmul %12, %13, %cst_9 {dimension_numbers = #tpu.dot_dimension_numbers<[1], [0], [0], [1], [0, 0, 1, 1], [], []>} : vector<256x128xbf16>, vector<128x128xbf16>, vector<256x128xf32> -> vector<256x128xf32>
    %c0_10 = arith.constant 0 : index
    %c0_11 = arith.constant 0 : index
    %15 = vector.load %arg5[%c0_10, %c0_11] : memref<1x128xf32, #tpu.memory_space<vmem>>, vector<1x128xf32>
    %16 = vector.broadcast %15 : vector<1x128xf32> to vector<256x128xf32>
    %17 = arith.mulf %14, %16 : vector<256x128xf32>
    %c0_12 = arith.constant 0 : index
    %c0_13 = arith.constant 0 : index
    %18 = vector.load %arg6[%c0_12, %c0_13] : memref<1x128xf32, #tpu.memory_space<vmem>>, vector<1x128xf32>
    %19 = vector.broadcast %18 : vector<1x128xf32> to vector<256x128xf32>
    %20 = arith.addf %17, %19 : vector<256x128xf32>
    %cst_14 = arith.constant 0.000000e+00 : f32
    %21 = vector.broadcast %cst_14 : f32 to vector<256x128xf32>
    %22 = arith.maximumf %20, %21 : vector<256x128xf32>
    %23 = arith.truncf %22 : vector<256x128xf32> to vector<256x128xbf16>
    %cst_15 = arith.constant 0.000000e+00 : bf16
    %24 = vector.broadcast %cst_15 : bf16 to vector<1x32x128xbf16>
    %cst_16 = arith.constant 0.000000e+00 : bf16
    %25 = vector.broadcast %cst_16 : bf16 to vector<18x1x128xbf16>
    %c0_17 = arith.constant 0 : index
    %c0_18 = arith.constant 0 : index
    %c0_19 = arith.constant 0 : index
    %26 = vector.load %arg9[%c0_17, %c0_18, %c0_19] : memref<18x32x128xbf16, #tpu.memory_space<vmem>>, vector<1x32x128xbf16>
    tpu.vector_store %arg9[%c0_17, %c0_18, %c0_19], %24 {strides = array<i32>} : memref<18x32x128xbf16, #tpu.memory_space<vmem>>, vector<1x32x128xbf16>,
    %c17 = arith.constant 17 : index
    %c0_20 = arith.constant 0 : index
    %c0_21 = arith.constant 0 : index
    %27 = vector.load %arg9[%c17, %c0_20, %c0_21] : memref<18x32x128xbf16, #tpu.memory_space<vmem>>, vector<1x32x128xbf16>
    tpu.vector_store %arg9[%c17, %c0_20, %c0_21], %24 {strides = array<i32>} : memref<18x32x128xbf16, #tpu.memory_space<vmem>>, vector<1x32x128xbf16>,
    %c0_22 = arith.constant 0 : index
    %c0_23 = arith.constant 0 : index
    %c0_24 = arith.constant 0 : index
    %28 = vector.load %arg9[%c0_22, %c0_23, %c0_24] : memref<18x32x128xbf16, #tpu.memory_space<vmem>>, vector<18x1x128xbf16>
    tpu.vector_store %arg9[%c0_22, %c0_23, %c0_24], %25 {strides = array<i32>} : memref<18x32x128xbf16, #tpu.memory_space<vmem>>, vector<18x1x128xbf16>,
    %c0_25 = arith.constant 0 : index
    %c17_26 = arith.constant 17 : index
    %c0_27 = arith.constant 0 : index
    %29 = vector.load %arg9[%c0_25, %c17_26, %c0_27] : memref<18x32x128xbf16, #tpu.memory_space<vmem>>, vector<18x1x128xbf16>
    tpu.vector_store %arg9[%c0_25, %c17_26, %c0_27], %25 {strides = array<i32>} : memref<18x32x128xbf16, #tpu.memory_space<vmem>>, vector<18x1x128xbf16>,
    %30 = vector.shape_cast %23 : vector<256x128xbf16> to vector<16x16x128xbf16>
    %c1 = arith.constant 1 : index
    %c1_28 = arith.constant 1 : index
    %c0_29 = arith.constant 0 : index
    %31 = vector.load %arg9[%c1, %c1_28, %c0_29] : memref<18x32x128xbf16, #tpu.memory_space<vmem>>, vector<16x16x128xbf16>
    tpu.vector_store %arg9[%c1, %c1_28, %c0_29], %30 {strides = array<i32>} : memref<18x32x128xbf16, #tpu.memory_space<vmem>>, vector<16x16x128xbf16>,
    %c0_30 = arith.constant 0 : index
    %c0_31 = arith.constant 0 : index
    %c0_32 = arith.constant 0 : index
    %32 = vector.load %arg9[%c0_30, %c0_31, %c0_32] : memref<18x32x128xbf16, #tpu.memory_space<vmem>>, vector<16x16x128xbf16>
    %33 = vector.shape_cast %32 : vector<16x16x128xbf16> to vector<256x128xbf16>
    %c0_33 = arith.constant 0 : index
    %c0_34 = arith.constant 0 : index
    %34 = vector.load %arg10[%c0_33, %c0_34] : memref<256x1152xbf16, #tpu.memory_space<vmem>>, vector<256x128xbf16>
    tpu.vector_store %arg10[%c0_33, %c0_34], %33 {strides = array<i32>} : memref<256x1152xbf16, #tpu.memory_space<vmem>>, vector<256x128xbf16>,
    %c0_35 = arith.constant 0 : index
    %c1_36 = arith.constant 1 : index
    %c0_37 = arith.constant 0 : index
    %35 = vector.load %arg9[%c0_35, %c1_36, %c0_37] : memref<18x32x128xbf16, #tpu.memory_space<vmem>>, vector<16x16x128xbf16>
    %36 = vector.shape_cast %35 : vector<16x16x128xbf16> to vector<256x128xbf16>
    %c0_38 = arith.constant 0 : index
    %c128 = arith.constant 128 : index
    %37 = vector.load %arg10[%c0_38, %c128] : memref<256x1152xbf16, #tpu.memory_space<vmem>>, vector<256x128xbf16>
    tpu.vector_store %arg10[%c0_38, %c128], %36 {strides = array<i32>} : memref<256x1152xbf16, #tpu.memory_space<vmem>>, vector<256x128xbf16>,
    %c0_39 = arith.constant 0 : index
    %c2 = arith.constant 2 : index
    %c0_40 = arith.constant 0 : index
    %38 = vector.load %arg9[%c0_39, %c2, %c0_40] : memref<18x32x128xbf16, #tpu.memory_space<vmem>>, vector<16x16x128xbf16>
    %39 = vector.shape_cast %38 : vector<16x16x128xbf16> to vector<256x128xbf16>
    %c0_41 = arith.constant 0 : index
    %c256 = arith.constant 256 : index
    %40 = vector.load %arg10[%c0_41, %c256] : memref<256x1152xbf16, #tpu.memory_space<vmem>>, vector<256x128xbf16>
    tpu.vector_store %arg10[%c0_41, %c256], %39 {strides = array<i32>} : memref<256x1152xbf16, #tpu.memory_space<vmem>>, vector<256x128xbf16>,
    %c1_42 = arith.constant 1 : index
    %c0_43 = arith.constant 0 : index
    %c0_44 = arith.constant 0 : index
    %41 = vector.load %arg9[%c1_42, %c0_43, %c0_44] : memref<18x32x128xbf16, #tpu.memory_space<vmem>>, vector<16x16x128xbf16>
    %42 = vector.shape_cast %41 : vector<16x16x128xbf16> to vector<256x128xbf16>
    %c0_45 = arith.constant 0 : index
    %c384 = arith.constant 384 : index
    %43 = vector.load %arg10[%c0_45, %c384] : memref<256x1152xbf16, #tpu.memory_space<vmem>>, vector<256x128xbf16>
    tpu.vector_store %arg10[%c0_45, %c384], %42 {strides = array<i32>} : memref<256x1152xbf16, #tpu.memory_space<vmem>>, vector<256x128xbf16>,
    %c1_46 = arith.constant 1 : index
    %c1_47 = arith.constant 1 : index
    %c0_48 = arith.constant 0 : index
    %44 = vector.load %arg9[%c1_46, %c1_47, %c0_48] : memref<18x32x128xbf16, #tpu.memory_space<vmem>>, vector<16x16x128xbf16>
    %45 = vector.shape_cast %44 : vector<16x16x128xbf16> to vector<256x128xbf16>
    %c0_49 = arith.constant 0 : index
    %c512 = arith.constant 512 : index
    %46 = vector.load %arg10[%c0_49, %c512] : memref<256x1152xbf16, #tpu.memory_space<vmem>>, vector<256x128xbf16>
    tpu.vector_store %arg10[%c0_49, %c512], %45 {strides = array<i32>} : memref<256x1152xbf16, #tpu.memory_space<vmem>>, vector<256x128xbf16>,
    %c1_50 = arith.constant 1 : index
    %c2_51 = arith.constant 2 : index
    %c0_52 = arith.constant 0 : index
    %47 = vector.load %arg9[%c1_50, %c2_51, %c0_52] : memref<18x32x128xbf16, #tpu.memory_space<vmem>>, vector<16x16x128xbf16>
    %48 = vector.shape_cast %47 : vector<16x16x128xbf16> to vector<256x128xbf16>
    %c0_53 = arith.constant 0 : index
    %c640 = arith.constant 640 : index
    %49 = vector.load %arg10[%c0_53, %c640] : memref<256x1152xbf16, #tpu.memory_space<vmem>>, vector<256x128xbf16>
    tpu.vector_store %arg10[%c0_53, %c640], %48 {strides = array<i32>} : memref<256x1152xbf16, #tpu.memory_space<vmem>>, vector<256x128xbf16>,
    %c2_54 = arith.constant 2 : index
    %c0_55 = arith.constant 0 : index
    %c0_56 = arith.constant 0 : index
    %50 = vector.load %arg9[%c2_54, %c0_55, %c0_56] : memref<18x32x128xbf16, #tpu.memory_space<vmem>>, vector<16x16x128xbf16>
    %51 = vector.shape_cast %50 : vector<16x16x128xbf16> to vector<256x128xbf16>
    %c0_57 = arith.constant 0 : index
    %c768 = arith.constant 768 : index
    %52 = vector.load %arg10[%c0_57, %c768] : memref<256x1152xbf16, #tpu.memory_space<vmem>>, vector<256x128xbf16>
    tpu.vector_store %arg10[%c0_57, %c768], %51 {strides = array<i32>} : memref<256x1152xbf16, #tpu.memory_space<vmem>>, vector<256x128xbf16>,
    %c2_58 = arith.constant 2 : index
    %c1_59 = arith.constant 1 : index
    %c0_60 = arith.constant 0 : index
    %53 = vector.load %arg9[%c2_58, %c1_59, %c0_60] : memref<18x32x128xbf16, #tpu.memory_space<vmem>>, vector<16x16x128xbf16>
    %54 = vector.shape_cast %53 : vector<16x16x128xbf16> to vector<256x128xbf16>
    %c0_61 = arith.constant 0 : index
    %c896 = arith.constant 896 : index
    %55 = vector.load %arg10[%c0_61, %c896] : memref<256x1152xbf16, #tpu.memory_space<vmem>>, vector<256x128xbf16>
    tpu.vector_store %arg10[%c0_61, %c896], %54 {strides = array<i32>} : memref<256x1152xbf16, #tpu.memory_space<vmem>>, vector<256x128xbf16>,
    %c2_62 = arith.constant 2 : index
    %c2_63 = arith.constant 2 : index
    %c0_64 = arith.constant 0 : index
    %56 = vector.load %arg9[%c2_62, %c2_63, %c0_64] : memref<18x32x128xbf16, #tpu.memory_space<vmem>>, vector<16x16x128xbf16>
    %57 = vector.shape_cast %56 : vector<16x16x128xbf16> to vector<256x128xbf16>
    %c0_65 = arith.constant 0 : index
    %c1024 = arith.constant 1024 : index
    %58 = vector.load %arg10[%c0_65, %c1024] : memref<256x1152xbf16, #tpu.memory_space<vmem>>, vector<256x128xbf16>
    tpu.vector_store %arg10[%c0_65, %c1024], %57 {strides = array<i32>} : memref<256x1152xbf16, #tpu.memory_space<vmem>>, vector<256x128xbf16>,
    %c0_66 = arith.constant 0 : index
    %c0_67 = arith.constant 0 : index
    %59 = vector.load %arg10[%c0_66, %c0_67] : memref<256x1152xbf16, #tpu.memory_space<vmem>>, vector<256x1152xbf16>
    %c0_68 = arith.constant 0 : index
    %c0_69 = arith.constant 0 : index
    %60 = vector.load %arg7[%c0_68, %c0_69] : memref<1152x128xbf16, #tpu.memory_space<vmem>>, vector<1152x128xbf16>
    %cst_70 = arith.constant dense<0.000000e+00> : vector<256x128xf32>
    %61 = tpu.matmul %59, %60, %cst_70 {dimension_numbers = #tpu.dot_dimension_numbers<[1], [0], [0], [1], [0, 0, 1, 1], [], []>} : vector<256x1152xbf16>, vector<1152x128xbf16>, vector<256x128xf32> -> vector<256x128xf32>
    %62 = vector.shape_cast %61 : vector<256x128xf32> to vector<16x16x128xf32>
    %63 = arith.truncf %62 : vector<16x16x128xf32> to vector<16x16x128xbf16>
    %c0_71 = arith.constant 0 : index
    %c0_72 = arith.constant 0 : index
    %c0_73 = arith.constant 0 : index
    %c0_74 = arith.constant 0 : index
    %64 = vector.load %arg8[%c0_71, %c0_72, %c0_73, %c0_74] : memref<1x16x16x128xbf16, #tpu.memory_space<vmem>>, vector<1x16x16x128xbf16>
    %65 = vector.shape_cast %64 : vector<1x16x16x128xbf16> to vector<16x16x128xbf16>
    %66 = vector.shape_cast %63 : vector<16x16x128xbf16> to vector<1x16x16x128xbf16>
    tpu.vector_store %arg8[%c0_71, %c0_72, %c0_73, %c0_74], %66 {strides = array<i32>} : memref<1x16x16x128xbf16, #tpu.memory_space<vmem>>, vector<1x16x16x128xbf16>,
    return
  }
  func.func @transform_0(%arg0: i32) -> (i32, i32, i32, i32) {
    %c0_i32 = arith.constant 0 : i32
    %c0_i32_0 = arith.constant 0 : i32
    %c1_i32 = arith.constant 1 : i32
    %c0_i32_1 = arith.constant 0 : i32
    return %arg0, %c0_i32, %c0_i32_0, %c1_i32 : i32, i32, i32, i32
  }
  func.func @transform_1(%arg0: i32) -> (i32, i32) {
    %c0_i32 = arith.constant 0 : i32
    %c0_i32_0 = arith.constant 0 : i32
    %c0_i32_1 = arith.constant 0 : i32
    return %c0_i32, %c0_i32_0 : i32, i32
  }
  func.func @transform_2(%arg0: i32) -> (i32, i32) {
    %c0_i32 = arith.constant 0 : i32
    %c0_i32_0 = arith.constant 0 : i32
    %c0_i32_1 = arith.constant 0 : i32
    return %c0_i32, %c0_i32_0 : i32, i32
  }
  func.func @transform_3(%arg0: i32) -> (i32, i32) {
    %c0_i32 = arith.constant 0 : i32
    %c0_i32_0 = arith.constant 0 : i32
    %c0_i32_1 = arith.constant 0 : i32
    return %c0_i32, %c0_i32_0 : i32, i32
  }
  func.func @transform_4(%arg0: i32) -> (i32, i32) {
    %c0_i32 = arith.constant 0 : i32
    %c0_i32_0 = arith.constant 0 : i32
    %c0_i32_1 = arith.constant 0 : i32
    return %c0_i32, %c0_i32_0 : i32, i32
  }
  func.func @transform_5(%arg0: i32) -> (i32, i32) {
    %c0_i32 = arith.constant 0 : i32
    %c0_i32_0 = arith.constant 0 : i32
    %c0_i32_1 = arith.constant 0 : i32
    return %c0_i32, %c0_i32_0 : i32, i32
  }
  func.func @transform_6(%arg0: i32) -> (i32, i32) {
    %c0_i32 = arith.constant 0 : i32
    %c0_i32_0 = arith.constant 0 : i32
    %c0_i32_1 = arith.constant 0 : i32
    return %c0_i32, %c0_i32_0 : i32, i32
  }
  func.func @transform_7(%arg0: i32) -> (i32, i32, i32, i32) {
    %c0_i32 = arith.constant 0 : i32
    %c0_i32_0 = arith.constant 0 : i32
    %c0_i32_1 = arith.constant 0 : i32
    %c0_i32_2 = arith.constant 0 : i32
    return %arg0, %c0_i32, %c0_i32_0, %c0_i32_1 : i32, i32, i32, i32
  }
}

</mosaic_0001>

<llo_original>
// kernel: bottleneck_forward.1
$region0: #{bottleneck_forward.1}
  #allocation0 [shape = 'u32[]', space=smem, size = 0x4, offset = 0x4, fixed_abs, tag = 'smem constant byte address 0x4 - core index']
  #allocation1 [shape = 'u32[144,128]{1,0:T(1,128)}', space=vmem, size = 0x12000, scoped, tag = 'internal scratch']
  #allocation2 [shape = 'bf16[18,32,128]{2,1,0:T(8,128)(2,1)}', space=vmem, size = 0x24000, scoped, tag = 'scratch operand']
  #allocation3 [shape = 'bf16[256,1152]{1,0:T(8,128)(2,1)}', space=vmem, size = 0x90000, scoped, tag = 'scratch operand']
  %s0 = inlined_call_operand.vmem [shape: bf16[2,16,16,256], index: 0, kind: input, shape index: {}, may-alias: {0,7}]
  %s1 = inlined_call_operand.vmem [shape: f32[1,128], index: 1, kind: input, shape index: {}]
  %s2 = inlined_call_operand.vmem [shape: f32[1,128], index: 2, kind: input, shape index: {}]
  %s3 = inlined_call_operand.vmem [shape: bf16[128,128], index: 3, kind: input, shape index: {}]
  %s4 = inlined_call_operand.vmem [shape: f32[1,128], index: 4, kind: input, shape index: {}]
  %s5 = inlined_call_operand.vmem [shape: f32[1,128], index: 5, kind: input, shape index: {}]
  %s6 = inlined_call_operand.vmem [shape: bf16[1152,128], index: 6, kind: input, shape index: {}]
  %s7 = inlined_call_operand.vmem [shape: bf16[2,16,16,256], index: 7, kind: output, shape index: {}, may-alias: {0,7}]
  %s8 = sld [smem:[#allocation0]]
  $region139: #{bottleneck_forward.1} parent=0
    _
  %s10 = ssub.s32 1, %s8
  %s11 = scalar_select 0, %s10, %s8
  $region1: #{bottleneck_forward.1} parent=0
    #allocation4 [shape = 'u8[131072]{0}', space=vmem, size = 0x20000, scoped, tag = 'input window, operand 0']
    #allocation5 [shape = 'u8[131072]{0}', space=vmem, size = 0x20000, scoped, tag = 'output window, operand 0']
    loop: start=0, step=1, limit=4
    $region2: #{bottleneck_forward.1} parent=1 // loop_pre_header
      _
    $region3: #{bottleneck_forward.1} parent=1 // loop_header
      %s13 = sphi 0, %s17
      %p14 = scmp.ge.s32.totalorder %s13, 4
      %s23 = sphi 0, %s25
      %s26 = sphi 0, %s23
      %s27 = sphi 0, %s26
      %s43 = sphi 0, %s27
      %s47 = sphi 0, %s47
      %s49 = sphi 0, %s47
      %s50 = sphi 0, %s49
      %s64 = sphi 0, %s50
      %s68 = sphi 0, %s68
      %s70 = sphi 0, %s68
      %s71 = sphi 0, %s70
      %s85 = sphi 0, %s71
      %s89 = sphi 0, %s89
      %s91 = sphi 0, %s89
      %s92 = sphi 0, %s91
      %s106 = sphi 0, %s92
      %s110 = sphi 0, %s110
      %s112 = sphi 0, %s110
      %s113 = sphi 0, %s112
      %s127 = sphi 0, %s113
      %s131 = sphi 0, %s131
      %s133 = sphi 0, %s131
      %s134 = sphi 0, %s133
      %s148 = sphi 0, %s134
      %s152 = sphi 0, %s152
      %s154 = sphi 0, %s152
      %s155 = sphi 0, %s154
      %s169 = sphi 0, %s155
      %s175 = sphi 0, %s177
      %s178 = sphi 0, %s175
      %s179 = sphi 0, %s178
      %s195 = sphi 0, %s179
    $region4: #{bottleneck_forward.1} parent=1 // loop_header_branch
      %16 = sbr.rel (%p14) target = $region8
    $region5: #{bottleneck_forward.1} parent=1 // loop_body
      %s18 = ssub.s32 %s13, 1
      %s19 = ssub.s32 %s13, 2
      %s20 = sadd.s32 %s13, 1
      %s21 = ssub.s32 %s13, %s20
      %p22 = scmp.eq.s32.totalorder %s21, 0
      %s24 = sadd.s32 %s23, 1
      %s25 = scalar_select %p22, %s23, %s24
      %p28 = pneg %p22
      %p29 = scmp.eq.s32.totalorder %s13, 1
      %p30 = por %p28, %p29
      %p31 = scmp.ne.s32.totalorder %s23, %s26
      %p32 = scmp.eq.s32.totalorder %s13, 0
      %p33 = por %p31, %p32
      %p34 = scmp.ne.s32.totalorder %s23, %s26
      %p35 = scmp.eq.s32.totalorder %s18, 1
      %p36 = por %p34, %p35
      %p37 = scmp.ne.s32.totalorder %s26, %s27
      %p38 = scmp.eq.s32.totalorder %s18, 0
      %p39 = por %p37, %p38
      %p40 = scmp.ne.s32.totalorder %s26, %s27
      %p41 = scmp.eq.s32.totalorder %s19, 1
      %p42 = por %p40, %p41
      %p44 = scmp.ne.s32.totalorder %s27, %s43
      %p45 = scmp.eq.s32.totalorder %s19, 0
      %p46 = por %p44, %p45
      %s48 = sadd.s32 %s47, 1
      %p51 = scmp.eq.s32.totalorder %s13, 1
      %p52 = scmp.ne.s32.totalorder %s47, %s49
      %p53 = scmp.eq.s32.totalorder %s13, 0
      %p54 = por %p52, %p53
      %p55 = scmp.ne.s32.totalorder %s47, %s49
      %p56 = scmp.eq.s32.totalorder %s18, 1
      %p57 = por %p55, %p56
      %p58 = scmp.ne.s32.totalorder %s49, %s50
      %p59 = scmp.eq.s32.totalorder %s18, 0
      %p60 = por %p58, %p59
      %p61 = scmp.ne.s32.totalorder %s49, %s50
      %p62 = scmp.eq.s32.totalorder %s19, 1
      %p63 = por %p61, %p62
      %p65 = scmp.ne.s32.totalorder %s50, %s64
      %p66 = scmp.eq.s32.totalorder %s19, 0
      %p67 = por %p65, %p66
      %s69 = sadd.s32 %s68, 1
      %p72 = scmp.eq.s32.totalorder %s13, 1
      %p73 = scmp.ne.s32.totalorder %s68, %s70
      %p74 = scmp.eq.s32.totalorder %s13, 0
      %p75 = por %p73, %p74
      %p76 = scmp.ne.s32.totalorder %s68, %s70
      %p77 = scmp.eq.s32.totalorder %s18, 1
      %p78 = por %p76, %p77
      %p79 = scmp.ne.s32.totalorder %s70, %s71
      %p80 = scmp.eq.s32.totalorder %s18, 0
      %p81 = por %p79, %p80
      %p82 = scmp.ne.s32.totalorder %s70, %s71
      %p83 = scmp.eq.s32.totalorder %s19, 1
      %p84 = por %p82, %p83
      %p86 = scmp.ne.s32.totalorder %s71, %s85
      %p87 = scmp.eq.s32.totalorder %s19, 0
      %p88 = por %p86, %p87
      %s90 = sadd.s32 %s89, 1
      %p93 = scmp.eq.s32.totalorder %s13, 1
      %p94 = scmp.ne.s32.totalorder %s89, %s91
      %p95 = scmp.eq.s32.totalorder %s13, 0
      %p96 = por %p94, %p95
      %p97 = scmp.ne.s32.totalorder %s89, %s91
      %p98 = scmp.eq.s32.totalorder %s18, 1
      %p99 = por %p97, %p98
      %p100 = scmp.ne.s32.totalorder %s91, %s92
      %p101 = scmp.eq.s32.totalorder %s18, 0
      %p102 = por %p100, %p101
      %p103 = scmp.ne.s32.totalorder %s91, %s92
      %p104 = scmp.eq.s32.totalorder %s19, 1
      %p105 = por %p103, %p104
      %p107 = scmp.ne.s32.totalorder %s92, %s106
      %p108 = scmp.eq.s32.totalorder %s19, 0
      %p109 = por %p107, %p108
      %s111 = sadd.s32 %s110, 1
      %p114 = scmp.eq.s32.totalorder %s13, 1
      %p115 = scmp.ne.s32.totalorder %s110, %s112
      %p116 = scmp.eq.s32.totalorder %s13, 0
      %p117 = por %p115, %p116
      %p118 = scmp.ne.s32.totalorder %s110, %s112
      %p119 = scmp.eq.s32.totalorder %s18, 1
      %p120 = por %p118, %p119
      %p121 = scmp.ne.s32.totalorder %s112, %s113
      %p122 = scmp.eq.s32.totalorder %s18, 0
      %p123 = por %p121, %p122
      %p124 = scmp.ne.s32.totalorder %s112, %s113
      %p125 = scmp.eq.s32.totalorder %s19, 1
      %p126 = por %p124, %p125
      %p128 = scmp.ne.s32.totalorder %s113, %s127
      %p129 = scmp.eq.s32.totalorder %s19, 0
      %p130 = por %p128, %p129
      %s132 = sadd.s32 %s131, 1
      %p135 = scmp.eq.s32.totalorder %s13, 1
      %p136 = scmp.ne.s32.totalorder %s131, %s133
      %p137 = scmp.eq.s32.totalorder %s13, 0
      %p138 = por %p136, %p137
      %p139 = scmp.ne.s32.totalorder %s131, %s133
      %p140 = scmp.eq.s32.totalorder %s18, 1
      %p141 = por %p139, %p140
      %p142 = scmp.ne.s32.totalorder %s133, %s134
      %p143 = scmp.eq.s32.totalorder %s18, 0
      %p144 = por %p142, %p143
      %p145 = scmp.ne.s32.totalorder %s133, %s134
      %p146 = scmp.eq.s32.totalorder %s19, 1
      %p147 = por %p145, %p146
      %p149 = scmp.ne.s32.totalorder %s134, %s148
      %p150 = scmp.eq.s32.totalorder %s19, 0
      %p151 = por %p149, %p150
      %s153 = sadd.s32 %s152, 1
      %p156 = scmp.eq.s32.totalorder %s13, 1
      %p157 = scmp.ne.s32.totalorder %s152, %s154
      %p158 = scmp.eq.s32.totalorder %s13, 0
      %p159 = por %p157, %p158
      %p160 = scmp.ne.s32.totalorder %s152, %s154
      %p161 = scmp.eq.s32.totalorder %s18, 1
      %p162 = por %p160, %p161
      %p163 = scmp.ne.s32.totalorder %s154, %s155
      %p164 = scmp.eq.s32.totalorder %s18, 0
      %p165 = por %p163, %p164
      %p166 = scmp.ne.s32.totalorder %s154, %s155
      %p167 = scmp.eq.s32.totalorder %s19, 1
      %p168 = por %p166, %p167
      %p170 = scmp.ne.s32.totalorder %s155, %s169
      %p171 = scmp.eq.s32.totalorder %s19, 0
      %p172 = por %p170, %p171
      %s173 = ssub.s32 %s13, %s20
      %p174 = scmp.eq.s32.totalorder %s173, 0
      %s176 = sadd.s32 %s175, 1
      %s177 = scalar_select %p174, %s175, %s176
      %p180 = pneg %p174
      %p181 = scmp.eq.s32.totalorder %s13, 1
      %p182 = por %p180, %p181
      %p183 = scmp.ne.s32.totalorder %s175, %s178
      %p184 = scmp.eq.s32.totalorder %s13, 0
      %p185 = por %p183, %p184
      %p186 = scmp.ne.s32.totalorder %s175, %s178
      %p187 = scmp.eq.s32.totalorder %s18, 1
      %p188 = por %p186, %p187
      %p189 = scmp.ne.s32.totalorder %s178, %s179
      %p190 = scmp.eq.s32.totalorder %s18, 0
      %p191 = por %p189, %p190
      %p192 = scmp.ne.s32.totalorder %s178, %s179
      %p193 = scmp.eq.s32.totalorder %s19, 1
      %p194 = por %p192, %p193
      %p196 = scmp.ne.s32.totalorder %s179, %s195
      %p197 = scmp.eq.s32.totalorder %s19, 0
      %p198 = por %p196, %p197
      %p199 = scmp.le.s32.totalorder 1, %s13
      %p200 = scmp.lt.s32.totalorder %s13, 3
      %p201 = pnand %p199, %p200
      %p202 = pneg %p201
      // Predicated region
      $region9: #{bottleneck_forward.1} parent=5 // pred_check
        _
      $region10: #{bottleneck_forward.1} parent=5 // pred_check_branch
        %204 = sbr.rel (%p201) target = $region12
      $region11: #{bottleneck_forward.1} parent=5 // pred_region
        %s205 = ssub.s32 %s13, 1
        // Predicated region
        $region13: #{bottleneck_forward.1} parent=11 // pred_check
          %p206 = pneg %p60
        $region14: #{bottleneck_forward.1} parent=11 // pred_check_branch
          %208 = sbr.rel (%p206) target = $region16
        $region15: #{bottleneck_forward.1} parent=11 // pred_region
          _
        $region16: #{bottleneck_forward.1} parent=11 // pred_fallthru
          _
        // Predicated region
        $region17: #{bottleneck_forward.1} parent=11 // pred_check
          %p209 = pneg %p81
        $region18: #{bottleneck_forward.1} parent=11 // pred_check_branch
          %211 = sbr.rel (%p209) target = $region20
        $region19: #{bottleneck_forward.1} parent=11 // pred_region
          _
        $region20: #{bottleneck_forward.1} parent=11 // pred_fallthru
          _
        // Predicated region
        $region21: #{bottleneck_forward.1} parent=11 // pred_check
          %p212 = pneg %p102
        $region22: #{bottleneck_forward.1} parent=11 // pred_check_branch
          %214 = sbr.rel (%p212) target = $region24
        $region23: #{bottleneck_forward.1} parent=11 // pred_region
          _
        $region24: #{bottleneck_forward.1} parent=11 // pred_fallthru
          _
        // Predicated region
        $region25: #{bottleneck_forward.1} parent=11 // pred_check
          %p215 = pneg %p123
        $region26: #{bottleneck_forward.1} parent=11 // pred_check_branch
          %217 = sbr.rel (%p215) target = $region28
        $region27: #{bottleneck_forward.1} parent=11 // pred_region
          _
        $region28: #{bottleneck_forward.1} parent=11 // pred_fallthru
          _
        // Predicated region
        $region29: #{bottleneck_forward.1} parent=11 // pred_check
          %p218 = pneg %p144
        $region30: #{bottleneck_forward.1} parent=11 // pred_check_branch
          %220 = sbr.rel (%p218) target = $region32
        $region31: #{bottleneck_forward.1} parent=11 // pred_region
          _
        $region32: #{bottleneck_forward.1} parent=11 // pred_fallthru
          _
        // Predicated region
        $region33: #{bottleneck_forward.1} parent=11 // pred_check
          %p221 = pneg %p165
        $region34: #{bottleneck_forward.1} parent=11 // pred_check_branch
          %223 = sbr.rel (%p221) target = $region36
        $region35: #{bottleneck_forward.1} parent=11 // pred_region
          _
        $region36: #{bottleneck_forward.1} parent=11 // pred_fallthru
          _
      $region12: #{bottleneck_forward.1} parent=5 // pred_fallthru
        _
      %p224 = scmp.lt.s32.totalorder %s13, 2
      // Predicated region
      $region37: #{bottleneck_forward.1} parent=5 // pred_check
        %p225 = pneg %p224
      $region38: #{bottleneck_forward.1} parent=5 // pred_check_branch
        %227 = sbr.rel (%p225) target = $region40
      $region39: #{bottleneck_forward.1} parent=5 // pred_region
        // Predicated region
        $region41: #{bottleneck_forward.1} parent=39 // pred_check
          %p228 = pneg %p33
        $region42: #{bottleneck_forward.1} parent=39 // pred_check_branch
          %230 = sbr.rel (%p228) target = $region44
        $region43: #{bottleneck_forward.1} parent=39 // pred_region
          %s231 = sand.u32 %s23, 1
          %s232 = sand.u32 %s23, 1
          %s233 = smul.addr %s232, 128
          %s234 = scalar_lea.vmem [#allocation4], %s233
          %s235 = smul.addr %s13, 64
          %s236 = sadd.s32 1, %s235
          %s237 = smul.addr %s236, 4
          %s238 = scalar_lea.vmem %s0, %s237
          // Predicated region
          $region45: #{bottleneck_forward.1} parent=43 // pred_check
            _
          $region46: #{bottleneck_forward.1} parent=43 // pred_check_branch
            %240 = sbr.rel (0) target = $region48
          $region47: #{bottleneck_forward.1} parent=43 // pred_region
            // Predicated region
            $region49: #{bottleneck_forward.1} parent=47 // pred_check
              _
            $region50: #{bottleneck_forward.1} parent=47 // pred_check_branch
              %242 = sbr.rel target = $region52
            $region51: #{bottleneck_forward.1} parent=47 // pred_region
              // Predicated region
              $region64: #{bottleneck_forward.1} parent=51 // pred_check
                _
              $region65: #{bottleneck_forward.1} parent=51 // pred_check_branch
                %320 = sbr.rel (0) target = $region67
              $region66: #{bottleneck_forward.1} parent=51 // pred_region
                loop: start=0, step=1, limit=1
                $region68: #{bottleneck_forward.1} parent=66 // loop_pre_header
                  _
                $region69: #{bottleneck_forward.1} parent=66 // loop_header
                  %s322 = sphi 0, %s326
                  %p323 = scmp.ge.s32.totalorder %s322, 1
                  %s327 = sphi %s238, %s238
                  %s328 = sphi %s234, %s234
                $region70: #{bottleneck_forward.1} parent=66 // loop_header_branch
                  %325 = sbr.rel (%p323) target = $region74
                $region71: #{bottleneck_forward.1} parent=66 // loop_body
                  _
                $region72: #{bottleneck_forward.1} parent=66 // loop_footer
                  %s326 = sadd.s32 1, %s322
                $region73: #{bottleneck_forward.1} parent=66 // loop_footer_branch
                  %321 = sbr.rel target = $region69
                $region74: #{bottleneck_forward.1} parent=66 // loop_exit
                  _
                %s330 = ssub.s32 16, 1
                loop: start=0, step=1, limit=1
                $region75: #{bottleneck_forward.1} parent=66 // loop_pre_header
                  _
                $region76: #{bottleneck_forward.1} parent=66 // loop_header
                  %s332 = sphi 0, %s336
                  %p333 = scmp.ge.s32.totalorder %s332, 1
                  %s337 = sphi %s238, %s238
                  %s338 = sphi %s234, %s234
                $region77: #{bottleneck_forward.1} parent=66 // loop_header_branch
                  %335 = sbr.rel (%p333) target = $region81
                $region78: #{bottleneck_forward.1} parent=66 // loop_body
                  %v339 = vld [vmem:[%s337] sm:%s330]
                  %340 = vst [vmem:[%s338] sm:%s330] %v339
                  %v341 = vld [vmem:[%s337 + $0x8] sm:%s330]
                  %342 = vst [vmem:[%s338 + $0x4] sm:%s330] %v341
                  %v343 = vld [vmem:[%s337 + $0x10] sm:%s330]
                  %344 = vst [vmem:[%s338 + $0x8] sm:%s330] %v343
                  %v345 = vld [vmem:[%s337 + $0x18] sm:%s330]
                  %346 = vst [vmem:[%s338 + $0xc] sm:%s330] %v345
                  %v347 = vld [vmem:[%s337 + $0x20] sm:%s330]
                  %348 = vst [vmem:[%s338 + $0x10] sm:%s330] %v347
                  %v349 = vld [vmem:[%s337 + $0x28] sm:%s330]
                  %350 = vst [vmem:[%s338 + $0x14] sm:%s330] %v349
                  %v351 = vld [vmem:[%s337 + $0x30] sm:%s330]
                  %352 = vst [vmem:[%s338 + $0x18] sm:%s330] %v351
                  %v353 = vld [vmem:[%s337 + $0x38] sm:%s330]
                  %354 = vst [vmem:[%s338 + $0x1c] sm:%s330] %v353
                  %v355 = vld [vmem:[%s337 + $0x40] sm:%s330]
                  %356 = vst [vmem:[%s338 + $0x20] sm:%s330] %v355
                  %v357 = vld [vmem:[%s337 + $0x48] sm:%s330]
                  %358 = vst [vmem:[%s338 + $0x24] sm:%s330] %v357
                  %v359 = vld [vmem:[%s337 + $0x50] sm:%s330]
                  %360 = vst [vmem:[%s338 + $0x28] sm:%s330] %v359
                  %v361 = vld [vmem:[%s337 + $0x58] sm:%s330]
                  %362 = vst [vmem:[%s338 + $0x2c] sm:%s330] %v361
                  %v363 = vld [vmem:[%s337 + $0x60] sm:%s330]
                  %364 = vst [vmem:[%s338 + $0x30] sm:%s330] %v363
                  %v365 = vld [vmem:[%s337 + $0x68] sm:%s330]
                  %366 = vst [vmem:[%s338 + $0x34] sm:%s330] %v365
                  %v367 = vld [vmem:[%s337 + $0x70] sm:%s330]
                  %368 = vst [vmem:[%s338 + $0x38] sm:%s330] %v367
                  %v369 = vld [vmem:[%s337 + $0x78] sm:%s330]
                  %370 = vst [vmem:[%s338 + $0x3c] sm:%s330] %v369
                  %v371 = vld [vmem:[%s337 + $0x80] sm:%s330]
                  %372 = vst [vmem:[%s338 + $0x40] sm:%s330] %v371
                  %v373 = vld [vmem:[%s337 + $0x88] sm:%s330]
                  %374 = vst [vmem:[%s338 + $0x44] sm:%s330] %v373
                  %v375 = vld [vmem:[%s337 + $0x90] sm:%s330]
                  %376 = vst [vmem:[%s338 + $0x48] sm:%s330] %v375
                  %v377 = vld [vmem:[%s337 + $0x98] sm:%s330]
                  %378 = vst [vmem:[%s338 + $0x4c] sm:%s330] %v377
                  %v379 = vld [vmem:[%s337 + $0xa0] sm:%s330]
                  %380 = vst [vmem:[%s338 + $0x50] sm:%s330] %v379
                  %v381 = vld [vmem:[%s337 + $0xa8] sm:%s330]
                  %382 = vst [vmem:[%s338 + $0x54] sm:%s330] %v381
                  %v383 = vld [vmem:[%s337 + $0xb0] sm:%s330]
                  %384 = vst [vmem:[%s338 + $0x58] sm:%s330] %v383
                  %v385 = vld [vmem:[%s337 + $0xb8] sm:%s330]
                  %386 = vst [vmem:[%s338 + $0x5c] sm:%s330] %v385
                  %v387 = vld [vmem:[%s337 + $0xc0] sm:%s330]
                  %388 = vst [vmem:[%s338 + $0x60] sm:%s330] %v387
                  %v389 = vld [vmem:[%s337 + $0xc8] sm:%s330]
                  %390 = vst [vmem:[%s338 + $0x64] sm:%s330] %v389
                  %v391 = vld [vmem:[%s337 + $0xd0] sm:%s330]
                  %392 = vst [vmem:[%s338 + $0x68] sm:%s330] %v391
                  %v393 = vld [vmem:[%s337 + $0xd8] sm:%s330]
                  %394 = vst [vmem:[%s338 + $0x6c] sm:%s330] %v393
                  %v395 = vld [vmem:[%s337 + $0xe0] sm:%s330]
                  %396 = vst [vmem:[%s338 + $0x70] sm:%s330] %v395
                  %v397 = vld [vmem:[%s337 + $0xe8] sm:%s330]
                  %398 = vst [vmem:[%s338 + $0x74] sm:%s330] %v397
                  %v399 = vld [vmem:[%s337 + $0xf0] sm:%s330]
                  %400 = vst [vmem:[%s338 + $0x78] sm:%s330] %v399
                  %v401 = vld [vmem:[%s337 + $0xf8] sm:%s330]
                  %402 = vst [vmem:[%s338 + $0x7c] sm:%s330] %v401
                $region79: #{bottleneck_forward.1} parent=66 // loop_footer
                  %s336 = sadd.s32 1, %s332
                $region80: #{bottleneck_forward.1} parent=66 // loop_footer_branch
                  %331 = sbr.rel target = $region76
                $region81: #{bottleneck_forward.1} parent=66 // loop_exit
                  _
              $region67: #{bottleneck_forward.1} parent=51 // pred_fallthru
                _
            $region52: #{bottleneck_forward.1} parent=47 // pred_fallthru
              _
            // Predicated region
            $region53: #{bottleneck_forward.1} parent=47 // pred_check
              _
            $region54: #{bottleneck_forward.1} parent=47 // pred_check_branch
              %244 = sbr.rel (0) target = $region56
            $region55: #{bottleneck_forward.1} parent=47 // pred_region
              %s246 = ssub.s32 16, 1
              loop: start=0, step=1, limit=1
              $region57: #{bottleneck_forward.1} parent=55 // loop_pre_header
                _
              $region58: #{bottleneck_forward.1} parent=55 // loop_header
                %s248 = sphi 0, %s252
                %p249 = scmp.ge.s32.totalorder %s248, 1
                %s253 = sphi %s238, %s238
                %s254 = sphi %s234, %s234
              $region59: #{bottleneck_forward.1} parent=55 // loop_header_branch
                %251 = sbr.rel (%p249) target = $region63
              $region60: #{bottleneck_forward.1} parent=55 // loop_body
                %v255 = vld [vmem:[%s253] sm:%s246]
                %256 = vst [vmem:[%s254] sm:%s246] %v255
                %v257 = vld [vmem:[%s253 + $0x8] sm:%s246]
                %258 = vst [vmem:[%s254 + $0x4] sm:%s246] %v257
                %v259 = vld [vmem:[%s253 + $0x10] sm:%s246]
                %260 = vst [vmem:[%s254 + $0x8] sm:%s246] %v259
                %v261 = vld [vmem:[%s253 + $0x18] sm:%s246]
                %262 = vst [vmem:[%s254 + $0xc] sm:%s246] %v261
                %v263 = vld [vmem:[%s253 + $0x20] sm:%s246]
                %264 = vst [vmem:[%s254 + $0x10] sm:%s246] %v263
                %v265 = vld [vmem:[%s253 + $0x28] sm:%s246]
                %266 = vst [vmem:[%s254 + $0x14] sm:%s246] %v265
                %v267 = vld [vmem:[%s253 + $0x30] sm:%s246]
                %268 = vst [vmem:[%s254 + $0x18] sm:%s246] %v267
                %v269 = vld [vmem:[%s253 + $0x38] sm:%s246]
                %270 = vst [vmem:[%s254 + $0x1c] sm:%s246] %v269
                %v271 = vld [vmem:[%s253 + $0x40] sm:%s246]
                %272 = vst [vmem:[%s254 + $0x20] sm:%s246] %v271
                %v273 = vld [vmem:[%s253 + $0x48] sm:%s246]
                %274 = vst [vmem:[%s254 + $0x24] sm:%s246] %v273
                %v275 = vld [vmem:[%s253 + $0x50] sm:%s246]
                %276 = vst [vmem:[%s254 + $0x28] sm:%s246] %v275
                %v277 = vld [vmem:[%s253 + $0x58] sm:%s246]
                %278 = vst [vmem:[%s254 + $0x2c] sm:%s246] %v277
                %v279 = vld [vmem:[%s253 + $0x60] sm:%s246]
                %280 = vst [vmem:[%s254 + $0x30] sm:%s246] %v279
                %v281 = vld [vmem:[%s253 + $0x68] sm:%s246]
                %282 = vst [vmem:[%s254 + $0x34] sm:%s246] %v281
                %v283 = vld [vmem:[%s253 + $0x70] sm:%s246]
                %284 = vst [vmem:[%s254 + $0x38] sm:%s246] %v283
                %v285 = vld [vmem:[%s253 + $0x78] sm:%s246]
                %286 = vst [vmem:[%s254 + $0x3c] sm:%s246] %v285
                %v287 = vld [vmem:[%s253 + $0x80] sm:%s246]
                %288 = vst [vmem:[%s254 + $0x40] sm:%s246] %v287
                %v289 = vld [vmem:[%s253 + $0x88] sm:%s246]
                %290 = vst [vmem:[%s254 + $0x44] sm:%s246] %v289
                %v291 = vld [vmem:[%s253 + $0x90] sm:%s246]
                %292 = vst [vmem:[%s254 + $0x48] sm:%s246] %v291
                %v293 = vld [vmem:[%s253 + $0x98] sm:%s246]
                %294 = vst [vmem:[%s254 + $0x4c] sm:%s246] %v293
                %v295 = vld [vmem:[%s253 + $0xa0] sm:%s246]
                %296 = vst [vmem:[%s254 + $0x50] sm:%s246] %v295
                %v297 = vld [vmem:[%s253 + $0xa8] sm:%s246]
                %298 = vst [vmem:[%s254 + $0x54] sm:%s246] %v297
                %v299 = vld [vmem:[%s253 + $0xb0] sm:%s246]
                %300 = vst [vmem:[%s254 + $0x58] sm:%s246] %v299
                %v301 = vld [vmem:[%s253 + $0xb8] sm:%s246]
                %302 = vst [vmem:[%s254 + $0x5c] sm:%s246] %v301
                %v303 = vld [vmem:[%s253 + $0xc0] sm:%s246]
                %304 = vst [vmem:[%s254 + $0x60] sm:%s246] %v303
                %v305 = vld [vmem:[%s253 + $0xc8] sm:%s246]
                %306 = vst [vmem:[%s254 + $0x64] sm:%s246] %v305
                %v307 = vld [vmem:[%s253 + $0xd0] sm:%s246]
                %308 = vst [vmem:[%s254 + $0x68] sm:%s246] %v307
                %v309 = vld [vmem:[%s253 + $0xd8] sm:%s246]
                %310 = vst [vmem:[%s254 + $0x6c] sm:%s246] %v309
                %v311 = vld [vmem:[%s253 + $0xe0] sm:%s246]
                %312 = vst [vmem:[%s254 + $0x70] sm:%s246] %v311
                %v313 = vld [vmem:[%s253 + $0xe8] sm:%s246]
                %314 = vst [vmem:[%s254 + $0x74] sm:%s246] %v313
                %v315 = vld [vmem:[%s253 + $0xf0] sm:%s246]
                %316 = vst [vmem:[%s254 + $0x78] sm:%s246] %v315
                %v317 = vld [vmem:[%s253 + $0xf8] sm:%s246]
                %318 = vst [vmem:[%s254 + $0x7c] sm:%s246] %v317
              $region61: #{bottleneck_forward.1} parent=55 // loop_footer
                %s252 = sadd.s32 1, %s248
              $region62: #{bottleneck_forward.1} parent=55 // loop_footer_branch
                %247 = sbr.rel target = $region58
              $region63: #{bottleneck_forward.1} parent=55 // loop_exit
                _
            $region56: #{bottleneck_forward.1} parent=47 // pred_fallthru
              _
          $region48: #{bottleneck_forward.1} parent=43 // pred_fallthru
            _
          %403 = vnop
        $region44: #{bottleneck_forward.1} parent=39 // pred_fallthru
          _
      $region40: #{bottleneck_forward.1} parent=5 // pred_fallthru
        _
      %p404 = scmp.le.s32.totalorder 1, %s13
      %p405 = scmp.lt.s32.totalorder %s13, 3
      %p406 = pnand %p404, %p405
      %p407 = pneg %p406
      // Predicated region
      $region82: #{bottleneck_forward.1} parent=5 // pred_check
        _
      $region83: #{bottleneck_forward.1} parent=5 // pred_check_branch
        %409 = sbr.rel (%p406) target = $region85
      $region84: #{bottleneck_forward.1} parent=5 // pred_region
        %s410 = ssub.s32 %s13, 1
        %s411 = sand.u32 %s26, 1
        %s412 = sand.u32 %s26, 1
        %s413 = smul.addr %s412, 128
        %s414 = scalar_lea.vmem [#allocation4], %s413
        // Predicated region
        $region86: #{bottleneck_forward.1} parent=84 // pred_check
          %p415 = pneg %p39
        $region87: #{bottleneck_forward.1} parent=84 // pred_check_branch
          %417 = sbr.rel (%p415) target = $region89
        $region88: #{bottleneck_forward.1} parent=84 // pred_region
          _
        $region89: #{bottleneck_forward.1} parent=84 // pred_fallthru
          _
        %s418 = sand.u32 %s26, 1
        %s419 = sand.u32 %s26, 1
        %s420 = smul.addr %s419, 128
        %s421 = scalar_lea.vmem [#allocation4], %s420
        %p422 = pneg %p39
        %p423 = pneg %p36
        %p424 = pneg %p60
        %p425 = pneg %p57
        %p426 = pneg %p81
        %p427 = pneg %p78
        %p428 = pneg %p102
        %p429 = pneg %p99
        %p430 = pneg %p123
        %p431 = pneg %p120
        %p432 = pneg %p144
        %p433 = pneg %p141
        %p434 = pneg %p165
        %p435 = pneg %p162
        %p436 = pneg %p191
        %p437 = pneg %p188
        %s438 = sand.u32 %s178, 1
        %s439 = sand.u32 %s178, 1
        %s440 = smul.addr %s439, 128
        %s441 = scalar_lea.vmem [#allocation5], %s440
        %v443 = vld [vmem:[%s414] sm:$0xf]
        %v444 = vld [vmem:[%s414 + $0x4] sm:$0xf]
        %v445 = vld [vmem:[%s414 + $0x8] sm:$0xf]
        %v446 = vld [vmem:[%s414 + $0xc] sm:$0xf]
        %v447 = vld [vmem:[%s414 + $0x10] sm:$0xf]
        %v448 = vld [vmem:[%s414 + $0x14] sm:$0xf]
        %v449 = vld [vmem:[%s414 + $0x18] sm:$0xf]
        %v450 = vld [vmem:[%s414 + $0x1c] sm:$0xf]
        %v451 = vld [vmem:[%s414 + $0x20] sm:$0xf]
        %v452 = vld [vmem:[%s414 + $0x24] sm:$0xf]
        %v453 = vld [vmem:[%s414 + $0x28] sm:$0xf]
        %v454 = vld [vmem:[%s414 + $0x2c] sm:$0xf]
        %v455 = vld [vmem:[%s414 + $0x30] sm:$0xf]
        %v456 = vld [vmem:[%s414 + $0x34] sm:$0xf]
        %v457 = vld [vmem:[%s414 + $0x38] sm:$0xf]
        %v458 = vld [vmem:[%s414 + $0x3c] sm:$0xf]
        %v459 = vld [vmem:[%s414 + $0x40] sm:$0xf]
        %v460 = vld [vmem:[%s414 + $0x44] sm:$0xf]
        %v461 = vld [vmem:[%s414 + $0x48] sm:$0xf]
        %v462 = vld [vmem:[%s414 + $0x4c] sm:$0xf]
        %v463 = vld [vmem:[%s414 + $0x50] sm:$0xf]
        %v464 = vld [vmem:[%s414 + $0x54] sm:$0xf]
        %v465 = vld [vmem:[%s414 + $0x58] sm:$0xf]
        %v466 = vld [vmem:[%s414 + $0x5c] sm:$0xf]
        %v467 = vld [vmem:[%s414 + $0x60] sm:$0xf]
        %v468 = vld [vmem:[%s414 + $0x64] sm:$0xf]
        %v469 = vld [vmem:[%s414 + $0x68] sm:$0xf]
        %v470 = vld [vmem:[%s414 + $0x6c] sm:$0xf]
        %v471 = vld [vmem:[%s414 + $0x70] sm:$0xf]
        %v472 = vld [vmem:[%s414 + $0x74] sm:$0xf]
        %v473 = vld [vmem:[%s414 + $0x78] sm:$0xf]
        %v474 = vld [vmem:[%s414 + $0x7c] sm:$0xf]
        %v475 = vunpack.c.l.bf16 %v443
        %v476 = vunpack.c.l.bf16 %v444
        %v477 = vunpack.c.l.bf16 %v445
        %v478 = vunpack.c.l.bf16 %v446
        %v479 = vunpack.c.l.bf16 %v447
        %v480 = vunpack.c.l.bf16 %v448
        %v481 = vunpack.c.l.bf16 %v449
        %v482 = vunpack.c.l.bf16 %v450
        %v483 = vunpack.c.l.bf16 %v451
        %v484 = vunpack.c.l.bf16 %v452
        %v485 = vunpack.c.l.bf16 %v453
        %v486 = vunpack.c.l.bf16 %v454
        %v487 = vunpack.c.l.bf16 %v455
        %v488 = vunpack.c.l.bf16 %v456
        %v489 = vunpack.c.l.bf16 %v457
        %v490 = vunpack.c.l.bf16 %v458
        %v491 = vunpack.c.l.bf16 %v459
        %v492 = vunpack.c.l.bf16 %v460
        %v493 = vunpack.c.l.bf16 %v461
        %v494 = vunpack.c.l.bf16 %v462
        %v495 = vunpack.c.l.bf16 %v463
        %v496 = vunpack.c.l.bf16 %v464
        %v497 = vunpack.c.l.bf16 %v465
        %v498 = vunpack.c.l.bf16 %v466
        %v499 = vunpack.c.l.bf16 %v467
        %v500 = vunpack.c.l.bf16 %v468
        %v501 = vunpack.c.l.bf16 %v469
        %v502 = vunpack.c.l.bf16 %v470
        %v503 = vunpack.c.l.bf16 %v471
        %v504 = vunpack.c.l.bf16 %v472
        %v505 = vunpack.c.l.bf16 %v473
        %v506 = vunpack.c.l.bf16 %v474
        %v507 = vld [vmem:[%s1] sm:$0x1]
        %v509 = vlaneseq
        %v510 = vshrl.u32 %v509, 7
        %v511 = vsub.s32 0, %v510
        %v512 = vrot.slane %v507, %v511
        %v514 = vmul.f32 %v475, %v512
        %v515 = vmul.f32 %v476, %v512
        %v516 = vmul.f32 %v477, %v512
        %v517 = vmul.f32 %v478, %v512
        %v518 = vmul.f32 %v479, %v512
        %v519 = vmul.f32 %v480, %v512
        %v520 = vmul.f32 %v481, %v512
        %v521 = vmul.f32 %v482, %v512
        %v522 = vmul.f32 %v483, %v512
        %v523 = vmul.f32 %v484, %v512
        %v524 = vmul.f32 %v485, %v512
        %v525 = vmul.f32 %v486, %v512
        %v526 = vmul.f32 %v487, %v512
        %v527 = vmul.f32 %v488, %v512
        %v528 = vmul.f32 %v489, %v512
        %v529 = vmul.f32 %v490, %v512
        %v530 = vmul.f32 %v491, %v512
        %v531 = vmul.f32 %v492, %v512
        %v532 = vmul.f32 %v493, %v512
        %v533 = vmul.f32 %v494, %v512
        %v534 = vmul.f32 %v495, %v512
        %v535 = vmul.f32 %v496, %v512
        %v536 = vmul.f32 %v497, %v512
        %v537 = vmul.f32 %v498, %v512
        %v538 = vmul.f32 %v499, %v512
        %v539 = vmul.f32 %v500, %v512
        %v540 = vmul.f32 %v501, %v512
        %v541 = vmul.f32 %v502, %v512
        %v542 = vmul.f32 %v503, %v512
        %v543 = vmul.f32 %v504, %v512
        %v544 = vmul.f32 %v505, %v512
        %v545 = vmul.f32 %v506, %v512
        %v546 = vld [vmem:[%s2] sm:$0x1]
        %v548 = vlaneseq
        %v549 = vshrl.u32 %v548, 7
        %v550 = vsub.s32 0, %v549
        %v551 = vrot.slane %v546, %v550
        %v553 = vadd.f32 %v514, %v551
        %v554 = vadd.f32 %v515, %v551
        %v555 = vadd.f32 %v516, %v551
        %v556 = vadd.f32 %v517, %v551
        %v557 = vadd.f32 %v518, %v551
        %v558 = vadd.f32 %v519, %v551
        %v559 = vadd.f32 %v520, %v551
        %v560 = vadd.f32 %v521, %v551
        %v561 = vadd.f32 %v522, %v551
        %v562 = vadd.f32 %v523, %v551
        %v563 = vadd.f32 %v524, %v551
        %v564 = vadd.f32 %v525, %v551
        %v565 = vadd.f32 %v526, %v551
        %v566 = vadd.f32 %v527, %v551
        %v567 = vadd.f32 %v528, %v551
        %v568 = vadd.f32 %v529, %v551
        %v569 = vadd.f32 %v530, %v551
        %v570 = vadd.f32 %v531, %v551
        %v571 = vadd.f32 %v532, %v551
        %v572 = vadd.f32 %v533, %v551
        %v573 = vadd.f32 %v534, %v551
        %v574 = vadd.f32 %v535, %v551
        %v575 = vadd.f32 %v536, %v551
        %v576 = vadd.f32 %v537, %v551
        %v577 = vadd.f32 %v538, %v551
        %v578 = vadd.f32 %v539, %v551
        %v579 = vadd.f32 %v540, %v551
        %v580 = vadd.f32 %v541, %v551
        %v581 = vadd.f32 %v542, %v551
        %v582 = vadd.f32 %v543, %v551
        %v583 = vadd.f32 %v544, %v551
        %v584 = vadd.f32 %v545, %v551
        %v585 = vmax.f32 %v553, 0.0
        %v586 = vmax.f32 %v554, 0.0
        %v587 = vmax.f32 %v555, 0.0
        %v588 = vmax.f32 %v556, 0.0
        %v589 = vmax.f32 %v557, 0.0
        %v590 = vmax.f32 %v558, 0.0
        %v591 = vmax.f32 %v559, 0.0
        %v592 = vmax.f32 %v560, 0.0
        %v593 = vmax.f32 %v561, 0.0
        %v594 = vmax.f32 %v562, 0.0
        %v595 = vmax.f32 %v563, 0.0
        %v596 = vmax.f32 %v564, 0.0
        %v597 = vmax.f32 %v565, 0.0
        %v598 = vmax.f32 %v566, 0.0
        %v599 = vmax.f32 %v567, 0.0
        %v600 = vmax.f32 %v568, 0.0
        %v601 = vmax.f32 %v569, 0.0
        %v602 = vmax.f32 %v570, 0.0
        %v603 = vmax.f32 %v571, 0.0
        %v604 = vmax.f32 %v572, 0.0
        %v605 = vmax.f32 %v573, 0.0
        %v606 = vmax.f32 %v574, 0.0
        %v607 = vmax.f32 %v575, 0.0
        %v608 = vmax.f32 %v576, 0.0
        %v609 = vmax.f32 %v577, 0.0
        %v610 = vmax.f32 %v578, 0.0
        %v611 = vmax.f32 %v579, 0.0
        %v612 = vmax.f32 %v580, 0.0
        %v613 = vmax.f32 %v581, 0.0
        %v614 = vmax.f32 %v582, 0.0
        %v615 = vmax.f32 %v583, 0.0
        %v616 = vmax.f32 %v584, 0.0
        %v617 = vpack.c.bf16 %v586, %v585
        %v618 = vpack.c.bf16 %v588, %v587
        %v619 = vpack.c.bf16 %v590, %v589
        %v620 = vpack.c.bf16 %v592, %v591
        %v621 = vpack.c.bf16 %v594, %v593
        %v622 = vpack.c.bf16 %v596, %v595
        %v623 = vpack.c.bf16 %v598, %v597
        %v624 = vpack.c.bf16 %v600, %v599
        %v625 = vpack.c.bf16 %v602, %v601
        %v626 = vpack.c.bf16 %v604, %v603
        %v627 = vpack.c.bf16 %v606, %v605
        %v628 = vpack.c.bf16 %v608, %v607
        %v629 = vpack.c.bf16 %v610, %v609
        %v630 = vpack.c.bf16 %v612, %v611
        %v631 = vpack.c.bf16 %v614, %v613
        %v632 = vpack.c.bf16 %v616, %v615
        %v633 = vld [vmem:[%s3] sm:$0xf]
        %v634 = vld [vmem:[%s3 + $0x4] sm:$0xf]
        %v635 = vld [vmem:[%s3 + $0x8] sm:$0xf]
        %v636 = vld [vmem:[%s3 + $0xc] sm:$0xf]
        %v637 = vld [vmem:[%s3 + $0x10] sm:$0xf]
        %v638 = vld [vmem:[%s3 + $0x14] sm:$0xf]
        %v639 = vld [vmem:[%s3 + $0x18] sm:$0xf]
        %v640 = vld [vmem:[%s3 + $0x1c] sm:$0xf]
        %v641 = vld [vmem:[%s3 + $0x20] sm:$0xf]
        %v642 = vld [vmem:[%s3 + $0x24] sm:$0xf]
        %v643 = vld [vmem:[%s3 + $0x28] sm:$0xf]
        %v644 = vld [vmem:[%s3 + $0x2c] sm:$0xf]
        %v645 = vld [vmem:[%s3 + $0x30] sm:$0xf]
        %v646 = vld [vmem:[%s3 + $0x34] sm:$0xf]
        %v647 = vld [vmem:[%s3 + $0x38] sm:$0xf]
        %v648 = vld [vmem:[%s3 + $0x3c] sm:$0xf]
        %v665 = vunpack.c.l.b16 %v633
        %v666 = vunpack.c.l.b16 %v634
        %v667 = vunpack.c.l.b16 %v635
        %v668 = vunpack.c.l.b16 %v636
        %v669 = vunpack.c.l.b16 %v637
        %v670 = vunpack.c.l.b16 %v638
        %v671 = vunpack.c.l.b16 %v639
        %v672 = vunpack.c.l.b16 %v640
        %v673 = vunpack.c.l.b16 %v641
        %v674 = vunpack.c.l.b16 %v642
        %v675 = vunpack.c.l.b16 %v643
        %v676 = vunpack.c.l.b16 %v644
        %v677 = vunpack.c.l.b16 %v645
        %v678 = vunpack.c.l.b16 %v646
        %v679 = vunpack.c.l.b16 %v647
        %v680 = vunpack.c.l.b16 %v648
        %v681 = vpack.c.b16 %v666, %v665
        %v682 = vpack.c.b16 %v668, %v667
        %v683 = vpack.c.b16 %v670, %v669
        %v684 = vpack.c.b16 %v672, %v671
        %v685 = vpack.c.b16 %v674, %v673
        %v686 = vpack.c.b16 %v676, %v675
        %v687 = vpack.c.b16 %v678, %v677
        %v688 = vpack.c.b16 %v680, %v679
        %697 = vmatprep.subr.bf16.mxu0 0
        %698 = vmatpush1.bf16.msra.mxu0 %v688
        %699 = vmatprep.subr.bf16.mxu0 0
        %700 = vmatpush1.bf16.msra.mxu0 %v687
        %701 = vmatprep.subr.bf16.mxu0 0
        %702 = vmatpush1.bf16.msra.mxu0 %v686
        %703 = vmatprep.subr.bf16.mxu0 0
        %704 = vmatpush1.bf16.msra.mxu0 %v685
        %705 = vmatprep.subr.bf16.mxu0 0
        %706 = vmatpush1.bf16.msra.mxu0 %v684
        %707 = vmatprep.subr.bf16.mxu0 0
        %708 = vmatpush1.bf16.msra.mxu0 %v683
        %709 = vmatprep.subr.bf16.mxu0 0
        %710 = vmatpush1.bf16.msra.mxu0 %v682
        %711 = vmatprep.subr.bf16.mxu0 0
        %712 = vmatpush1.bf16.msra.mxu0 %v681
        %713 = vmatprep.subr.bf16.mxu0 0
        %714 = vmatpush2.bf16.msra.mxu0 0
        %715 = vmatprep.subr.bf16.mxu0 0
        %716 = vmatpush2.bf16.msra.mxu0 0
        %717 = vmatprep.subr.bf16.mxu0 0
        %718 = vmatpush2.bf16.msra.mxu0 0
        %719 = vmatprep.subr.bf16.mxu0 0
        %720 = vmatpush2.bf16.msra.mxu0 0
        %721 = vmatprep.subr.bf16.mxu0 0
        %722 = vmatpush2.bf16.msra.mxu0 0
        %723 = vmatprep.subr.bf16.mxu0 0
        %724 = vmatpush2.bf16.msra.mxu0 0
        %725 = vmatprep.subr.bf16.mxu0 0
        %726 = vmatpush2.bf16.msra.mxu0 0
        %727 = vmatprep.subr.bf16.mxu0 0
        %728 = vmatpush2.bf16.msra.mxu0 0
        %729 = vmatprep.mubr.bf16.mxu0 0
        %730 = vmatmul.mubr.bf16.gmra.mxu0 %v617
        %v731 = vpop.f32.mrf.mxu0
        %v732 = vadd.f32 0.0, %v731
        %v733 = vpop.f32.mrf.mxu0
        %v734 = vpop.f32.mrf.mxu0
        %v735 = vadd.f32 0.0, %v734
        %v736 = vpop.f32.mrf.mxu0
        %737 = vmatprep.mubr.bf16.mxu0 0
        %738 = vmatmul.mubr.bf16.gmra.mxu0 %v618
        %v739 = vpop.f32.mrf.mxu0
        %v740 = vadd.f32 0.0, %v739
        %v741 = vpop.f32.mrf.mxu0
        %v742 = vpop.f32.mrf.mxu0
        %v743 = vadd.f32 0.0, %v742
        %v744 = vpop.f32.mrf.mxu0
        %745 = vmatprep.mubr.bf16.mxu0 0
        %746 = vmatmul.mubr.bf16.gmra.mxu0 %v619
        %v747 = vpop.f32.mrf.mxu0
        %v748 = vadd.f32 0.0, %v747
        %v749 = vpop.f32.mrf.mxu0
        %v750 = vpop.f32.mrf.mxu0
        %v751 = vadd.f32 0.0, %v750
        %v752 = vpop.f32.mrf.mxu0
        %753 = vmatprep.mubr.bf16.mxu0 0
        %754 = vmatmul.mubr.bf16.gmra.mxu0 %v620
        %v755 = vpop.f32.mrf.mxu0
        %v756 = vadd.f32 0.0, %v755
        %v757 = vpop.f32.mrf.mxu0
        %v758 = vpop.f32.mrf.mxu0
        %v759 = vadd.f32 0.0, %v758
        %v760 = vpop.f32.mrf.mxu0
        %761 = vmatprep.mubr.bf16.mxu0 0
        %762 = vmatmul.mubr.bf16.gmra.mxu0 %v621
        %v763 = vpop.f32.mrf.mxu0
        %v764 = vadd.f32 0.0, %v763
        %v765 = vpop.f32.mrf.mxu0
        %v766 = vpop.f32.mrf.mxu0
        %v767 = vadd.f32 0.0, %v766
        %v768 = vpop.f32.mrf.mxu0
        %769 = vmatprep.mubr.bf16.mxu0 0
        %770 = vmatmul.mubr.bf16.gmra.mxu0 %v622
        %v771 = vpop.f32.mrf.mxu0
        %v772 = vadd.f32 0.0, %v771
        %v773 = vpop.f32.mrf.mxu0
        %v774 = vpop.f32.mrf.mxu0
        %v775 = vadd.f32 0.0, %v774
        %v776 = vpop.f32.mrf.mxu0
        %777 = vmatprep.mubr.bf16.mxu0 0
        %778 = vmatmul.mubr.bf16.gmra.mxu0 %v623
        %v779 = vpop.f32.mrf.mxu0
        %v780 = vadd.f32 0.0, %v779
        %v781 = vpop.f32.mrf.mxu0
        %v782 = vpop.f32.mrf.mxu0
        %v783 = vadd.f32 0.0, %v782
        %v784 = vpop.f32.mrf.mxu0
        %785 = vmatprep.mubr.bf16.mxu0 0
        %786 = vmatmul.mubr.bf16.gmra.mxu0 %v624
        %v787 = vpop.f32.mrf.mxu0
        %v788 = vadd.f32 0.0, %v787
        %v789 = vpop.f32.mrf.mxu0
        %v790 = vpop.f32.mrf.mxu0
        %v791 = vadd.f32 0.0, %v790
        %v792 = vpop.f32.mrf.mxu0
        %793 = vmatprep.mubr.bf16.mxu0 0
        %794 = vmatmul.mubr.bf16.gmra.mxu0 %v625
        %v795 = vpop.f32.mrf.mxu0
        %v796 = vadd.f32 0.0, %v795
        %v797 = vpop.f32.mrf.mxu0
        %v798 = vpop.f32.mrf.mxu0
        %v799 = vadd.f32 0.0, %v798
        %v800 = vpop.f32.mrf.mxu0
        %801 = vmatprep.mubr.bf16.mxu0 0
        %802 = vmatmul.mubr.bf16.gmra.mxu0 %v626
        %v803 = vpop.f32.mrf.mxu0
        %v804 = vadd.f32 0.0, %v803
        %v805 = vpop.f32.mrf.mxu0
        %v806 = vpop.f32.mrf.mxu0
        %v807 = vadd.f32 0.0, %v806
        %v808 = vpop.f32.mrf.mxu0
        %809 = vmatprep.mubr.bf16.mxu0 0
        %810 = vmatmul.mubr.bf16.gmra.mxu0 %v627
        %v811 = vpop.f32.mrf.mxu0
        %v812 = vadd.f32 0.0, %v811
        %v813 = vpop.f32.mrf.mxu0
        %v814 = vpop.f32.mrf.mxu0
        %v815 = vadd.f32 0.0, %v814
        %v816 = vpop.f32.mrf.mxu0
        %817 = vmatprep.mubr.bf16.mxu0 0
        %818 = vmatmul.mubr.bf16.gmra.mxu0 %v628
        %v819 = vpop.f32.mrf.mxu0
        %v820 = vadd.f32 0.0, %v819
        %v821 = vpop.f32.mrf.mxu0
        %v822 = vpop.f32.mrf.mxu0
        %v823 = vadd.f32 0.0, %v822
        %v824 = vpop.f32.mrf.mxu0
        %825 = vmatprep.mubr.bf16.mxu0 0
        %826 = vmatmul.mubr.bf16.gmra.mxu0 %v629
        %v827 = vpop.f32.mrf.mxu0
        %v828 = vadd.f32 0.0, %v827
        %v829 = vpop.f32.mrf.mxu0
        %v830 = vpop.f32.mrf.mxu0
        %v831 = vadd.f32 0.0, %v830
        %v832 = vpop.f32.mrf.mxu0
        %833 = vmatprep.mubr.bf16.mxu0 0
        %834 = vmatmul.mubr.bf16.gmra.mxu0 %v630
        %v835 = vpop.f32.mrf.mxu0
        %v836 = vadd.f32 0.0, %v835
        %v837 = vpop.f32.mrf.mxu0
        %v838 = vpop.f32.mrf.mxu0
        %v839 = vadd.f32 0.0, %v838
        %v840 = vpop.f32.mrf.mxu0
        %841 = vmatprep.mubr.bf16.mxu0 0
        %842 = vmatmul.mubr.bf16.gmra.mxu0 %v631
        %v843 = vpop.f32.mrf.mxu0
        %v844 = vadd.f32 0.0, %v843
        %v845 = vpop.f32.mrf.mxu0
        %v846 = vpop.f32.mrf.mxu0
        %v847 = vadd.f32 0.0, %v846
        %v848 = vpop.f32.mrf.mxu0
        %849 = vmatprep.mubr.bf16.mxu0 0
        %850 = vmatmul.mubr.bf16.gmra.mxu0 %v632
        %v851 = vpop.f32.mrf.mxu0
        %v852 = vadd.f32 0.0, %v851
        %v853 = vpop.f32.mrf.mxu0
        %v854 = vpop.f32.mrf.mxu0
        %v855 = vadd.f32 0.0, %v854
        %v856 = vpop.f32.mrf.mxu0
        %857 = vdwg.mxu0
        %v858 = vld [vmem:[%s4] sm:$0x1]
        %v860 = vlaneseq
        %v861 = vshrl.u32 %v860, 7
        %v862 = vsub.s32 0, %v861
        %v863 = vrot.slane %v858, %v862
        %v865 = vmul.f32 %v732, %v863
        %v866 = vmul.f32 %v735, %v863
        %v867 = vmul.f32 %v740, %v863
        %v868 = vmul.f32 %v743, %v863
        %v869 = vmul.f32 %v748, %v863
        %v870 = vmul.f32 %v751, %v863
        %v871 = vmul.f32 %v756, %v863
        %v872 = vmul.f32 %v759, %v863
        %v873 = vmul.f32 %v764, %v863
        %v874 = vmul.f32 %v767, %v863
        %v875 = vmul.f32 %v772, %v863
        %v876 = vmul.f32 %v775, %v863
        %v877 = vmul.f32 %v780, %v863
        %v878 = vmul.f32 %v783, %v863
        %v879 = vmul.f32 %v788, %v863
        %v880 = vmul.f32 %v791, %v863
        %v881 = vmul.f32 %v796, %v863
        %v882 = vmul.f32 %v799, %v863
        %v883 = vmul.f32 %v804, %v863
        %v884 = vmul.f32 %v807, %v863
        %v885 = vmul.f32 %v812, %v863
        %v886 = vmul.f32 %v815, %v863
        %v887 = vmul.f32 %v820, %v863
        %v888 = vmul.f32 %v823, %v863
        %v889 = vmul.f32 %v828, %v863
        %v890 = vmul.f32 %v831, %v863
        %v891 = vmul.f32 %v836, %v863
        %v892 = vmul.f32 %v839, %v863
        %v893 = vmul.f32 %v844, %v863
        %v894 = vmul.f32 %v847, %v863
        %v895 = vmul.f32 %v852, %v863
        %v896 = vmul.f32 %v855, %v863
        %v897 = vld [vmem:[%s5] sm:$0x1]
        %v899 = vlaneseq
        %v900 = vshrl.u32 %v899, 7
        %v901 = vsub.s32 0, %v900
        %v902 = vrot.slane %v897, %v901
        %v904 = vadd.f32 %v865, %v902
        %v905 = vadd.f32 %v866, %v902
        %v906 = vadd.f32 %v867, %v902
        %v907 = vadd.f32 %v868, %v902
        %v908 = vadd.f32 %v869, %v902
        %v909 = vadd.f32 %v870, %v902
        %v910 = vadd.f32 %v871, %v902
        %v911 = vadd.f32 %v872, %v902
        %v912 = vadd.f32 %v873, %v902
        %v913 = vadd.f32 %v874, %v902
        %v914 = vadd.f32 %v875, %v902
        %v915 = vadd.f32 %v876, %v902
        %v916 = vadd.f32 %v877, %v902
        %v917 = vadd.f32 %v878, %v902
        %v918 = vadd.f32 %v879, %v902
        %v919 = vadd.f32 %v880, %v902
        %v920 = vadd.f32 %v881, %v902
        %v921 = vadd.f32 %v882, %v902
        %v922 = vadd.f32 %v883, %v902
        %v923 = vadd.f32 %v884, %v902
        %v924 = vadd.f32 %v885, %v902
        %v925 = vadd.f32 %v886, %v902
        %v926 = vadd.f32 %v887, %v902
        %v927 = vadd.f32 %v888, %v902
        %v928 = vadd.f32 %v889, %v902
        %v929 = vadd.f32 %v890, %v902
        %v930 = vadd.f32 %v891, %v902
        %v931 = vadd.f32 %v892, %v902
        %v932 = vadd.f32 %v893, %v902
        %v933 = vadd.f32 %v894, %v902
        %v934 = vadd.f32 %v895, %v902
        %v935 = vadd.f32 %v896, %v902
        %v936 = vmax.f32 %v904, 0.0
        %v937 = vmax.f32 %v905, 0.0
        %v938 = vmax.f32 %v906, 0.0
        %v939 = vmax.f32 %v907, 0.0
        %v940 = vmax.f32 %v908, 0.0
        %v941 = vmax.f32 %v909, 0.0
        %v942 = vmax.f32 %v910, 0.0
        %v943 = vmax.f32 %v911, 0.0
        %v944 = vmax.f32 %v912, 0.0
        %v945 = vmax.f32 %v913, 0.0
        %v946 = vmax.f32 %v914, 0.0
        %v947 = vmax.f32 %v915, 0.0
        %v948 = vmax.f32 %v916, 0.0
        %v949 = vmax.f32 %v917, 0.0
        %v950 = vmax.f32 %v918, 0.0
        %v951 = vmax.f32 %v919, 0.0
        %v952 = vmax.f32 %v920, 0.0
        %v953 = vmax.f32 %v921, 0.0
        %v954 = vmax.f32 %v922, 0.0
        %v955 = vmax.f32 %v923, 0.0
        %v956 = vmax.f32 %v924, 0.0
        %v957 = vmax.f32 %v925, 0.0
        %v958 = vmax.f32 %v926, 0.0
        %v959 = vmax.f32 %v927, 0.0
        %v960 = vmax.f32 %v928, 0.0
        %v961 = vmax.f32 %v929, 0.0
        %v962 = vmax.f32 %v930, 0.0
        %v963 = vmax.f32 %v931, 0.0
        %v964 = vmax.f32 %v932, 0.0
        %v965 = vmax.f32 %v933, 0.0
        %v966 = vmax.f32 %v934, 0.0
        %v967 = vmax.f32 %v935, 0.0
        %v968 = vpack.c.bf16 %v937, %v936
        %v969 = vpack.c.bf16 %v939, %v938
        %v970 = vpack.c.bf16 %v941, %v940
        %v971 = vpack.c.bf16 %v943, %v942
        %v972 = vpack.c.bf16 %v945, %v944
        %v973 = vpack.c.bf16 %v947, %v946
        %v974 = vpack.c.bf16 %v949, %v948
        %v975 = vpack.c.bf16 %v951, %v950
        %v976 = vpack.c.bf16 %v953, %v952
        %v977 = vpack.c.bf16 %v955, %v954
        %v978 = vpack.c.bf16 %v957, %v956
        %v979 = vpack.c.bf16 %v959, %v958
        %v980 = vpack.c.bf16 %v961, %v960
        %v981 = vpack.c.bf16 %v963, %v962
        %v982 = vpack.c.bf16 %v965, %v964
        %v983 = vpack.c.bf16 %v967, %v966
        %984 = vst [vmem:[#allocation2] sm:$0xf] 0
        %985 = vst [vmem:[#allocation2 + $0x4] sm:$0xf] 0
        %986 = vst [vmem:[#allocation2 + $0x8] sm:$0xf] 0
        %987 = vst [vmem:[#allocation2 + $0xc] sm:$0xf] 0
        %s988 = scalar_lea.vmem [#allocation2], 272
        %989 = vst [vmem:[%s988] sm:$0xf] 0
        %990 = vst [vmem:[%s988 + $0x4] sm:$0xf] 0
        %991 = vst [vmem:[%s988 + $0x8] sm:$0xf] 0
        %992 = vst [vmem:[%s988 + $0xc] sm:$0xf] 0
        %vm993 = vcmask 1040384
        %vm994 = vsmask.f32 256
        %vm995 = vmand %vm993, %vm994
        %v996 = vld [vmem:[#allocation2] sm:$0x1]
        %v997 = vsel %vm995, 0, %v996
        %998 = vst [vmem:[#allocation2] sm:$0x1] %v997
        %v999 = vld [vmem:[#allocation2 + $0x10] sm:$0x1]
        %v1000 = vsel %vm995, 0, %v999
        %1001 = vst [vmem:[#allocation2 + $0x10] sm:$0x1] %v1000
        %v1002 = vld [vmem:[#allocation2 + $0x20] sm:$0x1]
        %v1003 = vsel %vm995, 0, %v1002
        %1004 = vst [vmem:[#allocation2 + $0x20] sm:$0x1] %v1003
        %v1005 = vld [vmem:[#allocation2 + $0x30] sm:$0x1]
        %v1006 = vsel %vm995, 0, %v1005
        %1007 = vst [vmem:[#allocation2 + $0x30] sm:$0x1] %v1006
        %v1008 = vld [vmem:[#allocation2 + $0x40] sm:$0x1]
        %v1009 = vsel %vm995, 0, %v1008
        %1010 = vst [vmem:[#allocation2 + $0x40] sm:$0x1] %v1009
        %v1011 = vld [vmem:[#allocation2 + $0x50] sm:$0x1]
        %v1012 = vsel %vm995, 0, %v1011
        %1013 = vst [vmem:[#allocation2 + $0x50] sm:$0x1] %v1012
        %v1014 = vld [vmem:[#allocation2 + $0x60] sm:$0x1]
        %v1015 = vsel %vm995, 0, %v1014
        %1016 = vst [vmem:[#allocation2 + $0x60] sm:$0x1] %v1015
        %v1017 = vld [vmem:[#allocation2 + $0x70] sm:$0x1]
        %v1018 = vsel %vm995, 0, %v1017
        %1019 = vst [vmem:[#allocation2 + $0x70] sm:$0x1] %v1018
        %v1020 = vld [vmem:[#allocation2 + $0x80] sm:$0x1]
        %v1021 = vsel %vm995, 0, %v1020
        %1022 = vst [vmem:[#allocation2 + $0x80] sm:$0x1] %v1021
        %v1023 = vld [vmem:[#allocation2 + $0x90] sm:$0x1]
        %v1024 = vsel %vm995, 0, %v1023
        %1025 = vst [vmem:[#allocation2 + $0x90] sm:$0x1] %v1024
        %v1026 = vld [vmem:[#allocation2 + $0xa0] sm:$0x1]
        %v1027 = vsel %vm995, 0, %v1026
        %1028 = vst [vmem:[#allocation2 + $0xa0] sm:$0x1] %v1027
        %v1029 = vld [vmem:[#allocation2 + $0xb0] sm:$0x1]
        %v1030 = vsel %vm995, 0, %v1029
        %1031 = vst [vmem:[#allocation2 + $0xb0] sm:$0x1] %v1030
        %v1032 = vld [vmem:[#allocation2 + $0xc0] sm:$0x1]
        %v1033 = vsel %vm995, 0, %v1032
        %1034 = vst [vmem:[#allocation2 + $0xc0] sm:$0x1] %v1033
        %v1035 = vld [vmem:[#allocation2 + $0xd0] sm:$0x1]
        %v1036 = vsel %vm995, 0, %v1035
        %1037 = vst [vmem:[#allocation2 + $0xd0] sm:$0x1] %v1036
        %v1038 = vld [vmem:[#allocation2 + $0xe0] sm:$0x1]
        %v1039 = vsel %vm995, 0, %v1038
        %1040 = vst [vmem:[#allocation2 + $0xe0] sm:$0x1] %v1039
        %v1041 = vld [vmem:[#allocation2 + $0xf0] sm:$0x1]
        %v1042 = vsel %vm995, 0, %v1041
        %1043 = vst [vmem:[#allocation2 + $0xf0] sm:$0x1] %v1042
        %v1044 = vld [vmem:[#allocation2 + $0x100] sm:$0x1]
        %v1045 = vsel %vm995, 0, %v1044
        %1046 = vst [vmem:[#allocation2 + $0x100] sm:$0x1] %v1045
        %v1047 = vld [vmem:[#allocation2 + $0x110] sm:$0x1]
        %v1048 = vsel %vm995, 0, %v1047
        %1049 = vst [vmem:[#allocation2 + $0x110] sm:$0x1] %v1048
        %vm1050 = vsmask.f32 7938
        %vm1051 = vmand %vm993, %vm1050
        %v1052 = vld [vmem:[#allocation2 + $0x8] sm:$0x1]
        %v1053 = vsel %vm1051, 0, %v1052
        %1054 = vst [vmem:[#allocation2 + $0x8] sm:$0x1] %v1053
        %v1055 = vld [vmem:[#allocation2 + $0x18] sm:$0x1]
        %v1056 = vsel %vm1051, 0, %v1055
        %1057 = vst [vmem:[#allocation2 + $0x18] sm:$0x1] %v1056
        %v1058 = vld [vmem:[#allocation2 + $0x28] sm:$0x1]
        %v1059 = vsel %vm1051, 0, %v1058
        %1060 = vst [vmem:[#allocation2 + $0x28] sm:$0x1] %v1059
        %v1061 = vld [vmem:[#allocation2 + $0x38] sm:$0x1]
        %v1062 = vsel %vm1051, 0, %v1061
        %1063 = vst [vmem:[#allocation2 + $0x38] sm:$0x1] %v1062
        %v1064 = vld [vmem:[#allocation2 + $0x48] sm:$0x1]
        %v1065 = vsel %vm1051, 0, %v1064
        %1066 = vst [vmem:[#allocation2 + $0x48] sm:$0x1] %v1065
        %v1067 = vld [vmem:[#allocation2 + $0x58] sm:$0x1]
        %v1068 = vsel %vm1051, 0, %v1067
        %1069 = vst [vmem:[#allocation2 + $0x58] sm:$0x1] %v1068
        %v1070 = vld [vmem:[#allocation2 + $0x68] sm:$0x1]
        %v1071 = vsel %vm1051, 0, %v1070
        %1072 = vst [vmem:[#allocation2 + $0x68] sm:$0x1] %v1071
        %v1073 = vld [vmem:[#allocation2 + $0x78] sm:$0x1]
        %v1074 = vsel %vm1051, 0, %v1073
        %1075 = vst [vmem:[#allocation2 + $0x78] sm:$0x1] %v1074
        %v1076 = vld [vmem:[#allocation2 + $0x88] sm:$0x1]
        %v1077 = vsel %vm1051, 0, %v1076
        %1078 = vst [vmem:[#allocation2 + $0x88] sm:$0x1] %v1077
        %v1079 = vld [vmem:[#allocation2 + $0x98] sm:$0x1]
        %v1080 = vsel %vm1051, 0, %v1079
        %1081 = vst [vmem:[#allocation2 + $0x98] sm:$0x1] %v1080
        %v1082 = vld [vmem:[#allocation2 + $0xa8] sm:$0x1]
        %v1083 = vsel %vm1051, 0, %v1082
        %1084 = vst [vmem:[#allocation2 + $0xa8] sm:$0x1] %v1083
        %v1085 = vld [vmem:[#allocation2 + $0xb8] sm:$0x1]
        %v1086 = vsel %vm1051, 0, %v1085
        %1087 = vst [vmem:[#allocation2 + $0xb8] sm:$0x1] %v1086
        %v1088 = vld [vmem:[#allocation2 + $0xc8] sm:$0x1]
        %v1089 = vsel %vm1051, 0, %v1088
        %1090 = vst [vmem:[#allocation2 + $0xc8] sm:$0x1] %v1089
        %v1091 = vld [vmem:[#allocation2 + $0xd8] sm:$0x1]
        %v1092 = vsel %vm1051, 0, %v1091
        %1093 = vst [vmem:[#allocation2 + $0xd8] sm:$0x1] %v1092
        %v1094 = vld [vmem:[#allocation2 + $0xe8] sm:$0x1]
        %v1095 = vsel %vm1051, 0, %v1094
        %1096 = vst [vmem:[#allocation2 + $0xe8] sm:$0x1] %v1095
        %v1097 = vld [vmem:[#allocation2 + $0xf8] sm:$0x1]
        %v1098 = vsel %vm1051, 0, %v1097
        %1099 = vst [vmem:[#allocation2 + $0xf8] sm:$0x1] %v1098
        %v1100 = vld [vmem:[#allocation2 + $0x108] sm:$0x1]
        %v1101 = vsel %vm1051, 0, %v1100
        %1102 = vst [vmem:[#allocation2 + $0x108] sm:$0x1] %v1101
        %v1103 = vld [vmem:[#allocation2 + $0x118] sm:$0x1]
        %v1104 = vsel %vm1051, 0, %v1103
        %1105 = vst [vmem:[#allocation2 + $0x118] sm:$0x1] %v1104
        %v1122 = vunpack.c.l.b16 %v968
        %v1123 = vunpack.c.h.b16 %v968
        %v1124 = vunpack.c.l.b16 %v969
        %v1125 = vunpack.c.h.b16 %v969
        %v1126 = vunpack.c.l.b16 %v970
        %v1127 = vunpack.c.h.b16 %v970
        %v1128 = vunpack.c.l.b16 %v971
        %v1129 = vunpack.c.h.b16 %v971
        %v1130 = vunpack.c.l.b16 %v972
        %v1131 = vunpack.c.h.b16 %v972
        %v1132 = vunpack.c.l.b16 %v973
        %v1133 = vunpack.c.h.b16 %v973
        %v1134 = vunpack.c.l.b16 %v974
        %v1135 = vunpack.c.h.b16 %v974
        %v1136 = vunpack.c.l.b16 %v975
        %v1137 = vunpack.c.h.b16 %v975
        %v1138 = vunpack.c.l.b16 %v976
        %v1139 = vunpack.c.h.b16 %v976
        %v1140 = vunpack.c.l.b16 %v977
        %v1141 = vunpack.c.h.b16 %v977
        %v1142 = vunpack.c.l.b16 %v978
        %v1143 = vunpack.c.h.b16 %v978
        %v1144 = vunpack.c.l.b16 %v979
        %v1145 = vunpack.c.h.b16 %v979
        %v1146 = vunpack.c.l.b16 %v980
        %v1147 = vunpack.c.h.b16 %v980
        %v1148 = vunpack.c.l.b16 %v981
        %v1149 = vunpack.c.h.b16 %v981
        %v1150 = vunpack.c.l.b16 %v982
        %v1151 = vunpack.c.h.b16 %v982
        %v1152 = vunpack.c.l.b16 %v983
        %v1153 = vunpack.c.h.b16 %v983
        %v1154 = vpack.c.b16 %v1122, %v1122
        %v1155 = vpack.c.b16 %v1123, %v1123
        %v1156 = vpack.c.b16 %v1124, %v1124
        %v1157 = vpack.c.b16 %v1125, %v1125
        %v1158 = vpack.c.b16 %v1126, %v1126
        %v1159 = vpack.c.b16 %v1127, %v1127
        %v1160 = vpack.c.b16 %v1128, %v1128
        %v1161 = vpack.c.b16 %v1129, %v1129
        %v1162 = vpack.c.b16 %v1130, %v1130
        %v1163 = vpack.c.b16 %v1131, %v1131
        %v1164 = vpack.c.b16 %v1132, %v1132
        %v1165 = vpack.c.b16 %v1133, %v1133
        %v1166 = vpack.c.b16 %v1134, %v1134
        %v1167 = vpack.c.b16 %v1135, %v1135
        %v1168 = vpack.c.b16 %v1136, %v1136
        %v1169 = vpack.c.b16 %v1137, %v1137
        %v1170 = vpack.c.b16 %v1138, %v1138
        %v1171 = vpack.c.b16 %v1139, %v1139
        %v1172 = vpack.c.b16 %v1140, %v1140
        %v1173 = vpack.c.b16 %v1141, %v1141
        %v1174 = vpack.c.b16 %v1142, %v1142
        %v1175 = vpack.c.b16 %v1143, %v1143
        %v1176 = vpack.c.b16 %v1144, %v1144
        %v1177 = vpack.c.b16 %v1145, %v1145
        %v1178 = vpack.c.b16 %v1146, %v1146
        %v1179 = vpack.c.b16 %v1147, %v1147
        %v1180 = vpack.c.b16 %v1148, %v1148
        %v1181 = vpack.c.b16 %v1149, %v1149
        %v1182 = vpack.c.b16 %v1150, %v1150
        %v1183 = vpack.c.b16 %v1151, %v1151
        %v1184 = vpack.c.b16 %v1152, %v1152
        %v1185 = vpack.c.b16 %v1153, %v1153
        %vm1186 = vsmask.f32 4368
        %vm1187 = vmor %vm994, %vm1186
        %v1189 = vshrl.u32 %v1154, 16
        %v1191 = vrot.slane %v1189, 7
        %v1192 = vshll.u32 %v1154, 16
        %v1194 = vor.u32 %v1191, %v1192
        %v1195 = vrot.slane %v1191, 4
        %v1197 = vshrl.u32 %v1155, 16
        %v1199 = vrot.slane %v1197, 7
        %v1200 = vshll.u32 %v1155, 16
        %v1202 = vor.u32 %v1199, %v1200
        %v1203 = vsel %vm1187, %v1195, %v1202
        %v1204 = vrot.slane %v1199, 4
        %v1206 = vshrl.u32 %v1156, 16
        %v1208 = vrot.slane %v1206, 7
        %v1209 = vshll.u32 %v1156, 16
        %v1211 = vor.u32 %v1208, %v1209
        %v1212 = vrot.slane %v1208, 4
        %v1214 = vshrl.u32 %v1157, 16
        %v1216 = vrot.slane %v1214, 7
        %v1217 = vshll.u32 %v1157, 16
        %v1219 = vor.u32 %v1216, %v1217
        %v1220 = vsel %vm1187, %v1212, %v1219
        %v1221 = vrot.slane %v1216, 4
        %v1223 = vshrl.u32 %v1158, 16
        %v1225 = vrot.slane %v1223, 7
        %v1226 = vshll.u32 %v1158, 16
        %v1228 = vor.u32 %v1225, %v1226
        %v1229 = vrot.slane %v1225, 4
        %v1231 = vshrl.u32 %v1159, 16
        %v1233 = vrot.slane %v1231, 7
        %v1234 = vshll.u32 %v1159, 16
        %v1236 = vor.u32 %v1233, %v1234
        %v1237 = vsel %vm1187, %v1229, %v1236
        %v1238 = vrot.slane %v1233, 4
        %v1240 = vshrl.u32 %v1160, 16
        %v1242 = vrot.slane %v1240, 7
        %v1243 = vshll.u32 %v1160, 16
        %v1245 = vor.u32 %v1242, %v1243
        %v1246 = vrot.slane %v1242, 4
        %v1248 = vshrl.u32 %v1161, 16
        %v1250 = vrot.slane %v1248, 7
        %v1251 = vshll.u32 %v1161, 16
        %v1253 = vor.u32 %v1250, %v1251
        %v1254 = vsel %vm1187, %v1246, %v1253
        %v1255 = vrot.slane %v1250, 4
        %v1257 = vshrl.u32 %v1162, 16
        %v1259 = vrot.slane %v1257, 7
        %v1260 = vshll.u32 %v1162, 16
        %v1262 = vor.u32 %v1259, %v1260
        %v1263 = vrot.slane %v1259, 4
        %v1265 = vshrl.u32 %v1163, 16
        %v1267 = vrot.slane %v1265, 7
        %v1268 = vshll.u32 %v1163, 16
        %v1270 = vor.u32 %v1267, %v1268
        %v1271 = vsel %vm1187, %v1263, %v1270
        %v1272 = vrot.slane %v1267, 4
        %v1274 = vshrl.u32 %v1164, 16
        %v1276 = vrot.slane %v1274, 7
        %v1277 = vshll.u32 %v1164, 16
        %v1279 = vor.u32 %v1276, %v1277
        %v1280 = vrot.slane %v1276, 4
        %v1282 = vshrl.u32 %v1165, 16
        %v1284 = vrot.slane %v1282, 7
        %v1285 = vshll.u32 %v1165, 16
        %v1287 = vor.u32 %v1284, %v1285
        %v1288 = vsel %vm1187, %v1280, %v1287
        %v1289 = vrot.slane %v1284, 4
        %v1291 = vshrl.u32 %v1166, 16
        %v1293 = vrot.slane %v1291, 7
        %v1294 = vshll.u32 %v1166, 16
        %v1296 = vor.u32 %v1293, %v1294
        %v1297 = vrot.slane %v1293, 4
        %v1299 = vshrl.u32 %v1167, 16
        %v1301 = vrot.slane %v1299, 7
        %v1302 = vshll.u32 %v1167, 16
        %v1304 = vor.u32 %v1301, %v1302
        %v1305 = vsel %vm1187, %v1297, %v1304
        %v1306 = vrot.slane %v1301, 4
        %v1308 = vshrl.u32 %v1168, 16
        %v1310 = vrot.slane %v1308, 7
        %v1311 = vshll.u32 %v1168, 16
        %v1313 = vor.u32 %v1310, %v1311
        %v1314 = vrot.slane %v1310, 4
        %v1316 = vshrl.u32 %v1169, 16
        %v1318 = vrot.slane %v1316, 7
        %v1319 = vshll.u32 %v1169, 16
        %v1321 = vor.u32 %v1318, %v1319
        %v1322 = vsel %vm1187, %v1314, %v1321
        %v1323 = vrot.slane %v1318, 4
        %v1325 = vshrl.u32 %v1170, 16
        %v1327 = vrot.slane %v1325, 7
        %v1328 = vshll.u32 %v1170, 16
        %v1330 = vor.u32 %v1327, %v1328
        %v1331 = vrot.slane %v1327, 4
        %v1333 = vshrl.u32 %v1171, 16
        %v1335 = vrot.slane %v1333, 7
        %v1336 = vshll.u32 %v1171, 16
        %v1338 = vor.u32 %v1335, %v1336
        %v1339 = vsel %vm1187, %v1331, %v1338
        %v1340 = vrot.slane %v1335, 4
        %v1342 = vshrl.u32 %v1172, 16
        %v1344 = vrot.slane %v1342, 7
        %v1345 = vshll.u32 %v1172, 16
        %v1347 = vor.u32 %v1344, %v1345
        %v1348 = vrot.slane %v1344, 4
        %v1350 = vshrl.u32 %v1173, 16
        %v1352 = vrot.slane %v1350, 7
        %v1353 = vshll.u32 %v1173, 16
        %v1355 = vor.u32 %v1352, %v1353
        %v1356 = vsel %vm1187, %v1348, %v1355
        %v1357 = vrot.slane %v1352, 4
        %v1359 = vshrl.u32 %v1174, 16
        %v1361 = vrot.slane %v1359, 7
        %v1362 = vshll.u32 %v1174, 16
        %v1364 = vor.u32 %v1361, %v1362
        %v1365 = vrot.slane %v1361, 4
        %v1367 = vshrl.u32 %v1175, 16
        %v1369 = vrot.slane %v1367, 7
        %v1370 = vshll.u32 %v1175, 16
        %v1372 = vor.u32 %v1369, %v1370
        %v1373 = vsel %vm1187, %v1365, %v1372
        %v1374 = vrot.slane %v1369, 4
        %v1376 = vshrl.u32 %v1176, 16
        %v1378 = vrot.slane %v1376, 7
        %v1379 = vshll.u32 %v1176, 16
        %v1381 = vor.u32 %v1378, %v1379
        %v1382 = vrot.slane %v1378, 4
        %v1384 = vshrl.u32 %v1177, 16
        %v1386 = vrot.slane %v1384, 7
        %v1387 = vshll.u32 %v1177, 16
        %v1389 = vor.u32 %v1386, %v1387
        %v1390 = vsel %vm1187, %v1382, %v1389
        %v1391 = vrot.slane %v1386, 4
        %v1393 = vshrl.u32 %v1178, 16
        %v1395 = vrot.slane %v1393, 7
        %v1396 = vshll.u32 %v1178, 16
        %v1398 = vor.u32 %v1395, %v1396
        %v1399 = vrot.slane %v1395, 4
        %v1401 = vshrl.u32 %v1179, 16
        %v1403 = vrot.slane %v1401, 7
        %v1404 = vshll.u32 %v1179, 16
        %v1406 = vor.u32 %v1403, %v1404
        %v1407 = vsel %vm1187, %v1399, %v1406
        %v1408 = vrot.slane %v1403, 4
        %v1410 = vshrl.u32 %v1180, 16
        %v1412 = vrot.slane %v1410, 7
        %v1413 = vshll.u32 %v1180, 16
        %v1415 = vor.u32 %v1412, %v1413
        %v1416 = vrot.slane %v1412, 4
        %v1418 = vshrl.u32 %v1181, 16
        %v1420 = vrot.slane %v1418, 7
        %v1421 = vshll.u32 %v1181, 16
        %v1423 = vor.u32 %v1420, %v1421
        %v1424 = vsel %vm1187, %v1416, %v1423
        %v1425 = vrot.slane %v1420, 4
        %v1427 = vshrl.u32 %v1182, 16
        %v1429 = vrot.slane %v1427, 7
        %v1430 = vshll.u32 %v1182, 16
        %v1432 = vor.u32 %v1429, %v1430
        %v1433 = vrot.slane %v1429, 4
        %v1435 = vshrl.u32 %v1183, 16
        %v1437 = vrot.slane %v1435, 7
        %v1438 = vshll.u32 %v1183, 16
        %v1440 = vor.u32 %v1437, %v1438
        %v1441 = vsel %vm1187, %v1433, %v1440
        %v1442 = vrot.slane %v1437, 4
        %v1444 = vshrl.u32 %v1184, 16
        %v1446 = vrot.slane %v1444, 7
        %v1447 = vshll.u32 %v1184, 16
        %v1449 = vor.u32 %v1446, %v1447
        %v1450 = vrot.slane %v1446, 4
        %v1452 = vshrl.u32 %v1185, 16
        %v1454 = vrot.slane %v1452, 7
        %v1455 = vshll.u32 %v1185, 16
        %v1457 = vor.u32 %v1454, %v1455
        %v1458 = vsel %vm1187, %v1450, %v1457
        %v1459 = vrot.slane %v1454, 4
        %s1508 = scalar_lea.vmem [#allocation2], 16
        %vm1509 = vcmask 1043456
        %vm1510 = vmand %vm1509, %vm1050
        %v1511 = vld [vmem:[%s1508] sm:$0xf]
        %v1512 = vsel %vm1510, %v1194, %v1511
        %1513 = vst [vmem:[%s1508] sm:$0xf] %v1512
        %1514 = vst [vmem:[%s1508 + $0x4] sm:$0xf] %v1203
        %v1515 = vld [vmem:[%s1508 + $0x8] sm:$0x1]
        %v1516 = vsel %vm995, %v1204, %v1515
        %1517 = vst [vmem:[%s1508 + $0x8] sm:$0x1] %v1516
        %v1518 = vld [vmem:[%s1508 + $0x10] sm:$0xf]
        %v1519 = vsel %vm1510, %v1211, %v1518
        %1520 = vst [vmem:[%s1508 + $0x10] sm:$0xf] %v1519
        %1521 = vst [vmem:[%s1508 + $0x14] sm:$0xf] %v1220
        %v1522 = vld [vmem:[%s1508 + $0x18] sm:$0x1]
        %v1523 = vsel %vm995, %v1221, %v1522
        %1524 = vst [vmem:[%s1508 + $0x18] sm:$0x1] %v1523
        %v1525 = vld [vmem:[%s1508 + $0x20] sm:$0xf]
        %v1526 = vsel %vm1510, %v1228, %v1525
        %1527 = vst [vmem:[%s1508 + $0x20] sm:$0xf] %v1526
        %1528 = vst [vmem:[%s1508 + $0x24] sm:$0xf] %v1237
        %v1529 = vld [vmem:[%s1508 + $0x28] sm:$0x1]
        %v1530 = vsel %vm995, %v1238, %v1529
        %1531 = vst [vmem:[%s1508 + $0x28] sm:$0x1] %v1530
        %v1532 = vld [vmem:[%s1508 + $0x30] sm:$0xf]
        %v1533 = vsel %vm1510, %v1245, %v1532
        %1534 = vst [vmem:[%s1508 + $0x30] sm:$0xf] %v1533
        %1535 = vst [vmem:[%s1508 + $0x34] sm:$0xf] %v1254
        %v1536 = vld [vmem:[%s1508 + $0x38] sm:$0x1]
        %v1537 = vsel %vm995, %v1255, %v1536
        %1538 = vst [vmem:[%s1508 + $0x38] sm:$0x1] %v1537
        %v1539 = vld [vmem:[%s1508 + $0x40] sm:$0xf]
        %v1540 = vsel %vm1510, %v1262, %v1539
        %1541 = vst [vmem:[%s1508 + $0x40] sm:$0xf] %v1540
        %1542 = vst [vmem:[%s1508 + $0x44] sm:$0xf] %v1271
        %v1543 = vld [vmem:[%s1508 + $0x48] sm:$0x1]
        %v1544 = vsel %vm995, %v1272, %v1543
        %1545 = vst [vmem:[%s1508 + $0x48] sm:$0x1] %v1544
        %v1546 = vld [vmem:[%s1508 + $0x50] sm:$0xf]
        %v1547 = vsel %vm1510, %v1279, %v1546
        %1548 = vst [vmem:[%s1508 + $0x50] sm:$0xf] %v1547
        %1549 = vst [vmem:[%s1508 + $0x54] sm:$0xf] %v1288
        %v1550 = vld [vmem:[%s1508 + $0x58] sm:$0x1]
        %v1551 = vsel %vm995, %v1289, %v1550
        %1552 = vst [vmem:[%s1508 + $0x58] sm:$0x1] %v1551
        %v1553 = vld [vmem:[%s1508 + $0x60] sm:$0xf]
        %v1554 = vsel %vm1510, %v1296, %v1553
        %1555 = vst [vmem:[%s1508 + $0x60] sm:$0xf] %v1554
        %1556 = vst [vmem:[%s1508 + $0x64] sm:$0xf] %v1305
        %v1557 = vld [vmem:[%s1508 + $0x68] sm:$0x1]
        %v1558 = vsel %vm995, %v1306, %v1557
        %1559 = vst [vmem:[%s1508 + $0x68] sm:$0x1] %v1558
        %v1560 = vld [vmem:[%s1508 + $0x70] sm:$0xf]
        %v1561 = vsel %vm1510, %v1313, %v1560
        %1562 = vst [vmem:[%s1508 + $0x70] sm:$0xf] %v1561
        %1563 = vst [vmem:[%s1508 + $0x74] sm:$0xf] %v1322
        %v1564 = vld [vmem:[%s1508 + $0x78] sm:$0x1]
        %v1565 = vsel %vm995, %v1323, %v1564
        %1566 = vst [vmem:[%s1508 + $0x78] sm:$0x1] %v1565
        %v1567 = vld [vmem:[%s1508 + $0x80] sm:$0xf]
        %v1568 = vsel %vm1510, %v1330, %v1567
        %1569 = vst [vmem:[%s1508 + $0x80] sm:$0xf] %v1568
        %1570 = vst [vmem:[%s1508 + $0x84] sm:$0xf] %v1339
        %v1571 = vld [vmem:[%s1508 + $0x88] sm:$0x1]
        %v1572 = vsel %vm995, %v1340, %v1571
        %1573 = vst [vmem:[%s1508 + $0x88] sm:$0x1] %v1572
        %v1574 = vld [vmem:[%s1508 + $0x90] sm:$0xf]
        %v1575 = vsel %vm1510, %v1347, %v1574
        %1576 = vst [vmem:[%s1508 + $0x90] sm:$0xf] %v1575
        %1577 = vst [vmem:[%s1508 + $0x94] sm:$0xf] %v1356
        %v1578 = vld [vmem:[%s1508 + $0x98] sm:$0x1]
        %v1579 = vsel %vm995, %v1357, %v1578
        %1580 = vst [vmem:[%s1508 + $0x98] sm:$0x1] %v1579
        %v1581 = vld [vmem:[%s1508 + $0xa0] sm:$0xf]
        %v1582 = vsel %vm1510, %v1364, %v1581
        %1583 = vst [vmem:[%s1508 + $0xa0] sm:$0xf] %v1582
        %1584 = vst [vmem:[%s1508 + $0xa4] sm:$0xf] %v1373
        %v1585 = vld [vmem:[%s1508 + $0xa8] sm:$0x1]
        %v1586 = vsel %vm995, %v1374, %v1585
        %1587 = vst [vmem:[%s1508 + $0xa8] sm:$0x1] %v1586
        %v1588 = vld [vmem:[%s1508 + $0xb0] sm:$0xf]
        %v1589 = vsel %vm1510, %v1381, %v1588
        %1590 = vst [vmem:[%s1508 + $0xb0] sm:$0xf] %v1589
        %1591 = vst [vmem:[%s1508 + $0xb4] sm:$0xf] %v1390
        %v1592 = vld [vmem:[%s1508 + $0xb8] sm:$0x1]
        %v1593 = vsel %vm995, %v1391, %v1592
        %1594 = vst [vmem:[%s1508 + $0xb8] sm:$0x1] %v1593
        %v1595 = vld [vmem:[%s1508 + $0xc0] sm:$0xf]
        %v1596 = vsel %vm1510, %v1398, %v1595
        %1597 = vst [vmem:[%s1508 + $0xc0] sm:$0xf] %v1596
        %1598 = vst [vmem:[%s1508 + $0xc4] sm:$0xf] %v1407
        %v1599 = vld [vmem:[%s1508 + $0xc8] sm:$0x1]
        %v1600 = vsel %vm995, %v1408, %v1599
        %1601 = vst [vmem:[%s1508 + $0xc8] sm:$0x1] %v1600
        %v1602 = vld [vmem:[%s1508 + $0xd0] sm:$0xf]
        %v1603 = vsel %vm1510, %v1415, %v1602
        %1604 = vst [vmem:[%s1508 + $0xd0] sm:$0xf] %v1603
        %1605 = vst [vmem:[%s1508 + $0xd4] sm:$0xf] %v1424
        %v1606 = vld [vmem:[%s1508 + $0xd8] sm:$0x1]
        %v1607 = vsel %vm995, %v1425, %v1606
        %1608 = vst [vmem:[%s1508 + $0xd8] sm:$0x1] %v1607
        %v1609 = vld [vmem:[%s1508 + $0xe0] sm:$0xf]
        %v1610 = vsel %vm1510, %v1432, %v1609
        %1611 = vst [vmem:[%s1508 + $0xe0] sm:$0xf] %v1610
        %1612 = vst [vmem:[%s1508 + $0xe4] sm:$0xf] %v1441
        %v1613 = vld [vmem:[%s1508 + $0xe8] sm:$0x1]
        %v1614 = vsel %vm995, %v1442, %v1613
        %1615 = vst [vmem:[%s1508 + $0xe8] sm:$0x1] %v1614
        %v1616 = vld [vmem:[%s1508 + $0xf0] sm:$0xf]
        %v1617 = vsel %vm1510, %v1449, %v1616
        %1618 = vst [vmem:[%s1508 + $0xf0] sm:$0xf] %v1617
        %1619 = vst [vmem:[%s1508 + $0xf4] sm:$0xf] %v1458
        %v1620 = vld [vmem:[%s1508 + $0xf8] sm:$0x1]
        %v1621 = vsel %vm995, %v1459, %v1620
        %1622 = vst [vmem:[%s1508 + $0xf8] sm:$0x1] %v1621
        %v1623 = vld [vmem:[#allocation2] sm:$0xf]
        %v1624 = vld [vmem:[#allocation2 + $0x4] sm:$0xf]
        %v1625 = vld [vmem:[#allocation2 + $0x10] sm:$0xf]
        %v1626 = vld [vmem:[#allocation2 + $0x14] sm:$0xf]
        %v1627 = vld [vmem:[#allocation2 + $0x20] sm:$0xf]
        %v1628 = vld [vmem:[#allocation2 + $0x24] sm:$0xf]
        %v1629 = vld [vmem:[#allocation2 + $0x30] sm:$0xf]
        %v1630 = vld [vmem:[#allocation2 + $0x34] sm:$0xf]
        %v1631 = vld [vmem:[#allocation2 + $0x40] sm:$0xf]
        %v1632 = vld [vmem:[#allocation2 + $0x44] sm:$0xf]
        %v1633 = vld [vmem:[#allocation2 + $0x50] sm:$0xf]
        %v1634 = vld [vmem:[#allocation2 + $0x54] sm:$0xf]
        %v1635 = vld [vmem:[#allocation2 + $0x60] sm:$0xf]
        %v1636 = vld [vmem:[#allocation2 + $0x64] sm:$0xf]
        %v1637 = vld [vmem:[#allocation2 + $0x70] sm:$0xf]
        %v1638 = vld [vmem:[#allocation2 + $0x74] sm:$0xf]
        %v1639 = vld [vmem:[#allocation2 + $0x80] sm:$0xf]
        %v1640 = vld [vmem:[#allocation2 + $0x84] sm:$0xf]
        %v1641 = vld [vmem:[#allocation2 + $0x90] sm:$0xf]
        %v1642 = vld [vmem:[#allocation2 + $0x94] sm:$0xf]
        %v1643 = vld [vmem:[#allocation2 + $0xa0] sm:$0xf]
        %v1644 = vld [vmem:[#allocation2 + $0xa4] sm:$0xf]
        %v1645 = vld [vmem:[#allocation2 + $0xb0] sm:$0xf]
        %v1646 = vld [vmem:[#allocation2 + $0xb4] sm:$0xf]
        %v1647 = vld [vmem:[#allocation2 + $0xc0] sm:$0xf]
        %v1648 = vld [vmem:[#allocation2 + $0xc4] sm:$0xf]
        %v1649 = vld [vmem:[#allocation2 + $0xd0] sm:$0xf]
        %v1650 = vld [vmem:[#allocation2 + $0xd4] sm:$0xf]
        %v1651 = vld [vmem:[#allocation2 + $0xe0] sm:$0xf]
        %v1652 = vld [vmem:[#allocation2 + $0xe4] sm:$0xf]
        %v1653 = vld [vmem:[#allocation2 + $0xf0] sm:$0xf]
        %v1654 = vld [vmem:[#allocation2 + $0xf4] sm:$0xf]
        %1655 = vst [vmem:[#allocation3] sm:$0xf] %v1623
        %1656 = vst [vmem:[#allocation3 + $0x24] sm:$0xf] %v1624
        %1657 = vst [vmem:[#allocation3 + $0x48] sm:$0xf] %v1625
        %1658 = vst [vmem:[#allocation3 + $0x6c] sm:$0xf] %v1626
        %1659 = vst [vmem:[#allocation3 + $0x90] sm:$0xf] %v1627
        %1660 = vst [vmem:[#allocation3 + $0xb4] sm:$0xf] %v1628
        %1661 = vst [vmem:[#allocation3 + $0xd8] sm:$0xf] %v1629
        %1662 = vst [vmem:[#allocation3 + $0xfc] sm:$0xf] %v1630
        %1663 = vst [vmem:[#allocation3 + $0x120] sm:$0xf] %v1631
        %1664 = vst [vmem:[#allocation3 + $0x144] sm:$0xf] %v1632
        %1665 = vst [vmem:[#allocation3 + $0x168] sm:$0xf] %v1633
        %1666 = vst [vmem:[#allocation3 + $0x18c] sm:$0xf] %v1634
        %1667 = vst [vmem:[#allocation3 + $0x1b0] sm:$0xf] %v1635
        %1668 = vst [vmem:[#allocation3 + $0x1d4] sm:$0xf] %v1636
        %1669 = vst [vmem:[#allocation3 + $0x1f8] sm:$0xf] %v1637
        %1670 = vst [vmem:[#allocation3 + $0x21c] sm:$0xf] %v1638
        %1671 = vst [vmem:[#allocation3 + $0x240] sm:$0xf] %v1639
        %1672 = vst [vmem:[#allocation3 + $0x264] sm:$0xf] %v1640
        %1673 = vst [vmem:[#allocation3 + $0x288] sm:$0xf] %v1641
        %1674 = vst [vmem:[#allocation3 + $0x2ac] sm:$0xf] %v1642
        %1675 = vst [vmem:[#allocation3 + $0x2d0] sm:$0xf] %v1643
        %1676 = vst [vmem:[#allocation3 + $0x2f4] sm:$0xf] %v1644
        %1677 = vst [vmem:[#allocation3 + $0x318] sm:$0xf] %v1645
        %1678 = vst [vmem:[#allocation3 + $0x33c] sm:$0xf] %v1646
        %1679 = vst [vmem:[#allocation3 + $0x360] sm:$0xf] %v1647
        %1680 = vst [vmem:[#allocation3 + $0x384] sm:$0xf] %v1648
        %1681 = vst [vmem:[#allocation3 + $0x3a8] sm:$0xf] %v1649
        %1682 = vst [vmem:[#allocation3 + $0x3cc] sm:$0xf] %v1650
        %1683 = vst [vmem:[#allocation3 + $0x3f0] sm:$0xf] %v1651
        %1684 = vst [vmem:[#allocation3 + $0x414] sm:$0xf] %v1652
        %1685 = vst [vmem:[#allocation3 + $0x438] sm:$0xf] %v1653
        %1686 = vst [vmem:[#allocation3 + $0x45c] sm:$0xf] %v1654
        %v1687 = vld [vmem:[#allocation2] sm:$0xf]
        %v1688 = vld [vmem:[#allocation2 + $0x4] sm:$0xf]
        %v1689 = vld [vmem:[#allocation2 + $0x8] sm:$0x1]
        %v1690 = vld [vmem:[#allocation2 + $0x10] sm:$0xf]
        %v1691 = vld [vmem:[#allocation2 + $0x14] sm:$0xf]
        %v1692 = vld [vmem:[#allocation2 + $0x18] sm:$0x1]
        %v1693 = vld [vmem:[#allocation2 + $0x20] sm:$0xf]
        %v1694 = vld [vmem:[#allocation2 + $0x24] sm:$0xf]
        %v1695 = vld [vmem:[#allocation2 + $0x28] sm:$0x1]
        %v1696 = vld [vmem:[#allocation2 + $0x30] sm:$0xf]
        %v1697 = vld [vmem:[#allocation2 + $0x34] sm:$0xf]
        %v1698 = vld [vmem:[#allocation2 + $0x38] sm:$0x1]
        %v1699 = vld [vmem:[#allocation2 + $0x40] sm:$0xf]
        %v1700 = vld [vmem:[#allocation2 + $0x44] sm:$0xf]
        %v1701 = vld [vmem:[#allocation2 + $0x48] sm:$0x1]
        %v1702 = vld [vmem:[#allocation2 + $0x50] sm:$0xf]
        %v1703 = vld [vmem:[#allocation2 + $0x54] sm:$0xf]
        %v1704 = vld [vmem:[#allocation2 + $0x58] sm:$0x1]
        %v1705 = vld [vmem:[#allocation2 + $0x60] sm:$0xf]
        %v1706 = vld [vmem:[#allocation2 + $0x64] sm:$0xf]
        %v1707 = vld [vmem:[#allocation2 + $0x68] sm:$0x1]
        %v1708 = vld [vmem:[#allocation2 + $0x70] sm:$0xf]
        %v1709 = vld [vmem:[#allocation2 + $0x74] sm:$0xf]
        %v1710 = vld [vmem:[#allocation2 + $0x78] sm:$0x1]
        %v1711 = vld [vmem:[#allocation2 + $0x80] sm:$0xf]
        %v1712 = vld [vmem:[#allocation2 + $0x84] sm:$0xf]
        %v1713 = vld [vmem:[#allocation2 + $0x88] sm:$0x1]
        %v1714 = vld [vmem:[#allocation2 + $0x90] sm:$0xf]
        %v1715 = vld [vmem:[#allocation2 + $0x94] sm:$0xf]
        %v1716 = vld [vmem:[#allocation2 + $0x98] sm:$0x1]
        %v1717 = vld [vmem:[#allocation2 + $0xa0] sm:$0xf]
        %v1718 = vld [vmem:[#allocation2 + $0xa4] sm:$0xf]
        %v1719 = vld [vmem:[#allocation2 + $0xa8] sm:$0x1]
        %v1720 = vld [vmem:[#allocation2 + $0xb0] sm:$0xf]
        %v1721 = vld [vmem:[#allocation2 + $0xb4] sm:$0xf]
        %v1722 = vld [vmem:[#allocation2 + $0xb8] sm:$0x1]
        %v1723 = vld [vmem:[#allocation2 + $0xc0] sm:$0xf]
        %v1724 = vld [vmem:[#allocation2 + $0xc4] sm:$0xf]
        %v1725 = vld [vmem:[#allocation2 + $0xc8] sm:$0x1]
        %v1726 = vld [vmem:[#allocation2 + $0xd0] sm:$0xf]
        %v1727 = vld [vmem:[#allocation2 + $0xd4] sm:$0xf]
        %v1728 = vld [vmem:[#allocation2 + $0xd8] sm:$0x1]
        %v1729 = vld [vmem:[#allocation2 + $0xe0] sm:$0xf]
        %v1730 = vld [vmem:[#allocation2 + $0xe4] sm:$0xf]
        %v1731 = vld [vmem:[#allocation2 + $0xe8] sm:$0x1]
        %v1732 = vld [vmem:[#allocation2 + $0xf0] sm:$0xf]
        %v1733 = vld [vmem:[#allocation2 + $0xf4] sm:$0xf]
        %v1734 = vld [vmem:[#allocation2 + $0xf8] sm:$0x1]
        %vm1735 = vsmask.f32 3328
        %vm1736 = vsmask.f32 7440
        %vm1737 = vmor %vm1735, %vm1736
        %v1739 = vshrl.u32 %v1687, 16
        %v1741 = vrot.slane %v1739, 4
        %v1742 = vshll.u32 %v1687, 16
        %v1744 = vrot.slane %v1742, 5
        %v1745 = vor.u32 %v1741, %v1744
        %v1746 = vrot.slane %v1745, 4
        %v1748 = vshll.u32 %v1688, 16
        %v1750 = vrot.slane %v1748, 5
        %v1751 = vsel %vm1737, %v1746, %v1750
        %v1752 = vshrl.u32 %v1688, 16
        %v1754 = vrot.slane %v1752, 4
        %v1755 = vor.u32 %v1754, %v1750
        %v1756 = vrot.slane %v1755, 4
        %v1758 = vshll.u32 %v1689, 16
        %v1760 = vrot.slane %v1758, 5
        %v1761 = vsel %vm1737, %v1756, %v1760
        %v1763 = vshrl.u32 %v1690, 16
        %v1765 = vrot.slane %v1763, 4
        %v1766 = vshll.u32 %v1690, 16
        %v1768 = vrot.slane %v1766, 5
        %v1769 = vor.u32 %v1765, %v1768
        %v1770 = vrot.slane %v1769, 4
        %v1772 = vshll.u32 %v1691, 16
        %v1774 = vrot.slane %v1772, 5
        %v1775 = vsel %vm1737, %v1770, %v1774
        %v1776 = vshrl.u32 %v1691, 16
        %v1778 = vrot.slane %v1776, 4
        %v1779 = vor.u32 %v1778, %v1774
        %v1780 = vrot.slane %v1779, 4
        %v1782 = vshll.u32 %v1692, 16
        %v1784 = vrot.slane %v1782, 5
        %v1785 = vsel %vm1737, %v1780, %v1784
        %v1787 = vshrl.u32 %v1693, 16
        %v1789 = vrot.slane %v1787, 4
        %v1790 = vshll.u32 %v1693, 16
        %v1792 = vrot.slane %v1790, 5
        %v1793 = vor.u32 %v1789, %v1792
        %v1794 = vrot.slane %v1793, 4
        %v1796 = vshll.u32 %v1694, 16
        %v1798 = vrot.slane %v1796, 5
        %v1799 = vsel %vm1737, %v1794, %v1798
        %v1800 = vshrl.u32 %v1694, 16
        %v1802 = vrot.slane %v1800, 4
        %v1803 = vor.u32 %v1802, %v1798
        %v1804 = vrot.slane %v1803, 4
        %v1806 = vshll.u32 %v1695, 16
        %v1808 = vrot.slane %v1806, 5
        %v1809 = vsel %vm1737, %v1804, %v1808
        %v1811 = vshrl.u32 %v1696, 16
        %v1813 = vrot.slane %v1811, 4
        %v1814 = vshll.u32 %v1696, 16
        %v1816 = vrot.slane %v1814, 5
        %v1817 = vor.u32 %v1813, %v1816
        %v1818 = vrot.slane %v1817, 4
        %v1820 = vshll.u32 %v1697, 16
        %v1822 = vrot.slane %v1820, 5
        %v1823 = vsel %vm1737, %v1818, %v1822
        %v1824 = vshrl.u32 %v1697, 16
        %v1826 = vrot.slane %v1824, 4
        %v1827 = vor.u32 %v1826, %v1822
        %v1828 = vrot.slane %v1827, 4
        %v1830 = vshll.u32 %v1698, 16
        %v1832 = vrot.slane %v1830, 5
        %v1833 = vsel %vm1737, %v1828, %v1832
        %v1835 = vshrl.u32 %v1699, 16
        %v1837 = vrot.slane %v1835, 4
        %v1838 = vshll.u32 %v1699, 16
        %v1840 = vrot.slane %v1838, 5
        %v1841 = vor.u32 %v1837, %v1840
        %v1842 = vrot.slane %v1841, 4
        %v1844 = vshll.u32 %v1700, 16
        %v1846 = vrot.slane %v1844, 5
        %v1847 = vsel %vm1737, %v1842, %v1846
        %v1848 = vshrl.u32 %v1700, 16
        %v1850 = vrot.slane %v1848, 4
        %v1851 = vor.u32 %v1850, %v1846
        %v1852 = vrot.slane %v1851, 4
        %v1854 = vshll.u32 %v1701, 16
        %v1856 = vrot.slane %v1854, 5
        %v1857 = vsel %vm1737, %v1852, %v1856
        %v1859 = vshrl.u32 %v1702, 16
        %v1861 = vrot.slane %v1859, 4
        %v1862 = vshll.u32 %v1702, 16
        %v1864 = vrot.slane %v1862, 5
        %v1865 = vor.u32 %v1861, %v1864
        %v1866 = vrot.slane %v1865, 4
        %v1868 = vshll.u32 %v1703, 16
        %v1870 = vrot.slane %v1868, 5
        %v1871 = vsel %vm1737, %v1866, %v1870
        %v1872 = vshrl.u32 %v1703, 16
        %v1874 = vrot.slane %v1872, 4
        %v1875 = vor.u32 %v1874, %v1870
        %v1876 = vrot.slane %v1875, 4
        %v1878 = vshll.u32 %v1704, 16
        %v1880 = vrot.slane %v1878, 5
        %v1881 = vsel %vm1737, %v1876, %v1880
        %v1883 = vshrl.u32 %v1705, 16
        %v1885 = vrot.slane %v1883, 4
        %v1886 = vshll.u32 %v1705, 16
        %v1888 = vrot.slane %v1886, 5
        %v1889 = vor.u32 %v1885, %v1888
        %v1890 = vrot.slane %v1889, 4
        %v1892 = vshll.u32 %v1706, 16
        %v1894 = vrot.slane %v1892, 5
        %v1895 = vsel %vm1737, %v1890, %v1894
        %v1896 = vshrl.u32 %v1706, 16
        %v1898 = vrot.slane %v1896, 4
        %v1899 = vor.u32 %v1898, %v1894
        %v1900 = vrot.slane %v1899, 4
        %v1902 = vshll.u32 %v1707, 16
        %v1904 = vrot.slane %v1902, 5
        %v1905 = vsel %vm1737, %v1900, %v1904
        %v1907 = vshrl.u32 %v1708, 16
        %v1909 = vrot.slane %v1907, 4
        %v1910 = vshll.u32 %v1708, 16
        %v1912 = vrot.slane %v1910, 5
        %v1913 = vor.u32 %v1909, %v1912
        %v1914 = vrot.slane %v1913, 4
        %v1916 = vshll.u32 %v1709, 16
        %v1918 = vrot.slane %v1916, 5
        %v1919 = vsel %vm1737, %v1914, %v1918
        %v1920 = vshrl.u32 %v1709, 16
        %v1922 = vrot.slane %v1920, 4
        %v1923 = vor.u32 %v1922, %v1918
        %v1924 = vrot.slane %v1923, 4
        %v1926 = vshll.u32 %v1710, 16
        %v1928 = vrot.slane %v1926, 5
        %v1929 = vsel %vm1737, %v1924, %v1928
        %v1931 = vshrl.u32 %v1711, 16
        %v1933 = vrot.slane %v1931, 4
        %v1934 = vshll.u32 %v1711, 16
        %v1936 = vrot.slane %v1934, 5
        %v1937 = vor.u32 %v1933, %v1936
        %v1938 = vrot.slane %v1937, 4
        %v1940 = vshll.u32 %v1712, 16
        %v1942 = vrot.slane %v1940, 5
        %v1943 = vsel %vm1737, %v1938, %v1942
        %v1944 = vshrl.u32 %v1712, 16
        %v1946 = vrot.slane %v1944, 4
        %v1947 = vor.u32 %v1946, %v1942
        %v1948 = vrot.slane %v1947, 4
        %v1950 = vshll.u32 %v1713, 16
        %v1952 = vrot.slane %v1950, 5
        %v1953 = vsel %vm1737, %v1948, %v1952
        %v1955 = vshrl.u32 %v1714, 16
        %v1957 = vrot.slane %v1955, 4
        %v1958 = vshll.u32 %v1714, 16
        %v1960 = vrot.slane %v1958, 5
        %v1961 = vor.u32 %v1957, %v1960
        %v1962 = vrot.slane %v1961, 4
        %v1964 = vshll.u32 %v1715, 16
        %v1966 = vrot.slane %v1964, 5
        %v1967 = vsel %vm1737, %v1962, %v1966
        %v1968 = vshrl.u32 %v1715, 16
        %v1970 = vrot.slane %v1968, 4
        %v1971 = vor.u32 %v1970, %v1966
        %v1972 = vrot.slane %v1971, 4
        %v1974 = vshll.u32 %v1716, 16
        %v1976 = vrot.slane %v1974, 5
        %v1977 = vsel %vm1737, %v1972, %v1976
        %v1979 = vshrl.u32 %v1717, 16
        %v1981 = vrot.slane %v1979, 4
        %v1982 = vshll.u32 %v1717, 16
        %v1984 = vrot.slane %v1982, 5
        %v1985 = vor.u32 %v1981, %v1984
        %v1986 = vrot.slane %v1985, 4
        %v1988 = vshll.u32 %v1718, 16
        %v1990 = vrot.slane %v1988, 5
        %v1991 = vsel %vm1737, %v1986, %v1990
        %v1992 = vshrl.u32 %v1718, 16
        %v1994 = vrot.slane %v1992, 4
        %v1995 = vor.u32 %v1994, %v1990
        %v1996 = vrot.slane %v1995, 4
        %v1998 = vshll.u32 %v1719, 16
        %v2000 = vrot.slane %v1998, 5
        %v2001 = vsel %vm1737, %v1996, %v2000
        %v2003 = vshrl.u32 %v1720, 16
        %v2005 = vrot.slane %v2003, 4
        %v2006 = vshll.u32 %v1720, 16
        %v2008 = vrot.slane %v2006, 5
        %v2009 = vor.u32 %v2005, %v2008
        %v2010 = vrot.slane %v2009, 4
        %v2012 = vshll.u32 %v1721, 16
        %v2014 = vrot.slane %v2012, 5
        %v2015 = vsel %vm1737, %v2010, %v2014
        %v2016 = vshrl.u32 %v1721, 16
        %v2018 = vrot.slane %v2016, 4
        %v2019 = vor.u32 %v2018, %v2014
        %v2020 = vrot.slane %v2019, 4
        %v2022 = vshll.u32 %v1722, 16
        %v2024 = vrot.slane %v2022, 5
        %v2025 = vsel %vm1737, %v2020, %v2024
        %v2027 = vshrl.u32 %v1723, 16
        %v2029 = vrot.slane %v2027, 4
        %v2030 = vshll.u32 %v1723, 16
        %v2032 = vrot.slane %v2030, 5
        %v2033 = vor.u32 %v2029, %v2032
        %v2034 = vrot.slane %v2033, 4
        %v2036 = vshll.u32 %v1724, 16
        %v2038 = vrot.slane %v2036, 5
        %v2039 = vsel %vm1737, %v2034, %v2038
        %v2040 = vshrl.u32 %v1724, 16
        %v2042 = vrot.slane %v2040, 4
        %v2043 = vor.u32 %v2042, %v2038
        %v2044 = vrot.slane %v2043, 4
        %v2046 = vshll.u32 %v1725, 16
        %v2048 = vrot.slane %v2046, 5
        %v2049 = vsel %vm1737, %v2044, %v2048
        %v2051 = vshrl.u32 %v1726, 16
        %v2053 = vrot.slane %v2051, 4
        %v2054 = vshll.u32 %v1726, 16
        %v2056 = vrot.slane %v2054, 5
        %v2057 = vor.u32 %v2053, %v2056
        %v2058 = vrot.slane %v2057, 4
        %v2060 = vshll.u32 %v1727, 16
        %v2062 = vrot.slane %v2060, 5
        %v2063 = vsel %vm1737, %v2058, %v2062
        %v2064 = vshrl.u32 %v1727, 16
        %v2066 = vrot.slane %v2064, 4
        %v2067 = vor.u32 %v2066, %v2062
        %v2068 = vrot.slane %v2067, 4
        %v2070 = vshll.u32 %v1728, 16
        %v2072 = vrot.slane %v2070, 5
        %v2073 = vsel %vm1737, %v2068, %v2072
        %v2075 = vshrl.u32 %v1729, 16
        %v2077 = vrot.slane %v2075, 4
        %v2078 = vshll.u32 %v1729, 16
        %v2080 = vrot.slane %v2078, 5
        %v2081 = vor.u32 %v2077, %v2080
        %v2082 = vrot.slane %v2081, 4
        %v2084 = vshll.u32 %v1730, 16
        %v2086 = vrot.slane %v2084, 5
        %v2087 = vsel %vm1737, %v2082, %v2086
        %v2088 = vshrl.u32 %v1730, 16
        %v2090 = vrot.slane %v2088, 4
        %v2091 = vor.u32 %v2090, %v2086
        %v2092 = vrot.slane %v2091, 4
        %v2094 = vshll.u32 %v1731, 16
        %v2096 = vrot.slane %v2094, 5
        %v2097 = vsel %vm1737, %v2092, %v2096
        %v2099 = vshrl.u32 %v1732, 16
        %v2101 = vrot.slane %v2099, 4
        %v2102 = vshll.u32 %v1732, 16
        %v2104 = vrot.slane %v2102, 5
        %v2105 = vor.u32 %v2101, %v2104
        %v2106 = vrot.slane %v2105, 4
        %v2108 = vshll.u32 %v1733, 16
        %v2110 = vrot.slane %v2108, 5
        %v2111 = vsel %vm1737, %v2106, %v2110
        %v2112 = vshrl.u32 %v1733, 16
        %v2114 = vrot.slane %v2112, 4
        %v2115 = vor.u32 %v2114, %v2110
        %v2116 = vrot.slane %v2115, 4
        %v2118 = vshll.u32 %v1734, 16
        %v2120 = vrot.slane %v2118, 5
        %v2121 = vsel %vm1737, %v2116, %v2120
        %2154 = vst [vmem:[#allocation3 + $0x4] sm:$0xf] %v1751
        %2155 = vst [vmem:[#allocation3 + $0x28] sm:$0xf] %v1761
        %2156 = vst [vmem:[#allocation3 + $0x4c] sm:$0xf] %v1775
        %2157 = vst [vmem:[#allocation3 + $0x70] sm:$0xf] %v1785
        %2158 = vst [vmem:[#allocation3 + $0x94] sm:$0xf] %v1799
        %2159 = vst [vmem:[#allocation3 + $0xb8] sm:$0xf] %v1809
        %2160 = vst [vmem:[#allocation3 + $0xdc] sm:$0xf] %v1823
        %2161 = vst [vmem:[#allocation3 + $0x100] sm:$0xf] %v1833
        %2162 = vst [vmem:[#allocation3 + $0x124] sm:$0xf] %v1847
        %2163 = vst [vmem:[#allocation3 + $0x148] sm:$0xf] %v1857
        %2164 = vst [vmem:[#allocation3 + $0x16c] sm:$0xf] %v1871
        %2165 = vst [vmem:[#allocation3 + $0x190] sm:$0xf] %v1881
        %2166 = vst [vmem:[#allocation3 + $0x1b4] sm:$0xf] %v1895
        %2167 = vst [vmem:[#allocation3 + $0x1d8] sm:$0xf] %v1905
        %2168 = vst [vmem:[#allocation3 + $0x1fc] sm:$0xf] %v1919
        %2169 = vst [vmem:[#allocation3 + $0x220] sm:$0xf] %v1929
        %2170 = vst [vmem:[#allocation3 + $0x244] sm:$0xf] %v1943
        %2171 = vst [vmem:[#allocation3 + $0x268] sm:$0xf] %v1953
        %2172 = vst [vmem:[#allocation3 + $0x28c] sm:$0xf] %v1967
        %2173 = vst [vmem:[#allocation3 + $0x2b0] sm:$0xf] %v1977
        %2174 = vst [vmem:[#allocation3 + $0x2d4] sm:$0xf] %v1991
        %2175 = vst [vmem:[#allocation3 + $0x2f8] sm:$0xf] %v2001
        %2176 = vst [vmem:[#allocation3 + $0x31c] sm:$0xf] %v2015
        %2177 = vst [vmem:[#allocation3 + $0x340] sm:$0xf] %v2025
        %2178 = vst [vmem:[#allocation3 + $0x364] sm:$0xf] %v2039
        %2179 = vst [vmem:[#allocation3 + $0x388] sm:$0xf] %v2049
        %2180 = vst [vmem:[#allocation3 + $0x3ac] sm:$0xf] %v2063
        %2181 = vst [vmem:[#allocation3 + $0x3d0] sm:$0xf] %v2073
        %2182 = vst [vmem:[#allocation3 + $0x3f4] sm:$0xf] %v2087
        %2183 = vst [vmem:[#allocation3 + $0x418] sm:$0xf] %v2097
        %2184 = vst [vmem:[#allocation3 + $0x43c] sm:$0xf] %v2111
        %2185 = vst [vmem:[#allocation3 + $0x460] sm:$0xf] %v2121
        %v2186 = vld [vmem:[#allocation2] sm:$0xe]
        %v2187 = vld [vmem:[#allocation2 + $0x4] sm:$0xf]
        %v2188 = vld [vmem:[#allocation2 + $0x8] sm:$0x1]
        %v2189 = vld [vmem:[#allocation2 + $0x10] sm:$0xe]
        %v2190 = vld [vmem:[#allocation2 + $0x14] sm:$0xf]
        %v2191 = vld [vmem:[#allocation2 + $0x18] sm:$0x1]
        %v2192 = vld [vmem:[#allocation2 + $0x20] sm:$0xe]
        %v2193 = vld [vmem:[#allocation2 + $0x24] sm:$0xf]
        %v2194 = vld [vmem:[#allocation2 + $0x28] sm:$0x1]
        %v2195 = vld [vmem:[#allocation2 + $0x30] sm:$0xe]
        %v2196 = vld [vmem:[#allocation2 + $0x34] sm:$0xf]
        %v2197 = vld [vmem:[#allocation2 + $0x38] sm:$0x1]
        %v2198 = vld [vmem:[#allocation2 + $0x40] sm:$0xe]
        %v2199 = vld [vmem:[#allocation2 + $0x44] sm:$0xf]
        %v2200 = vld [vmem:[#allocation2 + $0x48] sm:$0x1]
        %v2201 = vld [vmem:[#allocation2 + $0x50] sm:$0xe]
        %v2202 = vld [vmem:[#allocation2 + $0x54] sm:$0xf]
        %v2203 = vld [vmem:[#allocation2 + $0x58] sm:$0x1]
        %v2204 = vld [vmem:[#allocation2 + $0x60] sm:$0xe]
        %v2205 = vld [vmem:[#allocation2 + $0x64] sm:$0xf]
        %v2206 = vld [vmem:[#allocation2 + $0x68] sm:$0x1]
        %v2207 = vld [vmem:[#allocation2 + $0x70] sm:$0xe]
        %v2208 = vld [vmem:[#allocation2 + $0x74] sm:$0xf]
        %v2209 = vld [vmem:[#allocation2 + $0x78] sm:$0x1]
        %v2210 = vld [vmem:[#allocation2 + $0x80] sm:$0xe]
        %v2211 = vld [vmem:[#allocation2 + $0x84] sm:$0xf]
        %v2212 = vld [vmem:[#allocation2 + $0x88] sm:$0x1]
        %v2213 = vld [vmem:[#allocation2 + $0x90] sm:$0xe]
        %v2214 = vld [vmem:[#allocation2 + $0x94] sm:$0xf]
        %v2215 = vld [vmem:[#allocation2 + $0x98] sm:$0x1]
        %v2216 = vld [vmem:[#allocation2 + $0xa0] sm:$0xe]
        %v2217 = vld [vmem:[#allocation2 + $0xa4] sm:$0xf]
        %v2218 = vld [vmem:[#allocation2 + $0xa8] sm:$0x1]
        %v2219 = vld [vmem:[#allocation2 + $0xb0] sm:$0xe]
        %v2220 = vld [vmem:[#allocation2 + $0xb4] sm:$0xf]
        %v2221 = vld [vmem:[#allocation2 + $0xb8] sm:$0x1]
        %v2222 = vld [vmem:[#allocation2 + $0xc0] sm:$0xe]
        %v2223 = vld [vmem:[#allocation2 + $0xc4] sm:$0xf]
        %v2224 = vld [vmem:[#allocation2 + $0xc8] sm:$0x1]
        %v2225 = vld [vmem:[#allocation2 + $0xd0] sm:$0xe]
        %v2226 = vld [vmem:[#allocation2 + $0xd4] sm:$0xf]
        %v2227 = vld [vmem:[#allocation2 + $0xd8] sm:$0x1]
        %v2228 = vld [vmem:[#allocation2 + $0xe0] sm:$0xe]
        %v2229 = vld [vmem:[#allocation2 + $0xe4] sm:$0xf]
        %v2230 = vld [vmem:[#allocation2 + $0xe8] sm:$0x1]
        %v2231 = vld [vmem:[#allocation2 + $0xf0] sm:$0xe]
        %v2232 = vld [vmem:[#allocation2 + $0xf4] sm:$0xf]
        %v2233 = vld [vmem:[#allocation2 + $0xf8] sm:$0x1]
        %vm2282 = vcmask 1042432
        %vm2283 = vcmask 1046532
        %vm2284 = vmor %vm2282, %vm2283
        %v2285 = vrot.slane %v2186, 5
        %v2286 = vrot.slane %v2285, 4
        %v2287 = vrot.slane %v2187, 5
        %v2288 = vsel %vm2284, %v2286, %v2287
        %v2289 = vrot.slane %v2287, 4
        %v2290 = vrot.slane %v2188, 5
        %v2291 = vsel %vm2284, %v2289, %v2290
        %v2292 = vrot.slane %v2189, 5
        %v2293 = vrot.slane %v2292, 4
        %v2294 = vrot.slane %v2190, 5
        %v2295 = vsel %vm2284, %v2293, %v2294
        %v2296 = vrot.slane %v2294, 4
        %v2297 = vrot.slane %v2191, 5
        %v2298 = vsel %vm2284, %v2296, %v2297
        %v2299 = vrot.slane %v2192, 5
        %v2300 = vrot.slane %v2299, 4
        %v2301 = vrot.slane %v2193, 5
        %v2302 = vsel %vm2284, %v2300, %v2301
        %v2303 = vrot.slane %v2301, 4
        %v2304 = vrot.slane %v2194, 5
        %v2305 = vsel %vm2284, %v2303, %v2304
        %v2306 = vrot.slane %v2195, 5
        %v2307 = vrot.slane %v2306, 4
        %v2308 = vrot.slane %v2196, 5
        %v2309 = vsel %vm2284, %v2307, %v2308
        %v2310 = vrot.slane %v2308, 4
        %v2311 = vrot.slane %v2197, 5
        %v2312 = vsel %vm2284, %v2310, %v2311
        %v2313 = vrot.slane %v2198, 5
        %v2314 = vrot.slane %v2313, 4
        %v2315 = vrot.slane %v2199, 5
        %v2316 = vsel %vm2284, %v2314, %v2315
        %v2317 = vrot.slane %v2315, 4
        %v2318 = vrot.slane %v2200, 5
        %v2319 = vsel %vm2284, %v2317, %v2318
        %v2320 = vrot.slane %v2201, 5
        %v2321 = vrot.slane %v2320, 4
        %v2322 = vrot.slane %v2202, 5
        %v2323 = vsel %vm2284, %v2321, %v2322
        %v2324 = vrot.slane %v2322, 4
        %v2325 = vrot.slane %v2203, 5
        %v2326 = vsel %vm2284, %v2324, %v2325
        %v2327 = vrot.slane %v2204, 5
        %v2328 = vrot.slane %v2327, 4
        %v2329 = vrot.slane %v2205, 5
        %v2330 = vsel %vm2284, %v2328, %v2329
        %v2331 = vrot.slane %v2329, 4
        %v2332 = vrot.slane %v2206, 5
        %v2333 = vsel %vm2284, %v2331, %v2332
        %v2334 = vrot.slane %v2207, 5
        %v2335 = vrot.slane %v2334, 4
        %v2336 = vrot.slane %v2208, 5
        %v2337 = vsel %vm2284, %v2335, %v2336
        %v2338 = vrot.slane %v2336, 4
        %v2339 = vrot.slane %v2209, 5
        %v2340 = vsel %vm2284, %v2338, %v2339
        %v2341 = vrot.slane %v2210, 5
        %v2342 = vrot.slane %v2341, 4
        %v2343 = vrot.slane %v2211, 5
        %v2344 = vsel %vm2284, %v2342, %v2343
        %v2345 = vrot.slane %v2343, 4
        %v2346 = vrot.slane %v2212, 5
        %v2347 = vsel %vm2284, %v2345, %v2346
        %v2348 = vrot.slane %v2213, 5
        %v2349 = vrot.slane %v2348, 4
        %v2350 = vrot.slane %v2214, 5
        %v2351 = vsel %vm2284, %v2349, %v2350
        %v2352 = vrot.slane %v2350, 4
        %v2353 = vrot.slane %v2215, 5
        %v2354 = vsel %vm2284, %v2352, %v2353
        %v2355 = vrot.slane %v2216, 5
        %v2356 = vrot.slane %v2355, 4
        %v2357 = vrot.slane %v2217, 5
        %v2358 = vsel %vm2284, %v2356, %v2357
        %v2359 = vrot.slane %v2357, 4
        %v2360 = vrot.slane %v2218, 5
        %v2361 = vsel %vm2284, %v2359, %v2360
        %v2362 = vrot.slane %v2219, 5
        %v2363 = vrot.slane %v2362, 4
        %v2364 = vrot.slane %v2220, 5
        %v2365 = vsel %vm2284, %v2363, %v2364
        %v2366 = vrot.slane %v2364, 4
        %v2367 = vrot.slane %v2221, 5
        %v2368 = vsel %vm2284, %v2366, %v2367
        %v2369 = vrot.slane %v2222, 5
        %v2370 = vrot.slane %v2369, 4
        %v2371 = vrot.slane %v2223, 5
        %v2372 = vsel %vm2284, %v2370, %v2371
        %v2373 = vrot.slane %v2371, 4
        %v2374 = vrot.slane %v2224, 5
        %v2375 = vsel %vm2284, %v2373, %v2374
        %v2376 = vrot.slane %v2225, 5
        %v2377 = vrot.slane %v2376, 4
        %v2378 = vrot.slane %v2226, 5
        %v2379 = vsel %vm2284, %v2377, %v2378
        %v2380 = vrot.slane %v2378, 4
        %v2381 = vrot.slane %v2227, 5
        %v2382 = vsel %vm2284, %v2380, %v2381
        %v2383 = vrot.slane %v2228, 5
        %v2384 = vrot.slane %v2383, 4
        %v2385 = vrot.slane %v2229, 5
        %v2386 = vsel %vm2284, %v2384, %v2385
        %v2387 = vrot.slane %v2385, 4
        %v2388 = vrot.slane %v2230, 5
        %v2389 = vsel %vm2284, %v2387, %v2388
        %v2390 = vrot.slane %v2231, 5
        %v2391 = vrot.slane %v2390, 4
        %v2392 = vrot.slane %v2232, 5
        %v2393 = vsel %vm2284, %v2391, %v2392
        %v2394 = vrot.slane %v2392, 4
        %v2395 = vrot.slane %v2233, 5
        %v2396 = vsel %vm2284, %v2394, %v2395
        %2429 = vst [vmem:[#allocation3 + $0x8] sm:$0xf] %v2288
        %2430 = vst [vmem:[#allocation3 + $0x2c] sm:$0xf] %v2291
        %2431 = vst [vmem:[#allocation3 + $0x50] sm:$0xf] %v2295
        %2432 = vst [vmem:[#allocation3 + $0x74] sm:$0xf] %v2298
        %2433 = vst [vmem:[#allocation3 + $0x98] sm:$0xf] %v2302
        %2434 = vst [vmem:[#allocation3 + $0xbc] sm:$0xf] %v2305
        %2435 = vst [vmem:[#allocation3 + $0xe0] sm:$0xf] %v2309
        %2436 = vst [vmem:[#allocation3 + $0x104] sm:$0xf] %v2312
        %2437 = vst [vmem:[#allocation3 + $0x128] sm:$0xf] %v2316
        %2438 = vst [vmem:[#allocation3 + $0x14c] sm:$0xf] %v2319
        %2439 = vst [vmem:[#allocation3 + $0x170] sm:$0xf] %v2323
        %2440 = vst [vmem:[#allocation3 + $0x194] sm:$0xf] %v2326
        %2441 = vst [vmem:[#allocation3 + $0x1b8] sm:$0xf] %v2330
        %2442 = vst [vmem:[#allocation3 + $0x1dc] sm:$0xf] %v2333
        %2443 = vst [vmem:[#allocation3 + $0x200] sm:$0xf] %v2337
        %2444 = vst [vmem:[#allocation3 + $0x224] sm:$0xf] %v2340
        %2445 = vst [vmem:[#allocation3 + $0x248] sm:$0xf] %v2344
        %2446 = vst [vmem:[#allocation3 + $0x26c] sm:$0xf] %v2347
        %2447 = vst [vmem:[#allocation3 + $0x290] sm:$0xf] %v2351
        %2448 = vst [vmem:[#allocation3 + $0x2b4] sm:$0xf] %v2354
        %2449 = vst [vmem:[#allocation3 + $0x2d8] sm:$0xf] %v2358
        %2450 = vst [vmem:[#allocation3 + $0x2fc] sm:$0xf] %v2361
        %2451 = vst [vmem:[#allocation3 + $0x320] sm:$0xf] %v2365
        %2452 = vst [vmem:[#allocation3 + $0x344] sm:$0xf] %v2368
        %2453 = vst [vmem:[#allocation3 + $0x368] sm:$0xf] %v2372
        %2454 = vst [vmem:[#allocation3 + $0x38c] sm:$0xf] %v2375
        %2455 = vst [vmem:[#allocation3 + $0x3b0] sm:$0xf] %v2379
        %2456 = vst [vmem:[#allocation3 + $0x3d4] sm:$0xf] %v2382
        %2457 = vst [vmem:[#allocation3 + $0x3f8] sm:$0xf] %v2386
        %2458 = vst [vmem:[#allocation3 + $0x41c] sm:$0xf] %v2389
        %2459 = vst [vmem:[#allocation3 + $0x440] sm:$0xf] %v2393
        %2460 = vst [vmem:[#allocation3 + $0x464] sm:$0xf] %v2396
        %v2461 = vld [vmem:[%s1508] sm:$0xf]
        %v2462 = vld [vmem:[%s1508 + $0x4] sm:$0xf]
        %v2463 = vld [vmem:[%s1508 + $0x10] sm:$0xf]
        %v2464 = vld [vmem:[%s1508 + $0x14] sm:$0xf]
        %v2465 = vld [vmem:[%s1508 + $0x20] sm:$0xf]
        %v2466 = vld [vmem:[%s1508 + $0x24] sm:$0xf]
        %v2467 = vld [vmem:[%s1508 + $0x30] sm:$0xf]
        %v2468 = vld [vmem:[%s1508 + $0x34] sm:$0xf]
        %v2469 = vld [vmem:[%s1508 + $0x40] sm:$0xf]
        %v2470 = vld [vmem:[%s1508 + $0x44] sm:$0xf]
        %v2471 = vld [vmem:[%s1508 + $0x50] sm:$0xf]
        %v2472 = vld [vmem:[%s1508 + $0x54] sm:$0xf]
        %v2473 = vld [vmem:[%s1508 + $0x60] sm:$0xf]
        %v2474 = vld [vmem:[%s1508 + $0x64] sm:$0xf]
        %v2475 = vld [vmem:[%s1508 + $0x70] sm:$0xf]
        %v2476 = vld [vmem:[%s1508 + $0x74] sm:$0xf]
        %v2477 = vld [vmem:[%s1508 + $0x80] sm:$0xf]
        %v2478 = vld [vmem:[%s1508 + $0x84] sm:$0xf]
        %v2479 = vld [vmem:[%s1508 + $0x90] sm:$0xf]
        %v2480 = vld [vmem:[%s1508 + $0x94] sm:$0xf]
        %v2481 = vld [vmem:[%s1508 + $0xa0] sm:$0xf]
        %v2482 = vld [vmem:[%s1508 + $0xa4] sm:$0xf]
        %v2483 = vld [vmem:[%s1508 + $0xb0] sm:$0xf]
        %v2484 = vld [vmem:[%s1508 + $0xb4] sm:$0xf]
        %v2485 = vld [vmem:[%s1508 + $0xc0] sm:$0xf]
        %v2486 = vld [vmem:[%s1508 + $0xc4] sm:$0xf]
        %v2487 = vld [vmem:[%s1508 + $0xd0] sm:$0xf]
        %v2488 = vld [vmem:[%s1508 + $0xd4] sm:$0xf]
        %v2489 = vld [vmem:[%s1508 + $0xe0] sm:$0xf]
        %v2490 = vld [vmem:[%s1508 + $0xe4] sm:$0xf]
        %v2491 = vld [vmem:[%s1508 + $0xf0] sm:$0xf]
        %v2492 = vld [vmem:[%s1508 + $0xf4] sm:$0xf]
        %2493 = vst [vmem:[#allocation3 + $0xc] sm:$0xf] %v2461
        %2494 = vst [vmem:[#allocation3 + $0x30] sm:$0xf] %v2462
        %2495 = vst [vmem:[#allocation3 + $0x54] sm:$0xf] %v2463
        %2496 = vst [vmem:[#allocation3 + $0x78] sm:$0xf] %v2464
        %2497 = vst [vmem:[#allocation3 + $0x9c] sm:$0xf] %v2465
        %2498 = vst [vmem:[#allocation3 + $0xc0] sm:$0xf] %v2466
        %2499 = vst [vmem:[#allocation3 + $0xe4] sm:$0xf] %v2467
        %2500 = vst [vmem:[#allocation3 + $0x108] sm:$0xf] %v2468
        %2501 = vst [vmem:[#allocation3 + $0x12c] sm:$0xf] %v2469
        %2502 = vst [vmem:[#allocation3 + $0x150] sm:$0xf] %v2470
        %2503 = vst [vmem:[#allocation3 + $0x174] sm:$0xf] %v2471
        %2504 = vst [vmem:[#allocation3 + $0x198] sm:$0xf] %v2472
        %2505 = vst [vmem:[#allocation3 + $0x1bc] sm:$0xf] %v2473
        %2506 = vst [vmem:[#allocation3 + $0x1e0] sm:$0xf] %v2474
        %2507 = vst [vmem:[#allocation3 + $0x204] sm:$0xf] %v2475
        %2508 = vst [vmem:[#allocation3 + $0x228] sm:$0xf] %v2476
        %2509 = vst [vmem:[#allocation3 + $0x24c] sm:$0xf] %v2477
        %2510 = vst [vmem:[#allocation3 + $0x270] sm:$0xf] %v2478
        %2511 = vst [vmem:[#allocation3 + $0x294] sm:$0xf] %v2479
        %2512 = vst [vmem:[#allocation3 + $0x2b8] sm:$0xf] %v2480
        %2513 = vst [vmem:[#allocation3 + $0x2dc] sm:$0xf] %v2481
        %2514 = vst [vmem:[#allocation3 + $0x300] sm:$0xf] %v2482
        %2515 = vst [vmem:[#allocation3 + $0x324] sm:$0xf] %v2483
        %2516 = vst [vmem:[#allocation3 + $0x348] sm:$0xf] %v2484
        %2517 = vst [vmem:[#allocation3 + $0x36c] sm:$0xf] %v2485
        %2518 = vst [vmem:[#allocation3 + $0x390] sm:$0xf] %v2486
        %2519 = vst [vmem:[#allocation3 + $0x3b4] sm:$0xf] %v2487
        %2520 = vst [vmem:[#allocation3 + $0x3d8] sm:$0xf] %v2488
        %2521 = vst [vmem:[#allocation3 + $0x3fc] sm:$0xf] %v2489
        %2522 = vst [vmem:[#allocation3 + $0x420] sm:$0xf] %v2490
        %2523 = vst [vmem:[#allocation3 + $0x444] sm:$0xf] %v2491
        %2524 = vst [vmem:[#allocation3 + $0x468] sm:$0xf] %v2492
        %v2525 = vld [vmem:[%s1508] sm:$0xf]
        %v2526 = vld [vmem:[%s1508 + $0x4] sm:$0xf]
        %v2527 = vld [vmem:[%s1508 + $0x8] sm:$0x1]
        %v2528 = vld [vmem:[%s1508 + $0x10] sm:$0xf]
        %v2529 = vld [vmem:[%s1508 + $0x14] sm:$0xf]
        %v2530 = vld [vmem:[%s1508 + $0x18] sm:$0x1]
        %v2531 = vld [vmem:[%s1508 + $0x20] sm:$0xf]
        %v2532 = vld [vmem:[%s1508 + $0x24] sm:$0xf]
        %v2533 = vld [vmem:[%s1508 + $0x28] sm:$0x1]
        %v2534 = vld [vmem:[%s1508 + $0x30] sm:$0xf]
        %v2535 = vld [vmem:[%s1508 + $0x34] sm:$0xf]
        %v2536 = vld [vmem:[%s1508 + $0x38] sm:$0x1]
        %v2537 = vld [vmem:[%s1508 + $0x40] sm:$0xf]
        %v2538 = vld [vmem:[%s1508 + $0x44] sm:$0xf]
        %v2539 = vld [vmem:[%s1508 + $0x48] sm:$0x1]
        %v2540 = vld [vmem:[%s1508 + $0x50] sm:$0xf]
        %v2541 = vld [vmem:[%s1508 + $0x54] sm:$0xf]
        %v2542 = vld [vmem:[%s1508 + $0x58] sm:$0x1]
        %v2543 = vld [vmem:[%s1508 + $0x60] sm:$0xf]
        %v2544 = vld [vmem:[%s1508 + $0x64] sm:$0xf]
        %v2545 = vld [vmem:[%s1508 + $0x68] sm:$0x1]
        %v2546 = vld [vmem:[%s1508 + $0x70] sm:$0xf]
        %v2547 = vld [vmem:[%s1508 + $0x74] sm:$0xf]
        %v2548 = vld [vmem:[%s1508 + $0x78] sm:$0x1]
        %v2549 = vld [vmem:[%s1508 + $0x80] sm:$0xf]
        %v2550 = vld [vmem:[%s1508 + $0x84] sm:$0xf]
        %v2551 = vld [vmem:[%s1508 + $0x88] sm:$0x1]
        %v2552 = vld [vmem:[%s1508 + $0x90] sm:$0xf]
        %v2553 = vld [vmem:[%s1508 + $0x94] sm:$0xf]
        %v2554 = vld [vmem:[%s1508 + $0x98] sm:$0x1]
        %v2555 = vld [vmem:[%s1508 + $0xa0] sm:$0xf]
        %v2556 = vld [vmem:[%s1508 + $0xa4] sm:$0xf]
        %v2557 = vld [vmem:[%s1508 + $0xa8] sm:$0x1]
        %v2558 = vld [vmem:[%s1508 + $0xb0] sm:$0xf]
        %v2559 = vld [vmem:[%s1508 + $0xb4] sm:$0xf]
        %v2560 = vld [vmem:[%s1508 + $0xb8] sm:$0x1]
        %v2561 = vld [vmem:[%s1508 + $0xc0] sm:$0xf]
        %v2562 = vld [vmem:[%s1508 + $0xc4] sm:$0xf]
        %v2563 = vld [vmem:[%s1508 + $0xc8] sm:$0x1]
        %v2564 = vld [vmem:[%s1508 + $0xd0] sm:$0xf]
        %v2565 = vld [vmem:[%s1508 + $0xd4] sm:$0xf]
        %v2566 = vld [vmem:[%s1508 + $0xd8] sm:$0x1]
        %v2567 = vld [vmem:[%s1508 + $0xe0] sm:$0xf]
        %v2568 = vld [vmem:[%s1508 + $0xe4] sm:$0xf]
        %v2569 = vld [vmem:[%s1508 + $0xe8] sm:$0x1]
        %v2570 = vld [vmem:[%s1508 + $0xf0] sm:$0xf]
        %v2571 = vld [vmem:[%s1508 + $0xf4] sm:$0xf]
        %v2572 = vld [vmem:[%s1508 + $0xf8] sm:$0x1]
        %v2574 = vshrl.u32 %v2525, 16
        %v2576 = vrot.slane %v2574, 4
        %v2577 = vshll.u32 %v2525, 16
        %v2579 = vrot.slane %v2577, 5
        %v2580 = vor.u32 %v2576, %v2579
        %v2581 = vrot.slane %v2580, 4
        %v2583 = vshll.u32 %v2526, 16
        %v2585 = vrot.slane %v2583, 5
        %v2586 = vsel %vm1737, %v2581, %v2585
        %v2587 = vshrl.u32 %v2526, 16
        %v2589 = vrot.slane %v2587, 4
        %v2590 = vor.u32 %v2589, %v2585
        %v2591 = vrot.slane %v2590, 4
        %v2593 = vshll.u32 %v2527, 16
        %v2595 = vrot.slane %v2593, 5
        %v2596 = vsel %vm1737, %v2591, %v2595
        %v2598 = vshrl.u32 %v2528, 16
        %v2600 = vrot.slane %v2598, 4
        %v2601 = vshll.u32 %v2528, 16
        %v2603 = vrot.slane %v2601, 5
        %v2604 = vor.u32 %v2600, %v2603
        %v2605 = vrot.slane %v2604, 4
        %v2607 = vshll.u32 %v2529, 16
        %v2609 = vrot.slane %v2607, 5
        %v2610 = vsel %vm1737, %v2605, %v2609
        %v2611 = vshrl.u32 %v2529, 16
        %v2613 = vrot.slane %v2611, 4
        %v2614 = vor.u32 %v2613, %v2609
        %v2615 = vrot.slane %v2614, 4
        %v2617 = vshll.u32 %v2530, 16
        %v2619 = vrot.slane %v2617, 5
        %v2620 = vsel %vm1737, %v2615, %v2619
        %v2622 = vshrl.u32 %v2531, 16
        %v2624 = vrot.slane %v2622, 4
        %v2625 = vshll.u32 %v2531, 16
        %v2627 = vrot.slane %v2625, 5
        %v2628 = vor.u32 %v2624, %v2627
        %v2629 = vrot.slane %v2628, 4
        %v2631 = vshll.u32 %v2532, 16
        %v2633 = vrot.slane %v2631, 5
        %v2634 = vsel %vm1737, %v2629, %v2633
        %v2635 = vshrl.u32 %v2532, 16
        %v2637 = vrot.slane %v2635, 4
        %v2638 = vor.u32 %v2637, %v2633
        %v2639 = vrot.slane %v2638, 4
        %v2641 = vshll.u32 %v2533, 16
        %v2643 = vrot.slane %v2641, 5
        %v2644 = vsel %vm1737, %v2639, %v2643
        %v2646 = vshrl.u32 %v2534, 16
        %v2648 = vrot.slane %v2646, 4
        %v2649 = vshll.u32 %v2534, 16
        %v2651 = vrot.slane %v2649, 5
        %v2652 = vor.u32 %v2648, %v2651
        %v2653 = vrot.slane %v2652, 4
        %v2655 = vshll.u32 %v2535, 16
        %v2657 = vrot.slane %v2655, 5
        %v2658 = vsel %vm1737, %v2653, %v2657
        %v2659 = vshrl.u32 %v2535, 16
        %v2661 = vrot.slane %v2659, 4
        %v2662 = vor.u32 %v2661, %v2657
        %v2663 = vrot.slane %v2662, 4
        %v2665 = vshll.u32 %v2536, 16
        %v2667 = vrot.slane %v2665, 5
        %v2668 = vsel %vm1737, %v2663, %v2667
        %v2670 = vshrl.u32 %v2537, 16
        %v2672 = vrot.slane %v2670, 4
        %v2673 = vshll.u32 %v2537, 16
        %v2675 = vrot.slane %v2673, 5
        %v2676 = vor.u32 %v2672, %v2675
        %v2677 = vrot.slane %v2676, 4
        %v2679 = vshll.u32 %v2538, 16
        %v2681 = vrot.slane %v2679, 5
        %v2682 = vsel %vm1737, %v2677, %v2681
        %v2683 = vshrl.u32 %v2538, 16
        %v2685 = vrot.slane %v2683, 4
        %v2686 = vor.u32 %v2685, %v2681
        %v2687 = vrot.slane %v2686, 4
        %v2689 = vshll.u32 %v2539, 16
        %v2691 = vrot.slane %v2689, 5
        %v2692 = vsel %vm1737, %v2687, %v2691
        %v2694 = vshrl.u32 %v2540, 16
        %v2696 = vrot.slane %v2694, 4
        %v2697 = vshll.u32 %v2540, 16
        %v2699 = vrot.slane %v2697, 5
        %v2700 = vor.u32 %v2696, %v2699
        %v2701 = vrot.slane %v2700, 4
        %v2703 = vshll.u32 %v2541, 16
        %v2705 = vrot.slane %v2703, 5
        %v2706 = vsel %vm1737, %v2701, %v2705
        %v2707 = vshrl.u32 %v2541, 16
        %v2709 = vrot.slane %v2707, 4
        %v2710 = vor.u32 %v2709, %v2705
        %v2711 = vrot.slane %v2710, 4
        %v2713 = vshll.u32 %v2542, 16
        %v2715 = vrot.slane %v2713, 5
        %v2716 = vsel %vm1737, %v2711, %v2715
        %v2718 = vshrl.u32 %v2543, 16
        %v2720 = vrot.slane %v2718, 4
        %v2721 = vshll.u32 %v2543, 16
        %v2723 = vrot.slane %v2721, 5
        %v2724 = vor.u32 %v2720, %v2723
        %v2725 = vrot.slane %v2724, 4
        %v2727 = vshll.u32 %v2544, 16
        %v2729 = vrot.slane %v2727, 5
        %v2730 = vsel %vm1737, %v2725, %v2729
        %v2731 = vshrl.u32 %v2544, 16
        %v2733 = vrot.slane %v2731, 4
        %v2734 = vor.u32 %v2733, %v2729
        %v2735 = vrot.slane %v2734, 4
        %v2737 = vshll.u32 %v2545, 16
        %v2739 = vrot.slane %v2737, 5
        %v2740 = vsel %vm1737, %v2735, %v2739
        %v2742 = vshrl.u32 %v2546, 16
        %v2744 = vrot.slane %v2742, 4
        %v2745 = vshll.u32 %v2546, 16
        %v2747 = vrot.slane %v2745, 5
        %v2748 = vor.u32 %v2744, %v2747
        %v2749 = vrot.slane %v2748, 4
        %v2751 = vshll.u32 %v2547, 16
        %v2753 = vrot.slane %v2751, 5
        %v2754 = vsel %vm1737, %v2749, %v2753
        %v2755 = vshrl.u32 %v2547, 16
        %v2757 = vrot.slane %v2755, 4
        %v2758 = vor.u32 %v2757, %v2753
        %v2759 = vrot.slane %v2758, 4
        %v2761 = vshll.u32 %v2548, 16
        %v2763 = vrot.slane %v2761, 5
        %v2764 = vsel %vm1737, %v2759, %v2763
        %v2766 = vshrl.u32 %v2549, 16
        %v2768 = vrot.slane %v2766, 4
        %v2769 = vshll.u32 %v2549, 16
        %v2771 = vrot.slane %v2769, 5
        %v2772 = vor.u32 %v2768, %v2771
        %v2773 = vrot.slane %v2772, 4
        %v2775 = vshll.u32 %v2550, 16
        %v2777 = vrot.slane %v2775, 5
        %v2778 = vsel %vm1737, %v2773, %v2777
        %v2779 = vshrl.u32 %v2550, 16
        %v2781 = vrot.slane %v2779, 4
        %v2782 = vor.u32 %v2781, %v2777
        %v2783 = vrot.slane %v2782, 4
        %v2785 = vshll.u32 %v2551, 16
        %v2787 = vrot.slane %v2785, 5
        %v2788 = vsel %vm1737, %v2783, %v2787
        %v2790 = vshrl.u32 %v2552, 16
        %v2792 = vrot.slane %v2790, 4
        %v2793 = vshll.u32 %v2552, 16
        %v2795 = vrot.slane %v2793, 5
        %v2796 = vor.u32 %v2792, %v2795
        %v2797 = vrot.slane %v2796, 4
        %v2799 = vshll.u32 %v2553, 16
        %v2801 = vrot.slane %v2799, 5
        %v2802 = vsel %vm1737, %v2797, %v2801
        %v2803 = vshrl.u32 %v2553, 16
        %v2805 = vrot.slane %v2803, 4
        %v2806 = vor.u32 %v2805, %v2801
        %v2807 = vrot.slane %v2806, 4
        %v2809 = vshll.u32 %v2554, 16
        %v2811 = vrot.slane %v2809, 5
        %v2812 = vsel %vm1737, %v2807, %v2811
        %v2814 = vshrl.u32 %v2555, 16
        %v2816 = vrot.slane %v2814, 4
        %v2817 = vshll.u32 %v2555, 16
        %v2819 = vrot.slane %v2817, 5
        %v2820 = vor.u32 %v2816, %v2819
        %v2821 = vrot.slane %v2820, 4
        %v2823 = vshll.u32 %v2556, 16
        %v2825 = vrot.slane %v2823, 5
        %v2826 = vsel %vm1737, %v2821, %v2825
        %v2827 = vshrl.u32 %v2556, 16
        %v2829 = vrot.slane %v2827, 4
        %v2830 = vor.u32 %v2829, %v2825
        %v2831 = vrot.slane %v2830, 4
        %v2833 = vshll.u32 %v2557, 16
        %v2835 = vrot.slane %v2833, 5
        %v2836 = vsel %vm1737, %v2831, %v2835
        %v2838 = vshrl.u32 %v2558, 16
        %v2840 = vrot.slane %v2838, 4
        %v2841 = vshll.u32 %v2558, 16
        %v2843 = vrot.slane %v2841, 5
        %v2844 = vor.u32 %v2840, %v2843
        %v2845 = vrot.slane %v2844, 4
        %v2847 = vshll.u32 %v2559, 16
        %v2849 = vrot.slane %v2847, 5
        %v2850 = vsel %vm1737, %v2845, %v2849
        %v2851 = vshrl.u32 %v2559, 16
        %v2853 = vrot.slane %v2851, 4
        %v2854 = vor.u32 %v2853, %v2849
        %v2855 = vrot.slane %v2854, 4
        %v2857 = vshll.u32 %v2560, 16
        %v2859 = vrot.slane %v2857, 5
        %v2860 = vsel %vm1737, %v2855, %v2859
        %v2862 = vshrl.u32 %v2561, 16
        %v2864 = vrot.slane %v2862, 4
        %v2865 = vshll.u32 %v2561, 16
        %v2867 = vrot.slane %v2865, 5
        %v2868 = vor.u32 %v2864, %v2867
        %v2869 = vrot.slane %v2868, 4
        %v2871 = vshll.u32 %v2562, 16
        %v2873 = vrot.slane %v2871, 5
        %v2874 = vsel %vm1737, %v2869, %v2873
        %v2875 = vshrl.u32 %v2562, 16
        %v2877 = vrot.slane %v2875, 4
        %v2878 = vor.u32 %v2877, %v2873
        %v2879 = vrot.slane %v2878, 4
        %v2881 = vshll.u32 %v2563, 16
        %v2883 = vrot.slane %v2881, 5
        %v2884 = vsel %vm1737, %v2879, %v2883
        %v2886 = vshrl.u32 %v2564, 16
        %v2888 = vrot.slane %v2886, 4
        %v2889 = vshll.u32 %v2564, 16
        %v2891 = vrot.slane %v2889, 5
        %v2892 = vor.u32 %v2888, %v2891
        %v2893 = vrot.slane %v2892, 4
        %v2895 = vshll.u32 %v2565, 16
        %v2897 = vrot.slane %v2895, 5
        %v2898 = vsel %vm1737, %v2893, %v2897
        %v2899 = vshrl.u32 %v2565, 16
        %v2901 = vrot.slane %v2899, 4
        %v2902 = vor.u32 %v2901, %v2897
        %v2903 = vrot.slane %v2902, 4
        %v2905 = vshll.u32 %v2566, 16
        %v2907 = vrot.slane %v2905, 5
        %v2908 = vsel %vm1737, %v2903, %v2907
        %v2910 = vshrl.u32 %v2567, 16
        %v2912 = vrot.slane %v2910, 4
        %v2913 = vshll.u32 %v2567, 16
        %v2915 = vrot.slane %v2913, 5
        %v2916 = vor.u32 %v2912, %v2915
        %v2917 = vrot.slane %v2916, 4
        %v2919 = vshll.u32 %v2568, 16
        %v2921 = vrot.slane %v2919, 5
        %v2922 = vsel %vm1737, %v2917, %v2921
        %v2923 = vshrl.u32 %v2568, 16
        %v2925 = vrot.slane %v2923, 4
        %v2926 = vor.u32 %v2925, %v2921
        %v2927 = vrot.slane %v2926, 4
        %v2929 = vshll.u32 %v2569, 16
        %v2931 = vrot.slane %v2929, 5
        %v2932 = vsel %vm1737, %v2927, %v2931
        %v2934 = vshrl.u32 %v2570, 16
        %v2936 = vrot.slane %v2934, 4
        %v2937 = vshll.u32 %v2570, 16
        %v2939 = vrot.slane %v2937, 5
        %v2940 = vor.u32 %v2936, %v2939
        %v2941 = vrot.slane %v2940, 4
        %v2943 = vshll.u32 %v2571, 16
        %v2945 = vrot.slane %v2943, 5
        %v2946 = vsel %vm1737, %v2941, %v2945
        %v2947 = vshrl.u32 %v2571, 16
        %v2949 = vrot.slane %v2947, 4
        %v2950 = vor.u32 %v2949, %v2945
        %v2951 = vrot.slane %v2950, 4
        %v2953 = vshll.u32 %v2572, 16
        %v2955 = vrot.slane %v2953, 5
        %v2956 = vsel %vm1737, %v2951, %v2955
        %2989 = vst [vmem:[#allocation3 + $0x10] sm:$0xf] %v2586
        %2990 = vst [vmem:[#allocation3 + $0x34] sm:$0xf] %v2596
        %2991 = vst [vmem:[#allocation3 + $0x58] sm:$0xf] %v2610
        %2992 = vst [vmem:[#allocation3 + $0x7c] sm:$0xf] %v2620
        %2993 = vst [vmem:[#allocation3 + $0xa0] sm:$0xf] %v2634
        %2994 = vst [vmem:[#allocation3 + $0xc4] sm:$0xf] %v2644
        %2995 = vst [vmem:[#allocation3 + $0xe8] sm:$0xf] %v2658
        %2996 = vst [vmem:[#allocation3 + $0x10c] sm:$0xf] %v2668
        %2997 = vst [vmem:[#allocation3 + $0x130] sm:$0xf] %v2682
        %2998 = vst [vmem:[#allocation3 + $0x154] sm:$0xf] %v2692
        %2999 = vst [vmem:[#allocation3 + $0x178] sm:$0xf] %v2706
        %3000 = vst [vmem:[#allocation3 + $0x19c] sm:$0xf] %v2716
        %3001 = vst [vmem:[#allocation3 + $0x1c0] sm:$0xf] %v2730
        %3002 = vst [vmem:[#allocation3 + $0x1e4] sm:$0xf] %v2740
        %3003 = vst [vmem:[#allocation3 + $0x208] sm:$0xf] %v2754
        %3004 = vst [vmem:[#allocation3 + $0x22c] sm:$0xf] %v2764
        %3005 = vst [vmem:[#allocation3 + $0x250] sm:$0xf] %v2778
        %3006 = vst [vmem:[#allocation3 + $0x274] sm:$0xf] %v2788
        %3007 = vst [vmem:[#allocation3 + $0x298] sm:$0xf] %v2802
        %3008 = vst [vmem:[#allocation3 + $0x2bc] sm:$0xf] %v2812
        %3009 = vst [vmem:[#allocation3 + $0x2e0] sm:$0xf] %v2826
        %3010 = vst [vmem:[#allocation3 + $0x304] sm:$0xf] %v2836
        %3011 = vst [vmem:[#allocation3 + $0x328] sm:$0xf] %v2850
        %3012 = vst [vmem:[#allocation3 + $0x34c] sm:$0xf] %v2860
        %3013 = vst [vmem:[#allocation3 + $0x370] sm:$0xf] %v2874
        %3014 = vst [vmem:[#allocation3 + $0x394] sm:$0xf] %v2884
        %3015 = vst [vmem:[#allocation3 + $0x3b8] sm:$0xf] %v2898
        %3016 = vst [vmem:[#allocation3 + $0x3dc] sm:$0xf] %v2908
        %3017 = vst [vmem:[#allocation3 + $0x400] sm:$0xf] %v2922
        %3018 = vst [vmem:[#allocation3 + $0x424] sm:$0xf] %v2932
        %3019 = vst [vmem:[#allocation3 + $0x448] sm:$0xf] %v2946
        %3020 = vst [vmem:[#allocation3 + $0x46c] sm:$0xf] %v2956
        %v3021 = vld [vmem:[%s1508] sm:$0xe]
        %v3022 = vld [vmem:[%s1508 + $0x4] sm:$0xf]
        %v3023 = vld [vmem:[%s1508 + $0x8] sm:$0x1]
        %v3024 = vld [vmem:[%s1508 + $0x10] sm:$0xe]
        %v3025 = vld [vmem:[%s1508 + $0x14] sm:$0xf]
        %v3026 = vld [vmem:[%s1508 + $0x18] sm:$0x1]
        %v3027 = vld [vmem:[%s1508 + $0x20] sm:$0xe]
        %v3028 = vld [vmem:[%s1508 + $0x24] sm:$0xf]
        %v3029 = vld [vmem:[%s1508 + $0x28] sm:$0x1]
        %v3030 = vld [vmem:[%s1508 + $0x30] sm:$0xe]
        %v3031 = vld [vmem:[%s1508 + $0x34] sm:$0xf]
        %v3032 = vld [vmem:[%s1508 + $0x38] sm:$0x1]
        %v3033 = vld [vmem:[%s1508 + $0x40] sm:$0xe]
        %v3034 = vld [vmem:[%s1508 + $0x44] sm:$0xf]
        %v3035 = vld [vmem:[%s1508 + $0x48] sm:$0x1]
        %v3036 = vld [vmem:[%s1508 + $0x50] sm:$0xe]
        %v3037 = vld [vmem:[%s1508 + $0x54] sm:$0xf]
        %v3038 = vld [vmem:[%s1508 + $0x58] sm:$0x1]
        %v3039 = vld [vmem:[%s1508 + $0x60] sm:$0xe]
        %v3040 = vld [vmem:[%s1508 + $0x64] sm:$0xf]
        %v3041 = vld [vmem:[%s1508 + $0x68] sm:$0x1]
        %v3042 = vld [vmem:[%s1508 + $0x70] sm:$0xe]
        %v3043 = vld [vmem:[%s1508 + $0x74] sm:$0xf]
        %v3044 = vld [vmem:[%s1508 + $0x78] sm:$0x1]
        %v3045 = vld [vmem:[%s1508 + $0x80] sm:$0xe]
        %v3046 = vld [vmem:[%s1508 + $0x84] sm:$0xf]
        %v3047 = vld [vmem:[%s1508 + $0x88] sm:$0x1]
        %v3048 = vld [vmem:[%s1508 + $0x90] sm:$0xe]
        %v3049 = vld [vmem:[%s1508 + $0x94] sm:$0xf]
        %v3050 = vld [vmem:[%s1508 + $0x98] sm:$0x1]
        %v3051 = vld [vmem:[%s1508 + $0xa0] sm:$0xe]
        %v3052 = vld [vmem:[%s1508 + $0xa4] sm:$0xf]
        %v3053 = vld [vmem:[%s1508 + $0xa8] sm:$0x1]
        %v3054 = vld [vmem:[%s1508 + $0xb0] sm:$0xe]
        %v3055 = vld [vmem:[%s1508 + $0xb4] sm:$0xf]
        %v3056 = vld [vmem:[%s1508 + $0xb8] sm:$0x1]
        %v3057 = vld [vmem:[%s1508 + $0xc0] sm:$0xe]
        %v3058 = vld [vmem:[%s1508 + $0xc4] sm:$0xf]
        %v3059 = vld [vmem:[%s1508 + $0xc8] sm:$0x1]
        %v3060 = vld [vmem:[%s1508 + $0xd0] sm:$0xe]
        %v3061 = vld [vmem:[%s1508 + $0xd4] sm:$0xf]
        %v3062 = vld [vmem:[%s1508 + $0xd8] sm:$0x1]
        %v3063 = vld [vmem:[%s1508 + $0xe0] sm:$0xe]
        %v3064 = vld [vmem:[%s1508 + $0xe4] sm:$0xf]
        %v3065 = vld [vmem:[%s1508 + $0xe8] sm:$0x1]
        %v3066 = vld [vmem:[%s1508 + $0xf0] sm:$0xe]
        %v3067 = vld [vmem:[%s1508 + $0xf4] sm:$0xf]
        %v3068 = vld [vmem:[%s1508 + $0xf8] sm:$0x1]
        %v3117 = vrot.slane %v3021, 5
        %v3118 = vrot.slane %v3117, 4
        %v3119 = vrot.slane %v3022, 5
        %v3120 = vsel %vm2284, %v3118, %v3119
        %v3121 = vrot.slane %v3119, 4
        %v3122 = vrot.slane %v3023, 5
        %v3123 = vsel %vm2284, %v3121, %v3122
        %v3124 = vrot.slane %v3024, 5
        %v3125 = vrot.slane %v3124, 4
        %v3126 = vrot.slane %v3025, 5
        %v3127 = vsel %vm2284, %v3125, %v3126
        %v3128 = vrot.slane %v3126, 4
        %v3129 = vrot.slane %v3026, 5
        %v3130 = vsel %vm2284, %v3128, %v3129
        %v3131 = vrot.slane %v3027, 5
        %v3132 = vrot.slane %v3131, 4
        %v3133 = vrot.slane %v3028, 5
        %v3134 = vsel %vm2284, %v3132, %v3133
        %v3135 = vrot.slane %v3133, 4
        %v3136 = vrot.slane %v3029, 5
        %v3137 = vsel %vm2284, %v3135, %v3136
        %v3138 = vrot.slane %v3030, 5
        %v3139 = vrot.slane %v3138, 4
        %v3140 = vrot.slane %v3031, 5
        %v3141 = vsel %vm2284, %v3139, %v3140
        %v3142 = vrot.slane %v3140, 4
        %v3143 = vrot.slane %v3032, 5
        %v3144 = vsel %vm2284, %v3142, %v3143
        %v3145 = vrot.slane %v3033, 5
        %v3146 = vrot.slane %v3145, 4
        %v3147 = vrot.slane %v3034, 5
        %v3148 = vsel %vm2284, %v3146, %v3147
        %v3149 = vrot.slane %v3147, 4
        %v3150 = vrot.slane %v3035, 5
        %v3151 = vsel %vm2284, %v3149, %v3150
        %v3152 = vrot.slane %v3036, 5
        %v3153 = vrot.slane %v3152, 4
        %v3154 = vrot.slane %v3037, 5
        %v3155 = vsel %vm2284, %v3153, %v3154
        %v3156 = vrot.slane %v3154, 4
        %v3157 = vrot.slane %v3038, 5
        %v3158 = vsel %vm2284, %v3156, %v3157
        %v3159 = vrot.slane %v3039, 5
        %v3160 = vrot.slane %v3159, 4
        %v3161 = vrot.slane %v3040, 5
        %v3162 = vsel %vm2284, %v3160, %v3161
        %v3163 = vrot.slane %v3161, 4
        %v3164 = vrot.slane %v3041, 5
        %v3165 = vsel %vm2284, %v3163, %v3164
        %v3166 = vrot.slane %v3042, 5
        %v3167 = vrot.slane %v3166, 4
        %v3168 = vrot.slane %v3043, 5
        %v3169 = vsel %vm2284, %v3167, %v3168
        %v3170 = vrot.slane %v3168, 4
        %v3171 = vrot.slane %v3044, 5
        %v3172 = vsel %vm2284, %v3170, %v3171
        %v3173 = vrot.slane %v3045, 5
        %v3174 = vrot.slane %v3173, 4
        %v3175 = vrot.slane %v3046, 5
        %v3176 = vsel %vm2284, %v3174, %v3175
        %v3177 = vrot.slane %v3175, 4
        %v3178 = vrot.slane %v3047, 5
        %v3179 = vsel %vm2284, %v3177, %v3178
        %v3180 = vrot.slane %v3048, 5
        %v3181 = vrot.slane %v3180, 4
        %v3182 = vrot.slane %v3049, 5
        %v3183 = vsel %vm2284, %v3181, %v3182
        %v3184 = vrot.slane %v3182, 4
        %v3185 = vrot.slane %v3050, 5
        %v3186 = vsel %vm2284, %v3184, %v3185
        %v3187 = vrot.slane %v3051, 5
        %v3188 = vrot.slane %v3187, 4
        %v3189 = vrot.slane %v3052, 5
        %v3190 = vsel %vm2284, %v3188, %v3189
        %v3191 = vrot.slane %v3189, 4
        %v3192 = vrot.slane %v3053, 5
        %v3193 = vsel %vm2284, %v3191, %v3192
        %v3194 = vrot.slane %v3054, 5
        %v3195 = vrot.slane %v3194, 4
        %v3196 = vrot.slane %v3055, 5
        %v3197 = vsel %vm2284, %v3195, %v3196
        %v3198 = vrot.slane %v3196, 4
        %v3199 = vrot.slane %v3056, 5
        %v3200 = vsel %vm2284, %v3198, %v3199
        %v3201 = vrot.slane %v3057, 5
        %v3202 = vrot.slane %v3201, 4
        %v3203 = vrot.slane %v3058, 5
        %v3204 = vsel %vm2284, %v3202, %v3203
        %v3205 = vrot.slane %v3203, 4
        %v3206 = vrot.slane %v3059, 5
        %v3207 = vsel %vm2284, %v3205, %v3206
        %v3208 = vrot.slane %v3060, 5
        %v3209 = vrot.slane %v3208, 4
        %v3210 = vrot.slane %v3061, 5
        %v3211 = vsel %vm2284, %v3209, %v3210
        %v3212 = vrot.slane %v3210, 4
        %v3213 = vrot.slane %v3062, 5
        %v3214 = vsel %vm2284, %v3212, %v3213
        %v3215 = vrot.slane %v3063, 5
        %v3216 = vrot.slane %v3215, 4
        %v3217 = vrot.slane %v3064, 5
        %v3218 = vsel %vm2284, %v3216, %v3217
        %v3219 = vrot.slane %v3217, 4
        %v3220 = vrot.slane %v3065, 5
        %v3221 = vsel %vm2284, %v3219, %v3220
        %v3222 = vrot.slane %v3066, 5
        %v3223 = vrot.slane %v3222, 4
        %v3224 = vrot.slane %v3067, 5
        %v3225 = vsel %vm2284, %v3223, %v3224
        %v3226 = vrot.slane %v3224, 4
        %v3227 = vrot.slane %v3068, 5
        %v3228 = vsel %vm2284, %v3226, %v3227
        %3261 = vst [vmem:[#allocation3 + $0x14] sm:$0xf] %v3120
        %3262 = vst [vmem:[#allocation3 + $0x38] sm:$0xf] %v3123
        %3263 = vst [vmem:[#allocation3 + $0x5c] sm:$0xf] %v3127
        %3264 = vst [vmem:[#allocation3 + $0x80] sm:$0xf] %v3130
        %3265 = vst [vmem:[#allocation3 + $0xa4] sm:$0xf] %v3134
        %3266 = vst [vmem:[#allocation3 + $0xc8] sm:$0xf] %v3137
        %3267 = vst [vmem:[#allocation3 + $0xec] sm:$0xf] %v3141
        %3268 = vst [vmem:[#allocation3 + $0x110] sm:$0xf] %v3144
        %3269 = vst [vmem:[#allocation3 + $0x134] sm:$0xf] %v3148
        %3270 = vst [vmem:[#allocation3 + $0x158] sm:$0xf] %v3151
        %3271 = vst [vmem:[#allocation3 + $0x17c] sm:$0xf] %v3155
        %3272 = vst [vmem:[#allocation3 + $0x1a0] sm:$0xf] %v3158
        %3273 = vst [vmem:[#allocation3 + $0x1c4] sm:$0xf] %v3162
        %3274 = vst [vmem:[#allocation3 + $0x1e8] sm:$0xf] %v3165
        %3275 = vst [vmem:[#allocation3 + $0x20c] sm:$0xf] %v3169
        %3276 = vst [vmem:[#allocation3 + $0x230] sm:$0xf] %v3172
        %3277 = vst [vmem:[#allocation3 + $0x254] sm:$0xf] %v3176
        %3278 = vst [vmem:[#allocation3 + $0x278] sm:$0xf] %v3179
        %3279 = vst [vmem:[#allocation3 + $0x29c] sm:$0xf] %v3183
        %3280 = vst [vmem:[#allocation3 + $0x2c0] sm:$0xf] %v3186
        %3281 = vst [vmem:[#allocation3 + $0x2e4] sm:$0xf] %v3190
        %3282 = vst [vmem:[#allocation3 + $0x308] sm:$0xf] %v3193
        %3283 = vst [vmem:[#allocation3 + $0x32c] sm:$0xf] %v3197
        %3284 = vst [vmem:[#allocation3 + $0x350] sm:$0xf] %v3200
        %3285 = vst [vmem:[#allocation3 + $0x374] sm:$0xf] %v3204
        %3286 = vst [vmem:[#allocation3 + $0x398] sm:$0xf] %v3207
        %3287 = vst [vmem:[#allocation3 + $0x3bc] sm:$0xf] %v3211
        %3288 = vst [vmem:[#allocation3 + $0x3e0] sm:$0xf] %v3214
        %3289 = vst [vmem:[#allocation3 + $0x404] sm:$0xf] %v3218
        %3290 = vst [vmem:[#allocation3 + $0x428] sm:$0xf] %v3221
        %3291 = vst [vmem:[#allocation3 + $0x44c] sm:$0xf] %v3225
        %3292 = vst [vmem:[#allocation3 + $0x470] sm:$0xf] %v3228
        %s3293 = scalar_lea.vmem [#allocation2], 32
        %v3294 = vld [vmem:[%s3293] sm:$0xf]
        %v3295 = vld [vmem:[%s3293 + $0x4] sm:$0xf]
        %v3296 = vld [vmem:[%s3293 + $0x10] sm:$0xf]
        %v3297 = vld [vmem:[%s3293 + $0x14] sm:$0xf]
        %v3298 = vld [vmem:[%s3293 + $0x20] sm:$0xf]
        %v3299 = vld [vmem:[%s3293 + $0x24] sm:$0xf]
        %v3300 = vld [vmem:[%s3293 + $0x30] sm:$0xf]
        %v3301 = vld [vmem:[%s3293 + $0x34] sm:$0xf]
        %v3302 = vld [vmem:[%s3293 + $0x40] sm:$0xf]
        %v3303 = vld [vmem:[%s3293 + $0x44] sm:$0xf]
        %v3304 = vld [vmem:[%s3293 + $0x50] sm:$0xf]
        %v3305 = vld [vmem:[%s3293 + $0x54] sm:$0xf]
        %v3306 = vld [vmem:[%s3293 + $0x60] sm:$0xf]
        %v3307 = vld [vmem:[%s3293 + $0x64] sm:$0xf]
        %v3308 = vld [vmem:[%s3293 + $0x70] sm:$0xf]
        %v3309 = vld [vmem:[%s3293 + $0x74] sm:$0xf]
        %v3310 = vld [vmem:[%s3293 + $0x80] sm:$0xf]
        %v3311 = vld [vmem:[%s3293 + $0x84] sm:$0xf]
        %v3312 = vld [vmem:[%s3293 + $0x90] sm:$0xf]
        %v3313 = vld [vmem:[%s3293 + $0x94] sm:$0xf]
        %v3314 = vld [vmem:[%s3293 + $0xa0] sm:$0xf]
        %v3315 = vld [vmem:[%s3293 + $0xa4] sm:$0xf]
        %v3316 = vld [vmem:[%s3293 + $0xb0] sm:$0xf]
        %v3317 = vld [vmem:[%s3293 + $0xb4] sm:$0xf]
        %v3318 = vld [vmem:[%s3293 + $0xc0] sm:$0xf]
        %v3319 = vld [vmem:[%s3293 + $0xc4] sm:$0xf]
        %v3320 = vld [vmem:[%s3293 + $0xd0] sm:$0xf]
        %v3321 = vld [vmem:[%s3293 + $0xd4] sm:$0xf]
        %v3322 = vld [vmem:[%s3293 + $0xe0] sm:$0xf]
        %v3323 = vld [vmem:[%s3293 + $0xe4] sm:$0xf]
        %v3324 = vld [vmem:[%s3293 + $0xf0] sm:$0xf]
        %v3325 = vld [vmem:[%s3293 + $0xf4] sm:$0xf]
        %3326 = vst [vmem:[#allocation3 + $0x18] sm:$0xf] %v3294
        %3327 = vst [vmem:[#allocation3 + $0x3c] sm:$0xf] %v3295
        %3328 = vst [vmem:[#allocation3 + $0x60] sm:$0xf] %v3296
        %3329 = vst [vmem:[#allocation3 + $0x84] sm:$0xf] %v3297
        %3330 = vst [vmem:[#allocation3 + $0xa8] sm:$0xf] %v3298
        %3331 = vst [vmem:[#allocation3 + $0xcc] sm:$0xf] %v3299
        %3332 = vst [vmem:[#allocation3 + $0xf0] sm:$0xf] %v3300
        %3333 = vst [vmem:[#allocation3 + $0x114] sm:$0xf] %v3301
        %3334 = vst [vmem:[#allocation3 + $0x138] sm:$0xf] %v3302
        %3335 = vst [vmem:[#allocation3 + $0x15c] sm:$0xf] %v3303
        %3336 = vst [vmem:[#allocation3 + $0x180] sm:$0xf] %v3304
        %3337 = vst [vmem:[#allocation3 + $0x1a4] sm:$0xf] %v3305
        %3338 = vst [vmem:[#allocation3 + $0x1c8] sm:$0xf] %v3306
        %3339 = vst [vmem:[#allocation3 + $0x1ec] sm:$0xf] %v3307
        %3340 = vst [vmem:[#allocation3 + $0x210] sm:$0xf] %v3308
        %3341 = vst [vmem:[#allocation3 + $0x234] sm:$0xf] %v3309
        %3342 = vst [vmem:[#allocation3 + $0x258] sm:$0xf] %v3310
        %3343 = vst [vmem:[#allocation3 + $0x27c] sm:$0xf] %v3311
        %3344 = vst [vmem:[#allocation3 + $0x2a0] sm:$0xf] %v3312
        %3345 = vst [vmem:[#allocation3 + $0x2c4] sm:$0xf] %v3313
        %3346 = vst [vmem:[#allocation3 + $0x2e8] sm:$0xf] %v3314
        %3347 = vst [vmem:[#allocation3 + $0x30c] sm:$0xf] %v3315
        %3348 = vst [vmem:[#allocation3 + $0x330] sm:$0xf] %v3316
        %3349 = vst [vmem:[#allocation3 + $0x354] sm:$0xf] %v3317
        %3350 = vst [vmem:[#allocation3 + $0x378] sm:$0xf] %v3318
        %3351 = vst [vmem:[#allocation3 + $0x39c] sm:$0xf] %v3319
        %3352 = vst [vmem:[#allocation3 + $0x3c0] sm:$0xf] %v3320
        %3353 = vst [vmem:[#allocation3 + $0x3e4] sm:$0xf] %v3321
        %3354 = vst [vmem:[#allocation3 + $0x408] sm:$0xf] %v3322
        %3355 = vst [vmem:[#allocation3 + $0x42c] sm:$0xf] %v3323
        %3356 = vst [vmem:[#allocation3 + $0x450] sm:$0xf] %v3324
        %3357 = vst [vmem:[#allocation3 + $0x474] sm:$0xf] %v3325
        %v3358 = vld [vmem:[%s3293] sm:$0xf]
        %v3359 = vld [vmem:[%s3293 + $0x4] sm:$0xf]
        %v3360 = vld [vmem:[%s3293 + $0x8] sm:$0x1]
        %v3361 = vld [vmem:[%s3293 + $0x10] sm:$0xf]
        %v3362 = vld [vmem:[%s3293 + $0x14] sm:$0xf]
        %v3363 = vld [vmem:[%s3293 + $0x18] sm:$0x1]
        %v3364 = vld [vmem:[%s3293 + $0x20] sm:$0xf]
        %v3365 = vld [vmem:[%s3293 + $0x24] sm:$0xf]
        %v3366 = vld [vmem:[%s3293 + $0x28] sm:$0x1]
        %v3367 = vld [vmem:[%s3293 + $0x30] sm:$0xf]
        %v3368 = vld [vmem:[%s3293 + $0x34] sm:$0xf]
        %v3369 = vld [vmem:[%s3293 + $0x38] sm:$0x1]
        %v3370 = vld [vmem:[%s3293 + $0x40] sm:$0xf]
        %v3371 = vld [vmem:[%s3293 + $0x44] sm:$0xf]
        %v3372 = vld [vmem:[%s3293 + $0x48] sm:$0x1]
        %v3373 = vld [vmem:[%s3293 + $0x50] sm:$0xf]
        %v3374 = vld [vmem:[%s3293 + $0x54] sm:$0xf]
        %v3375 = vld [vmem:[%s3293 + $0x58] sm:$0x1]
        %v3376 = vld [vmem:[%s3293 + $0x60] sm:$0xf]
        %v3377 = vld [vmem:[%s3293 + $0x64] sm:$0xf]
        %v3378 = vld [vmem:[%s3293 + $0x68] sm:$0x1]
        %v3379 = vld [vmem:[%s3293 + $0x70] sm:$0xf]
        %v3380 = vld [vmem:[%s3293 + $0x74] sm:$0xf]
        %v3381 = vld [vmem:[%s3293 + $0x78] sm:$0x1]
        %v3382 = vld [vmem:[%s3293 + $0x80] sm:$0xf]
        %v3383 = vld [vmem:[%s3293 + $0x84] sm:$0xf]
        %v3384 = vld [vmem:[%s3293 + $0x88] sm:$0x1]
        %v3385 = vld [vmem:[%s3293 + $0x90] sm:$0xf]
        %v3386 = vld [vmem:[%s3293 + $0x94] sm:$0xf]
        %v3387 = vld [vmem:[%s3293 + $0x98] sm:$0x1]
        %v3388 = vld [vmem:[%s3293 + $0xa0] sm:$0xf]
        %v3389 = vld [vmem:[%s3293 + $0xa4] sm:$0xf]
        %v3390 = vld [vmem:[%s3293 + $0xa8] sm:$0x1]
        %v3391 = vld [vmem:[%s3293 + $0xb0] sm:$0xf]
        %v3392 = vld [vmem:[%s3293 + $0xb4] sm:$0xf]
        %v3393 = vld [vmem:[%s3293 + $0xb8] sm:$0x1]
        %v3394 = vld [vmem:[%s3293 + $0xc0] sm:$0xf]
        %v3395 = vld [vmem:[%s3293 + $0xc4] sm:$0xf]
        %v3396 = vld [vmem:[%s3293 + $0xc8] sm:$0x1]
        %v3397 = vld [vmem:[%s3293 + $0xd0] sm:$0xf]
        %v3398 = vld [vmem:[%s3293 + $0xd4] sm:$0xf]
        %v3399 = vld [vmem:[%s3293 + $0xd8] sm:$0x1]
        %v3400 = vld [vmem:[%s3293 + $0xe0] sm:$0xf]
        %v3401 = vld [vmem:[%s3293 + $0xe4] sm:$0xf]
        %v3402 = vld [vmem:[%s3293 + $0xe8] sm:$0x1]
        %v3403 = vld [vmem:[%s3293 + $0xf0] sm:$0xf]
        %v3404 = vld [vmem:[%s3293 + $0xf4] sm:$0xf]
        %v3405 = vld [vmem:[%s3293 + $0xf8] sm:$0x1]
        %v3407 = vshrl.u32 %v3358, 16
        %v3409 = vrot.slane %v3407, 4
        %v3410 = vshll.u32 %v3358, 16
        %v3412 = vrot.slane %v3410, 5
        %v3413 = vor.u32 %v3409, %v3412
        %v3414 = vrot.slane %v3413, 4
        %v3416 = vshll.u32 %v3359, 16
        %v3418 = vrot.slane %v3416, 5
        %v3419 = vsel %vm1737, %v3414, %v3418
        %v3420 = vshrl.u32 %v3359, 16
        %v3422 = vrot.slane %v3420, 4
        %v3423 = vor.u32 %v3422, %v3418
        %v3424 = vrot.slane %v3423, 4
        %v3426 = vshll.u32 %v3360, 16
        %v3428 = vrot.slane %v3426, 5
        %v3429 = vsel %vm1737, %v3424, %v3428
        %v3431 = vshrl.u32 %v3361, 16
        %v3433 = vrot.slane %v3431, 4
        %v3434 = vshll.u32 %v3361, 16
        %v3436 = vrot.slane %v3434, 5
        %v3437 = vor.u32 %v3433, %v3436
        %v3438 = vrot.slane %v3437, 4
        %v3440 = vshll.u32 %v3362, 16
        %v3442 = vrot.slane %v3440, 5
        %v3443 = vsel %vm1737, %v3438, %v3442
        %v3444 = vshrl.u32 %v3362, 16
        %v3446 = vrot.slane %v3444, 4
        %v3447 = vor.u32 %v3446, %v3442
        %v3448 = vrot.slane %v3447, 4
        %v3450 = vshll.u32 %v3363, 16
        %v3452 = vrot.slane %v3450, 5
        %v3453 = vsel %vm1737, %v3448, %v3452
        %v3455 = vshrl.u32 %v3364, 16
        %v3457 = vrot.slane %v3455, 4
        %v3458 = vshll.u32 %v3364, 16
        %v3460 = vrot.slane %v3458, 5
        %v3461 = vor.u32 %v3457, %v3460
        %v3462 = vrot.slane %v3461, 4
        %v3464 = vshll.u32 %v3365, 16
        %v3466 = vrot.slane %v3464, 5
        %v3467 = vsel %vm1737, %v3462, %v3466
        %v3468 = vshrl.u32 %v3365, 16
        %v3470 = vrot.slane %v3468, 4
        %v3471 = vor.u32 %v3470, %v3466
        %v3472 = vrot.slane %v3471, 4
        %v3474 = vshll.u32 %v3366, 16
        %v3476 = vrot.slane %v3474, 5
        %v3477 = vsel %vm1737, %v3472, %v3476
        %v3479 = vshrl.u32 %v3367, 16
        %v3481 = vrot.slane %v3479, 4
        %v3482 = vshll.u32 %v3367, 16
        %v3484 = vrot.slane %v3482, 5
        %v3485 = vor.u32 %v3481, %v3484
        %v3486 = vrot.slane %v3485, 4
        %v3488 = vshll.u32 %v3368, 16
        %v3490 = vrot.slane %v3488, 5
        %v3491 = vsel %vm1737, %v3486, %v3490
        %v3492 = vshrl.u32 %v3368, 16
        %v3494 = vrot.slane %v3492, 4
        %v3495 = vor.u32 %v3494, %v3490
        %v3496 = vrot.slane %v3495, 4
        %v3498 = vshll.u32 %v3369, 16
        %v3500 = vrot.slane %v3498, 5
        %v3501 = vsel %vm1737, %v3496, %v3500
        %v3503 = vshrl.u32 %v3370, 16
        %v3505 = vrot.slane %v3503, 4
        %v3506 = vshll.u32 %v3370, 16
        %v3508 = vrot.slane %v3506, 5
        %v3509 = vor.u32 %v3505, %v3508
        %v3510 = vrot.slane %v3509, 4
        %v3512 = vshll.u32 %v3371, 16
        %v3514 = vrot.slane %v3512, 5
        %v3515 = vsel %vm1737, %v3510, %v3514
        %v3516 = vshrl.u32 %v3371, 16
        %v3518 = vrot.slane %v3516, 4
        %v3519 = vor.u32 %v3518, %v3514
        %v3520 = vrot.slane %v3519, 4
        %v3522 = vshll.u32 %v3372, 16
        %v3524 = vrot.slane %v3522, 5
        %v3525 = vsel %vm1737, %v3520, %v3524
        %v3527 = vshrl.u32 %v3373, 16
        %v3529 = vrot.slane %v3527, 4
        %v3530 = vshll.u32 %v3373, 16
        %v3532 = vrot.slane %v3530, 5
        %v3533 = vor.u32 %v3529, %v3532
        %v3534 = vrot.slane %v3533, 4
        %v3536 = vshll.u32 %v3374, 16
        %v3538 = vrot.slane %v3536, 5
        %v3539 = vsel %vm1737, %v3534, %v3538
        %v3540 = vshrl.u32 %v3374, 16
        %v3542 = vrot.slane %v3540, 4
        %v3543 = vor.u32 %v3542, %v3538
        %v3544 = vrot.slane %v3543, 4
        %v3546 = vshll.u32 %v3375, 16
        %v3548 = vrot.slane %v3546, 5
        %v3549 = vsel %vm1737, %v3544, %v3548
        %v3551 = vshrl.u32 %v3376, 16
        %v3553 = vrot.slane %v3551, 4
        %v3554 = vshll.u32 %v3376, 16
        %v3556 = vrot.slane %v3554, 5
        %v3557 = vor.u32 %v3553, %v3556
        %v3558 = vrot.slane %v3557, 4
        %v3560 = vshll.u32 %v3377, 16
        %v3562 = vrot.slane %v3560, 5
        %v3563 = vsel %vm1737, %v3558, %v3562
        %v3564 = vshrl.u32 %v3377, 16
        %v3566 = vrot.slane %v3564, 4
        %v3567 = vor.u32 %v3566, %v3562
        %v3568 = vrot.slane %v3567, 4
        %v3570 = vshll.u32 %v3378, 16
        %v3572 = vrot.slane %v3570, 5
        %v3573 = vsel %vm1737, %v3568, %v3572
        %v3575 = vshrl.u32 %v3379, 16
        %v3577 = vrot.slane %v3575, 4
        %v3578 = vshll.u32 %v3379, 16
        %v3580 = vrot.slane %v3578, 5
        %v3581 = vor.u32 %v3577, %v3580
        %v3582 = vrot.slane %v3581, 4
        %v3584 = vshll.u32 %v3380, 16
        %v3586 = vrot.slane %v3584, 5
        %v3587 = vsel %vm1737, %v3582, %v3586
        %v3588 = vshrl.u32 %v3380, 16
        %v3590 = vrot.slane %v3588, 4
        %v3591 = vor.u32 %v3590, %v3586
        %v3592 = vrot.slane %v3591, 4
        %v3594 = vshll.u32 %v3381, 16
        %v3596 = vrot.slane %v3594, 5
        %v3597 = vsel %vm1737, %v3592, %v3596
        %v3599 = vshrl.u32 %v3382, 16
        %v3601 = vrot.slane %v3599, 4
        %v3602 = vshll.u32 %v3382, 16
        %v3604 = vrot.slane %v3602, 5
        %v3605 = vor.u32 %v3601, %v3604
        %v3606 = vrot.slane %v3605, 4
        %v3608 = vshll.u32 %v3383, 16
        %v3610 = vrot.slane %v3608, 5
        %v3611 = vsel %vm1737, %v3606, %v3610
        %v3612 = vshrl.u32 %v3383, 16
        %v3614 = vrot.slane %v3612, 4
        %v3615 = vor.u32 %v3614, %v3610
        %v3616 = vrot.slane %v3615, 4
        %v3618 = vshll.u32 %v3384, 16
        %v3620 = vrot.slane %v3618, 5
        %v3621 = vsel %vm1737, %v3616, %v3620
        %v3623 = vshrl.u32 %v3385, 16
        %v3625 = vrot.slane %v3623, 4
        %v3626 = vshll.u32 %v3385, 16
        %v3628 = vrot.slane %v3626, 5
        %v3629 = vor.u32 %v3625, %v3628
        %v3630 = vrot.slane %v3629, 4
        %v3632 = vshll.u32 %v3386, 16
        %v3634 = vrot.slane %v3632, 5
        %v3635 = vsel %vm1737, %v3630, %v3634
        %v3636 = vshrl.u32 %v3386, 16
        %v3638 = vrot.slane %v3636, 4
        %v3639 = vor.u32 %v3638, %v3634
        %v3640 = vrot.slane %v3639, 4
        %v3642 = vshll.u32 %v3387, 16
        %v3644 = vrot.slane %v3642, 5
        %v3645 = vsel %vm1737, %v3640, %v3644
        %v3647 = vshrl.u32 %v3388, 16
        %v3649 = vrot.slane %v3647, 4
        %v3650 = vshll.u32 %v3388, 16
        %v3652 = vrot.slane %v3650, 5
        %v3653 = vor.u32 %v3649, %v3652
        %v3654 = vrot.slane %v3653, 4
        %v3656 = vshll.u32 %v3389, 16
        %v3658 = vrot.slane %v3656, 5
        %v3659 = vsel %vm1737, %v3654, %v3658
        %v3660 = vshrl.u32 %v3389, 16
        %v3662 = vrot.slane %v3660, 4
        %v3663 = vor.u32 %v3662, %v3658
        %v3664 = vrot.slane %v3663, 4
        %v3666 = vshll.u32 %v3390, 16
        %v3668 = vrot.slane %v3666, 5
        %v3669 = vsel %vm1737, %v3664, %v3668
        %v3671 = vshrl.u32 %v3391, 16
        %v3673 = vrot.slane %v3671, 4
        %v3674 = vshll.u32 %v3391, 16
        %v3676 = vrot.slane %v3674, 5
        %v3677 = vor.u32 %v3673, %v3676
        %v3678 = vrot.slane %v3677, 4
        %v3680 = vshll.u32 %v3392, 16
        %v3682 = vrot.slane %v3680, 5
        %v3683 = vsel %vm1737, %v3678, %v3682
        %v3684 = vshrl.u32 %v3392, 16
        %v3686 = vrot.slane %v3684, 4
        %v3687 = vor.u32 %v3686, %v3682
        %v3688 = vrot.slane %v3687, 4
        %v3690 = vshll.u32 %v3393, 16
        %v3692 = vrot.slane %v3690, 5
        %v3693 = vsel %vm1737, %v3688, %v3692
        %v3695 = vshrl.u32 %v3394, 16
        %v3697 = vrot.slane %v3695, 4
        %v3698 = vshll.u32 %v3394, 16
        %v3700 = vrot.slane %v3698, 5
        %v3701 = vor.u32 %v3697, %v3700
        %v3702 = vrot.slane %v3701, 4
        %v3704 = vshll.u32 %v3395, 16
        %v3706 = vrot.slane %v3704, 5
        %v3707 = vsel %vm1737, %v3702, %v3706
        %v3708 = vshrl.u32 %v3395, 16
        %v3710 = vrot.slane %v3708, 4
        %v3711 = vor.u32 %v3710, %v3706
        %v3712 = vrot.slane %v3711, 4
        %v3714 = vshll.u32 %v3396, 16
        %v3716 = vrot.slane %v3714, 5
        %v3717 = vsel %vm1737, %v3712, %v3716
        %v3719 = vshrl.u32 %v3397, 16
        %v3721 = vrot.slane %v3719, 4
        %v3722 = vshll.u32 %v3397, 16
        %v3724 = vrot.slane %v3722, 5
        %v3725 = vor.u32 %v3721, %v3724
        %v3726 = vrot.slane %v3725, 4
        %v3728 = vshll.u32 %v3398, 16
        %v3730 = vrot.slane %v3728, 5
        %v3731 = vsel %vm1737, %v3726, %v3730
        %v3732 = vshrl.u32 %v3398, 16
        %v3734 = vrot.slane %v3732, 4
        %v3735 = vor.u32 %v3734, %v3730
        %v3736 = vrot.slane %v3735, 4
        %v3738 = vshll.u32 %v3399, 16
        %v3740 = vrot.slane %v3738, 5
        %v3741 = vsel %vm1737, %v3736, %v3740
        %v3743 = vshrl.u32 %v3400, 16
        %v3745 = vrot.slane %v3743, 4
        %v3746 = vshll.u32 %v3400, 16
        %v3748 = vrot.slane %v3746, 5
        %v3749 = vor.u32 %v3745, %v3748
        %v3750 = vrot.slane %v3749, 4
        %v3752 = vshll.u32 %v3401, 16
        %v3754 = vrot.slane %v3752, 5
        %v3755 = vsel %vm1737, %v3750, %v3754
        %v3756 = vshrl.u32 %v3401, 16
        %v3758 = vrot.slane %v3756, 4
        %v3759 = vor.u32 %v3758, %v3754
        %v3760 = vrot.slane %v3759, 4
        %v3762 = vshll.u32 %v3402, 16
        %v3764 = vrot.slane %v3762, 5
        %v3765 = vsel %vm1737, %v3760, %v3764
        %v3767 = vshrl.u32 %v3403, 16
        %v3769 = vrot.slane %v3767, 4
        %v3770 = vshll.u32 %v3403, 16
        %v3772 = vrot.slane %v3770, 5
        %v3773 = vor.u32 %v3769, %v3772
        %v3774 = vrot.slane %v3773, 4
        %v3776 = vshll.u32 %v3404, 16
        %v3778 = vrot.slane %v3776, 5
        %v3779 = vsel %vm1737, %v3774, %v3778
        %v3780 = vshrl.u32 %v3404, 16
        %v3782 = vrot.slane %v3780, 4
        %v3783 = vor.u32 %v3782, %v3778
        %v3784 = vrot.slane %v3783, 4
        %v3786 = vshll.u32 %v3405, 16
        %v3788 = vrot.slane %v3786, 5
        %v3789 = vsel %vm1737, %v3784, %v3788
        %3822 = vst [vmem:[#allocation3 + $0x1c] sm:$0xf] %v3419
        %3823 = vst [vmem:[#allocation3 + $0x40] sm:$0xf] %v3429
        %3824 = vst [vmem:[#allocation3 + $0x64] sm:$0xf] %v3443
        %3825 = vst [vmem:[#allocation3 + $0x88] sm:$0xf] %v3453
        %3826 = vst [vmem:[#allocation3 + $0xac] sm:$0xf] %v3467
        %3827 = vst [vmem:[#allocation3 + $0xd0] sm:$0xf] %v3477
        %3828 = vst [vmem:[#allocation3 + $0xf4] sm:$0xf] %v3491
        %3829 = vst [vmem:[#allocation3 + $0x118] sm:$0xf] %v3501
        %3830 = vst [vmem:[#allocation3 + $0x13c] sm:$0xf] %v3515
        %3831 = vst [vmem:[#allocation3 + $0x160] sm:$0xf] %v3525
        %3832 = vst [vmem:[#allocation3 + $0x184] sm:$0xf] %v3539
        %3833 = vst [vmem:[#allocation3 + $0x1a8] sm:$0xf] %v3549
        %3834 = vst [vmem:[#allocation3 + $0x1cc] sm:$0xf] %v3563
        %3835 = vst [vmem:[#allocation3 + $0x1f0] sm:$0xf] %v3573
        %3836 = vst [vmem:[#allocation3 + $0x214] sm:$0xf] %v3587
        %3837 = vst [vmem:[#allocation3 + $0x238] sm:$0xf] %v3597
        %3838 = vst [vmem:[#allocation3 + $0x25c] sm:$0xf] %v3611
        %3839 = vst [vmem:[#allocation3 + $0x280] sm:$0xf] %v3621
        %3840 = vst [vmem:[#allocation3 + $0x2a4] sm:$0xf] %v3635
        %3841 = vst [vmem:[#allocation3 + $0x2c8] sm:$0xf] %v3645
        %3842 = vst [vmem:[#allocation3 + $0x2ec] sm:$0xf] %v3659
        %3843 = vst [vmem:[#allocation3 + $0x310] sm:$0xf] %v3669
        %3844 = vst [vmem:[#allocation3 + $0x334] sm:$0xf] %v3683
        %3845 = vst [vmem:[#allocation3 + $0x358] sm:$0xf] %v3693
        %3846 = vst [vmem:[#allocation3 + $0x37c] sm:$0xf] %v3707
        %3847 = vst [vmem:[#allocation3 + $0x3a0] sm:$0xf] %v3717
        %3848 = vst [vmem:[#allocation3 + $0x3c4] sm:$0xf] %v3731
        %3849 = vst [vmem:[#allocation3 + $0x3e8] sm:$0xf] %v3741
        %3850 = vst [vmem:[#allocation3 + $0x40c] sm:$0xf] %v3755
        %3851 = vst [vmem:[#allocation3 + $0x430] sm:$0xf] %v3765
        %3852 = vst [vmem:[#allocation3 + $0x454] sm:$0xf] %v3779
        %3853 = vst [vmem:[#allocation3 + $0x478] sm:$0xf] %v3789
        %v3854 = vld [vmem:[%s3293] sm:$0xe]
        %v3855 = vld [vmem:[%s3293 + $0x4] sm:$0xf]
        %v3856 = vld [vmem:[%s3293 + $0x8] sm:$0x1]
        %v3857 = vld [vmem:[%s3293 + $0x10] sm:$0xe]
        %v3858 = vld [vmem:[%s3293 + $0x14] sm:$0xf]
        %v3859 = vld [vmem:[%s3293 + $0x18] sm:$0x1]
        %v3860 = vld [vmem:[%s3293 + $0x20] sm:$0xe]
        %v3861 = vld [vmem:[%s3293 + $0x24] sm:$0xf]
        %v3862 = vld [vmem:[%s3293 + $0x28] sm:$0x1]
        %v3863 = vld [vmem:[%s3293 + $0x30] sm:$0xe]
        %v3864 = vld [vmem:[%s3293 + $0x34] sm:$0xf]
        %v3865 = vld [vmem:[%s3293 + $0x38] sm:$0x1]
        %v3866 = vld [vmem:[%s3293 + $0x40] sm:$0xe]
        %v3867 = vld [vmem:[%s3293 + $0x44] sm:$0xf]
        %v3868 = vld [vmem:[%s3293 + $0x48] sm:$0x1]
        %v3869 = vld [vmem:[%s3293 + $0x50] sm:$0xe]
        %v3870 = vld [vmem:[%s3293 + $0x54] sm:$0xf]
        %v3871 = vld [vmem:[%s3293 + $0x58] sm:$0x1]
        %v3872 = vld [vmem:[%s3293 + $0x60] sm:$0xe]
        %v3873 = vld [vmem:[%s3293 + $0x64] sm:$0xf]
        %v3874 = vld [vmem:[%s3293 + $0x68] sm:$0x1]
        %v3875 = vld [vmem:[%s3293 + $0x70] sm:$0xe]
        %v3876 = vld [vmem:[%s3293 + $0x74] sm:$0xf]
        %v3877 = vld [vmem:[%s3293 + $0x78] sm:$0x1]
        %v3878 = vld [vmem:[%s3293 + $0x80] sm:$0xe]
        %v3879 = vld [vmem:[%s3293 + $0x84] sm:$0xf]
        %v3880 = vld [vmem:[%s3293 + $0x88] sm:$0x1]
        %v3881 = vld [vmem:[%s3293 + $0x90] sm:$0xe]
        %v3882 = vld [vmem:[%s3293 + $0x94] sm:$0xf]
        %v3883 = vld [vmem:[%s3293 + $0x98] sm:$0x1]
        %v3884 = vld [vmem:[%s3293 + $0xa0] sm:$0xe]
        %v3885 = vld [vmem:[%s3293 + $0xa4] sm:$0xf]
        %v3886 = vld [vmem:[%s3293 + $0xa8] sm:$0x1]
        %v3887 = vld [vmem:[%s3293 + $0xb0] sm:$0xe]
        %v3888 = vld [vmem:[%s3293 + $0xb4] sm:$0xf]
        %v3889 = vld [vmem:[%s3293 + $0xb8] sm:$0x1]
        %v3890 = vld [vmem:[%s3293 + $0xc0] sm:$0xe]
        %v3891 = vld [vmem:[%s3293 + $0xc4] sm:$0xf]
        %v3892 = vld [vmem:[%s3293 + $0xc8] sm:$0x1]
        %v3893 = vld [vmem:[%s3293 + $0xd0] sm:$0xe]
        %v3894 = vld [vmem:[%s3293 + $0xd4] sm:$0xf]
        %v3895 = vld [vmem:[%s3293 + $0xd8] sm:$0x1]
        %v3896 = vld [vmem:[%s3293 + $0xe0] sm:$0xe]
        %v3897 = vld [vmem:[%s3293 + $0xe4] sm:$0xf]
        %v3898 = vld [vmem:[%s3293 + $0xe8] sm:$0x1]
        %v3899 = vld [vmem:[%s3293 + $0xf0] sm:$0xe]
        %v3900 = vld [vmem:[%s3293 + $0xf4] sm:$0xf]
        %v3901 = vld [vmem:[%s3293 + $0xf8] sm:$0x1]
        %v3950 = vrot.slane %v3854, 5
        %v3951 = vrot.slane %v3950, 4
        %v3952 = vrot.slane %v3855, 5
        %v3953 = vsel %vm2284, %v3951, %v3952
        %v3954 = vrot.slane %v3952, 4
        %v3955 = vrot.slane %v3856, 5
        %v3956 = vsel %vm2284, %v3954, %v3955
        %v3957 = vrot.slane %v3857, 5
        %v3958 = vrot.slane %v3957, 4
        %v3959 = vrot.slane %v3858, 5
        %v3960 = vsel %vm2284, %v3958, %v3959
        %v3961 = vrot.slane %v3959, 4
        %v3962 = vrot.slane %v3859, 5
        %v3963 = vsel %vm2284, %v3961, %v3962
        %v3964 = vrot.slane %v3860, 5
        %v3965 = vrot.slane %v3964, 4
        %v3966 = vrot.slane %v3861, 5
        %v3967 = vsel %vm2284, %v3965, %v3966
        %v3968 = vrot.slane %v3966, 4
        %v3969 = vrot.slane %v3862, 5
        %v3970 = vsel %vm2284, %v3968, %v3969
        %v3971 = vrot.slane %v3863, 5
        %v3972 = vrot.slane %v3971, 4
        %v3973 = vrot.slane %v3864, 5
        %v3974 = vsel %vm2284, %v3972, %v3973
        %v3975 = vrot.slane %v3973, 4
        %v3976 = vrot.slane %v3865, 5
        %v3977 = vsel %vm2284, %v3975, %v3976
        %v3978 = vrot.slane %v3866, 5
        %v3979 = vrot.slane %v3978, 4
        %v3980 = vrot.slane %v3867, 5
        %v3981 = vsel %vm2284, %v3979, %v3980
        %v3982 = vrot.slane %v3980, 4
        %v3983 = vrot.slane %v3868, 5
        %v3984 = vsel %vm2284, %v3982, %v3983
        %v3985 = vrot.slane %v3869, 5
        %v3986 = vrot.slane %v3985, 4
        %v3987 = vrot.slane %v3870, 5
        %v3988 = vsel %vm2284, %v3986, %v3987
        %v3989 = vrot.slane %v3987, 4
        %v3990 = vrot.slane %v3871, 5
        %v3991 = vsel %vm2284, %v3989, %v3990
        %v3992 = vrot.slane %v3872, 5
        %v3993 = vrot.slane %v3992, 4
        %v3994 = vrot.slane %v3873, 5
        %v3995 = vsel %vm2284, %v3993, %v3994
        %v3996 = vrot.slane %v3994, 4
        %v3997 = vrot.slane %v3874, 5
        %v3998 = vsel %vm2284, %v3996, %v3997
        %v3999 = vrot.slane %v3875, 5
        %v4000 = vrot.slane %v3999, 4
        %v4001 = vrot.slane %v3876, 5
        %v4002 = vsel %vm2284, %v4000, %v4001
        %v4003 = vrot.slane %v4001, 4
        %v4004 = vrot.slane %v3877, 5
        %v4005 = vsel %vm2284, %v4003, %v4004
        %v4006 = vrot.slane %v3878, 5
        %v4007 = vrot.slane %v4006, 4
        %v4008 = vrot.slane %v3879, 5
        %v4009 = vsel %vm2284, %v4007, %v4008
        %v4010 = vrot.slane %v4008, 4
        %v4011 = vrot.slane %v3880, 5
        %v4012 = vsel %vm2284, %v4010, %v4011
        %v4013 = vrot.slane %v3881, 5
        %v4014 = vrot.slane %v4013, 4
        %v4015 = vrot.slane %v3882, 5
        %v4016 = vsel %vm2284, %v4014, %v4015
        %v4017 = vrot.slane %v4015, 4
        %v4018 = vrot.slane %v3883, 5
        %v4019 = vsel %vm2284, %v4017, %v4018
        %v4020 = vrot.slane %v3884, 5
        %v4021 = vrot.slane %v4020, 4
        %v4022 = vrot.slane %v3885, 5
        %v4023 = vsel %vm2284, %v4021, %v4022
        %v4024 = vrot.slane %v4022, 4
        %v4025 = vrot.slane %v3886, 5
        %v4026 = vsel %vm2284, %v4024, %v4025
        %v4027 = vrot.slane %v3887, 5
        %v4028 = vrot.slane %v4027, 4
        %v4029 = vrot.slane %v3888, 5
        %v4030 = vsel %vm2284, %v4028, %v4029
        %v4031 = vrot.slane %v4029, 4
        %v4032 = vrot.slane %v3889, 5
        %v4033 = vsel %vm2284, %v4031, %v4032
        %v4034 = vrot.slane %v3890, 5
        %v4035 = vrot.slane %v4034, 4
        %v4036 = vrot.slane %v3891, 5
        %v4037 = vsel %vm2284, %v4035, %v4036
        %v4038 = vrot.slane %v4036, 4
        %v4039 = vrot.slane %v3892, 5
        %v4040 = vsel %vm2284, %v4038, %v4039
        %v4041 = vrot.slane %v3893, 5
        %v4042 = vrot.slane %v4041, 4
        %v4043 = vrot.slane %v3894, 5
        %v4044 = vsel %vm2284, %v4042, %v4043
        %v4045 = vrot.slane %v4043, 4
        %v4046 = vrot.slane %v3895, 5
        %v4047 = vsel %vm2284, %v4045, %v4046
        %v4048 = vrot.slane %v3896, 5
        %v4049 = vrot.slane %v4048, 4
        %v4050 = vrot.slane %v3897, 5
        %v4051 = vsel %vm2284, %v4049, %v4050
        %v4052 = vrot.slane %v4050, 4
        %v4053 = vrot.slane %v3898, 5
        %v4054 = vsel %vm2284, %v4052, %v4053
        %v4055 = vrot.slane %v3899, 5
        %v4056 = vrot.slane %v4055, 4
        %v4057 = vrot.slane %v3900, 5
        %v4058 = vsel %vm2284, %v4056, %v4057
        %v4059 = vrot.slane %v4057, 4
        %v4060 = vrot.slane %v3901, 5
        %v4061 = vsel %vm2284, %v4059, %v4060
        %4094 = vst [vmem:[#allocation3 + $0x20] sm:$0xf] %v3953
        %4095 = vst [vmem:[#allocation3 + $0x44] sm:$0xf] %v3956
        %4096 = vst [vmem:[#allocation3 + $0x68] sm:$0xf] %v3960
        %4097 = vst [vmem:[#allocation3 + $0x8c] sm:$0xf] %v3963
        %4098 = vst [vmem:[#allocation3 + $0xb0] sm:$0xf] %v3967
        %4099 = vst [vmem:[#allocation3 + $0xd4] sm:$0xf] %v3970
        %4100 = vst [vmem:[#allocation3 + $0xf8] sm:$0xf] %v3974
        %4101 = vst [vmem:[#allocation3 + $0x11c] sm:$0xf] %v3977
        %4102 = vst [vmem:[#allocation3 + $0x140] sm:$0xf] %v3981
        %4103 = vst [vmem:[#allocation3 + $0x164] sm:$0xf] %v3984
        %4104 = vst [vmem:[#allocation3 + $0x188] sm:$0xf] %v3988
        %4105 = vst [vmem:[#allocation3 + $0x1ac] sm:$0xf] %v3991
        %4106 = vst [vmem:[#allocation3 + $0x1d0] sm:$0xf] %v3995
        %4107 = vst [vmem:[#allocation3 + $0x1f4] sm:$0xf] %v3998
        %4108 = vst [vmem:[#allocation3 + $0x218] sm:$0xf] %v4002
        %4109 = vst [vmem:[#allocation3 + $0x23c] sm:$0xf] %v4005
        %4110 = vst [vmem:[#allocation3 + $0x260] sm:$0xf] %v4009
        %4111 = vst [vmem:[#allocation3 + $0x284] sm:$0xf] %v4012
        %4112 = vst [vmem:[#allocation3 + $0x2a8] sm:$0xf] %v4016
        %4113 = vst [vmem:[#allocation3 + $0x2cc] sm:$0xf] %v4019
        %4114 = vst [vmem:[#allocation3 + $0x2f0] sm:$0xf] %v4023
        %4115 = vst [vmem:[#allocation3 + $0x314] sm:$0xf] %v4026
        %4116 = vst [vmem:[#allocation3 + $0x338] sm:$0xf] %v4030
        %4117 = vst [vmem:[#allocation3 + $0x35c] sm:$0xf] %v4033
        %4118 = vst [vmem:[#allocation3 + $0x380] sm:$0xf] %v4037
        %4119 = vst [vmem:[#allocation3 + $0x3a4] sm:$0xf] %v4040
        %4120 = vst [vmem:[#allocation3 + $0x3c8] sm:$0xf] %v4044
        %4121 = vst [vmem:[#allocation3 + $0x3ec] sm:$0xf] %v4047
        %4122 = vst [vmem:[#allocation3 + $0x410] sm:$0xf] %v4051
        %4123 = vst [vmem:[#allocation3 + $0x434] sm:$0xf] %v4054
        %4124 = vst [vmem:[#allocation3 + $0x458] sm:$0xf] %v4058
        %4125 = vst [vmem:[#allocation3 + $0x47c] sm:$0xf] %v4061
        %v4126 = vld [vmem:[#allocation3] sm:$0xff]
        %v4127 = vld [vmem:[#allocation3 + $0x8] sm:$0xff]
        %v4128 = vld [vmem:[#allocation3 + $0x10] sm:$0xff]
        %v4129 = vld [vmem:[#allocation3 + $0x18] sm:$0xff]
        %v4130 = vld [vmem:[#allocation3 + $0x20] sm:$0xf]
        %v4131 = vld [vmem:[#allocation3 + $0x24] sm:$0xff]
        %v4132 = vld [vmem:[#allocation3 + $0x2c] sm:$0xff]
        %v4133 = vld [vmem:[#allocation3 + $0x34] sm:$0xff]
        %v4134 = vld [vmem:[#allocation3 + $0x3c] sm:$0xff]
        %v4135 = vld [vmem:[#allocation3 + $0x44] sm:$0xf]
        %v4136 = vld [vmem:[#allocation3 + $0x48] sm:$0xff]
        %v4137 = vld [vmem:[#allocation3 + $0x50] sm:$0xff]
        %v4138 = vld [vmem:[#allocation3 + $0x58] sm:$0xff]
        %v4139 = vld [vmem:[#allocation3 + $0x60] sm:$0xff]
        %v4140 = vld [vmem:[#allocation3 + $0x68] sm:$0xf]
        %v4141 = vld [vmem:[#allocation3 + $0x6c] sm:$0xff]
        %v4142 = vld [vmem:[#allocation3 + $0x74] sm:$0xff]
        %v4143 = vld [vmem:[#allocation3 + $0x7c] sm:$0xff]
        %v4144 = vld [vmem:[#allocation3 + $0x84] sm:$0xff]
        %v4145 = vld [vmem:[#allocation3 + $0x8c] sm:$0xf]
        %v4146 = vld [vmem:[#allocation3 + $0x90] sm:$0xff]
        %v4147 = vld [vmem:[#allocation3 + $0x98] sm:$0xff]
        %v4148 = vld [vmem:[#allocation3 + $0xa0] sm:$0xff]
        %v4149 = vld [vmem:[#allocation3 + $0xa8] sm:$0xff]
        %v4150 = vld [vmem:[#allocation3 + $0xb0] sm:$0xf]
        %v4151 = vld [vmem:[#allocation3 + $0xb4] sm:$0xff]
        %v4152 = vld [vmem:[#allocation3 + $0xbc] sm:$0xff]
        %v4153 = vld [vmem:[#allocation3 + $0xc4] sm:$0xff]
        %v4154 = vld [vmem:[#allocation3 + $0xcc] sm:$0xff]
        %v4155 = vld [vmem:[#allocation3 + $0xd4] sm:$0xf]
        %v4156 = vld [vmem:[#allocation3 + $0xd8] sm:$0xff]
        %v4157 = vld [vmem:[#allocation3 + $0xe0] sm:$0xff]
        %v4158 = vld [vmem:[#allocation3 + $0xe8] sm:$0xff]
        %v4159 = vld [vmem:[#allocation3 + $0xf0] sm:$0xff]
        %v4160 = vld [vmem:[#allocation3 + $0xf8] sm:$0xf]
        %v4161 = vld [vmem:[#allocation3 + $0xfc] sm:$0xff]
        %v4162 = vld [vmem:[#allocation3 + $0x104] sm:$0xff]
        %v4163 = vld [vmem:[#allocation3 + $0x10c] sm:$0xff]
        %v4164 = vld [vmem:[#allocation3 + $0x114] sm:$0xff]
        %v4165 = vld [vmem:[#allocation3 + $0x11c] sm:$0xf]
        %v4166 = vld [vmem:[#allocation3 + $0x120] sm:$0xff]
        %v4167 = vld [vmem:[#allocation3 + $0x128] sm:$0xff]
        %v4168 = vld [vmem:[#allocation3 + $0x130] sm:$0xff]
        %v4169 = vld [vmem:[#allocation3 + $0x138] sm:$0xff]
        %v4170 = vld [vmem:[#allocation3 + $0x140] sm:$0xf]
        %v4171 = vld [vmem:[#allocation3 + $0x144] sm:$0xff]
        %v4172 = vld [vmem:[#allocation3 + $0x14c] sm:$0xff]
        %v4173 = vld [vmem:[#allocation3 + $0x154] sm:$0xff]
        %v4174 = vld [vmem:[#allocation3 + $0x15c] sm:$0xff]
        %v4175 = vld [vmem:[#allocation3 + $0x164] sm:$0xf]
        %v4176 = vld [vmem:[#allocation3 + $0x168] sm:$0xff]
        %v4177 = vld [vmem:[#allocation3 + $0x170] sm:$0xff]
        %v4178 = vld [vmem:[#allocation3 + $0x178] sm:$0xff]
        %v4179 = vld [vmem:[#allocation3 + $0x180] sm:$0xff]
        %v4180 = vld [vmem:[#allocation3 + $0x188] sm:$0xf]
        %v4181 = vld [vmem:[#allocation3 + $0x18c] sm:$0xff]
        %v4182 = vld [vmem:[#allocation3 + $0x194] sm:$0xff]
        %v4183 = vld [vmem:[#allocation3 + $0x19c] sm:$0xff]
        %v4184 = vld [vmem:[#allocation3 + $0x1a4] sm:$0xff]
        %v4185 = vld [vmem:[#allocation3 + $0x1ac] sm:$0xf]
        %v4186 = vld [vmem:[#allocation3 + $0x1b0] sm:$0xff]
        %v4187 = vld [vmem:[#allocation3 + $0x1b8] sm:$0xff]
        %v4188 = vld [vmem:[#allocation3 + $0x1c0] sm:$0xff]
        %v4189 = vld [vmem:[#allocation3 + $0x1c8] sm:$0xff]
        %v4190 = vld [vmem:[#allocation3 + $0x1d0] sm:$0xf]
        %v4191 = vld [vmem:[#allocation3 + $0x1d4] sm:$0xff]
        %v4192 = vld [vmem:[#allocation3 + $0x1dc] sm:$0xff]
        %v4193 = vld [vmem:[#allocation3 + $0x1e4] sm:$0xff]
        %v4194 = vld [vmem:[#allocation3 + $0x1ec] sm:$0xff]
        %v4195 = vld [vmem:[#allocation3 + $0x1f4] sm:$0xf]
        %v4196 = vld [vmem:[#allocation3 + $0x1f8] sm:$0xff]
        %v4197 = vld [vmem:[#allocation3 + $0x200] sm:$0xff]
        %v4198 = vld [vmem:[#allocation3 + $0x208] sm:$0xff]
        %v4199 = vld [vmem:[#allocation3 + $0x210] sm:$0xff]
        %v4200 = vld [vmem:[#allocation3 + $0x218] sm:$0xf]
        %v4201 = vld [vmem:[#allocation3 + $0x21c] sm:$0xff]
        %v4202 = vld [vmem:[#allocation3 + $0x224] sm:$0xff]
        %v4203 = vld [vmem:[#allocation3 + $0x22c] sm:$0xff]
        %v4204 = vld [vmem:[#allocation3 + $0x234] sm:$0xff]
        %v4205 = vld [vmem:[#allocation3 + $0x23c] sm:$0xf]
        %v4206 = vld [vmem:[#allocation3 + $0x240] sm:$0xff]
        %v4207 = vld [vmem:[#allocation3 + $0x248] sm:$0xff]
        %v4208 = vld [vmem:[#allocation3 + $0x250] sm:$0xff]
        %v4209 = vld [vmem:[#allocation3 + $0x258] sm:$0xff]
        %v4210 = vld [vmem:[#allocation3 + $0x260] sm:$0xf]
        %v4211 = vld [vmem:[#allocation3 + $0x264] sm:$0xff]
        %v4212 = vld [vmem:[#allocation3 + $0x26c] sm:$0xff]
        %v4213 = vld [vmem:[#allocation3 + $0x274] sm:$0xff]
        %v4214 = vld [vmem:[#allocation3 + $0x27c] sm:$0xff]
        %v4215 = vld [vmem:[#allocation3 + $0x284] sm:$0xf]
        %v4216 = vld [vmem:[#allocation3 + $0x288] sm:$0xff]
        %v4217 = vld [vmem:[#allocation3 + $0x290] sm:$0xff]
        %v4218 = vld [vmem:[#allocation3 + $0x298] sm:$0xff]
        %v4219 = vld [vmem:[#allocation3 + $0x2a0] sm:$0xff]
        %v4220 = vld [vmem:[#allocation3 + $0x2a8] sm:$0xf]
        %v4221 = vld [vmem:[#allocation3 + $0x2ac] sm:$0xff]
        %v4222 = vld [vmem:[#allocation3 + $0x2b4] sm:$0xff]
        %v4223 = vld [vmem:[#allocation3 + $0x2bc] sm:$0xff]
        %v4224 = vld [vmem:[#allocation3 + $0x2c4] sm:$0xff]
        %v4225 = vld [vmem:[#allocation3 + $0x2cc] sm:$0xf]
        %v4226 = vld [vmem:[#allocation3 + $0x2d0] sm:$0xff]
        %v4227 = vld [vmem:[#allocation3 + $0x2d8] sm:$0xff]
        %v4228 = vld [vmem:[#allocation3 + $0x2e0] sm:$0xff]
        %v4229 = vld [vmem:[#allocation3 + $0x2e8] sm:$0xff]
        %v4230 = vld [vmem:[#allocation3 + $0x2f0] sm:$0xf]
        %v4231 = vld [vmem:[#allocation3 + $0x2f4] sm:$0xff]
        %v4232 = vld [vmem:[#allocation3 + $0x2fc] sm:$0xff]
        %v4233 = vld [vmem:[#allocation3 + $0x304] sm:$0xff]
        %v4234 = vld [vmem:[#allocation3 + $0x30c] sm:$0xff]
        %v4235 = vld [vmem:[#allocation3 + $0x314] sm:$0xf]
        %v4236 = vld [vmem:[#allocation3 + $0x318] sm:$0xff]
        %v4237 = vld [vmem:[#allocation3 + $0x320] sm:$0xff]
        %v4238 = vld [vmem:[#allocation3 + $0x328] sm:$0xff]
        %v4239 = vld [vmem:[#allocation3 + $0x330] sm:$0xff]
        %v4240 = vld [vmem:[#allocation3 + $0x338] sm:$0xf]
        %v4241 = vld [vmem:[#allocation3 + $0x33c] sm:$0xff]
        %v4242 = vld [vmem:[#allocation3 + $0x344] sm:$0xff]
        %v4243 = vld [vmem:[#allocation3 + $0x34c] sm:$0xff]
        %v4244 = vld [vmem:[#allocation3 + $0x354] sm:$0xff]
        %v4245 = vld [vmem:[#allocation3 + $0x35c] sm:$0xf]
        %v4246 = vld [vmem:[#allocation3 + $0x360] sm:$0xff]
        %v4247 = vld [vmem:[#allocation3 + $0x368] sm:$0xff]
        %v4248 = vld [vmem:[#allocation3 + $0x370] sm:$0xff]
        %v4249 = vld [vmem:[#allocation3 + $0x378] sm:$0xff]
        %v4250 = vld [vmem:[#allocation3 + $0x380] sm:$0xf]
        %v4251 = vld [vmem:[#allocation3 + $0x384] sm:$0xff]
        %v4252 = vld [vmem:[#allocation3 + $0x38c] sm:$0xff]
        %v4253 = vld [vmem:[#allocation3 + $0x394] sm:$0xff]
        %v4254 = vld [vmem:[#allocation3 + $0x39c] sm:$0xff]
        %v4255 = vld [vmem:[#allocation3 + $0x3a4] sm:$0xf]
        %v4256 = vld [vmem:[#allocation3 + $0x3a8] sm:$0xff]
        %v4257 = vld [vmem:[#allocation3 + $0x3b0] sm:$0xff]
        %v4258 = vld [vmem:[#allocation3 + $0x3b8] sm:$0xff]
        %v4259 = vld [vmem:[#allocation3 + $0x3c0] sm:$0xff]
        %v4260 = vld [vmem:[#allocation3 + $0x3c8] sm:$0xf]
        %v4261 = vld [vmem:[#allocation3 + $0x3cc] sm:$0xff]
        %v4262 = vld [vmem:[#allocation3 + $0x3d4] sm:$0xff]
        %v4263 = vld [vmem:[#allocation3 + $0x3dc] sm:$0xff]
        %v4264 = vld [vmem:[#allocation3 + $0x3e4] sm:$0xff]
        %v4265 = vld [vmem:[#allocation3 + $0x3ec] sm:$0xf]
        %v4266 = vld [vmem:[#allocation3 + $0x3f0] sm:$0xff]
        %v4267 = vld [vmem:[#allocation3 + $0x3f8] sm:$0xff]
        %v4268 = vld [vmem:[#allocation3 + $0x400] sm:$0xff]
        %v4269 = vld [vmem:[#allocation3 + $0x408] sm:$0xff]
        %v4270 = vld [vmem:[#allocation3 + $0x410] sm:$0xf]
        %v4271 = vld [vmem:[#allocation3 + $0x414] sm:$0xff]
        %v4272 = vld [vmem:[#allocation3 + $0x41c] sm:$0xff]
        %v4273 = vld [vmem:[#allocation3 + $0x424] sm:$0xff]
        %v4274 = vld [vmem:[#allocation3 + $0x42c] sm:$0xff]
        %v4275 = vld [vmem:[#allocation3 + $0x434] sm:$0xf]
        %v4276 = vld [vmem:[#allocation3 + $0x438] sm:$0xff]
        %v4277 = vld [vmem:[#allocation3 + $0x440] sm:$0xff]
        %v4278 = vld [vmem:[#allocation3 + $0x448] sm:$0xff]
        %v4279 = vld [vmem:[#allocation3 + $0x450] sm:$0xff]
        %v4280 = vld [vmem:[#allocation3 + $0x458] sm:$0xf]
        %v4281 = vld [vmem:[#allocation3 + $0x45c] sm:$0xff]
        %v4282 = vld [vmem:[#allocation3 + $0x464] sm:$0xff]
        %v4283 = vld [vmem:[#allocation3 + $0x46c] sm:$0xff]
        %v4284 = vld [vmem:[#allocation3 + $0x474] sm:$0xff]
        %v4285 = vld [vmem:[#allocation3 + $0x47c] sm:$0xf]
        %v4286 = vld [vmem:[%s6] sm:$0xf]
        %v4287 = vld [vmem:[%s6 + $0x4] sm:$0xf]
        %v4288 = vld [vmem:[%s6 + $0x8] sm:$0xf]
        %v4289 = vld [vmem:[%s6 + $0xc] sm:$0xf]
        %v4290 = vld [vmem:[%s6 + $0x10] sm:$0xf]
        %v4291 = vld [vmem:[%s6 + $0x14] sm:$0xf]
        %v4292 = vld [vmem:[%s6 + $0x18] sm:$0xf]
        %v4293 = vld [vmem:[%s6 + $0x1c] sm:$0xf]
        %v4294 = vld [vmem:[%s6 + $0x20] sm:$0xf]
        %v4295 = vld [vmem:[%s6 + $0x24] sm:$0xf]
        %v4296 = vld [vmem:[%s6 + $0x28] sm:$0xf]
        %v4297 = vld [vmem:[%s6 + $0x2c] sm:$0xf]
        %v4298 = vld [vmem:[%s6 + $0x30] sm:$0xf]
        %v4299 = vld [vmem:[%s6 + $0x34] sm:$0xf]
        %v4300 = vld [vmem:[%s6 + $0x38] sm:$0xf]
        %v4301 = vld [vmem:[%s6 + $0x3c] sm:$0xf]
        %v4302 = vld [vmem:[%s6 + $0x40] sm:$0xf]
        %v4303 = vld [vmem:[%s6 + $0x44] sm:$0xf]
        %v4304 = vld [vmem:[%s6 + $0x48] sm:$0xf]
        %v4305 = vld [vmem:[%s6 + $0x4c] sm:$0xf]
        %v4306 = vld [vmem:[%s6 + $0x50] sm:$0xf]
        %v4307 = vld [vmem:[%s6 + $0x54] sm:$0xf]
        %v4308 = vld [vmem:[%s6 + $0x58] sm:$0xf]
        %v4309 = vld [vmem:[%s6 + $0x5c] sm:$0xf]
        %v4310 = vld [vmem:[%s6 + $0x60] sm:$0xf]
        %v4311 = vld [vmem:[%s6 + $0x64] sm:$0xf]
        %v4312 = vld [vmem:[%s6 + $0x68] sm:$0xf]
        %v4313 = vld [vmem:[%s6 + $0x6c] sm:$0xf]
        %v4314 = vld [vmem:[%s6 + $0x70] sm:$0xf]
        %v4315 = vld [vmem:[%s6 + $0x74] sm:$0xf]
        %v4316 = vld [vmem:[%s6 + $0x78] sm:$0xf]
        %v4317 = vld [vmem:[%s6 + $0x7c] sm:$0xf]
        %v4318 = vld [vmem:[%s6 + $0x80] sm:$0xf]
        %v4319 = vld [vmem:[%s6 + $0x84] sm:$0xf]
        %v4320 = vld [vmem:[%s6 + $0x88] sm:$0xf]
        %v4321 = vld [vmem:[%s6 + $0x8c] sm:$0xf]
        %v4322 = vld [vmem:[%s6 + $0x90] sm:$0xf]
        %v4323 = vld [vmem:[%s6 + $0x94] sm:$0xf]
        %v4324 = vld [vmem:[%s6 + $0x98] sm:$0xf]
        %v4325 = vld [vmem:[%s6 + $0x9c] sm:$0xf]
        %v4326 = vld [vmem:[%s6 + $0xa0] sm:$0xf]
        %v4327 = vld [vmem:[%s6 + $0xa4] sm:$0xf]
        %v4328 = vld [vmem:[%s6 + $0xa8] sm:$0xf]
        %v4329 = vld [vmem:[%s6 + $0xac] sm:$0xf]
        %v4330 = vld [vmem:[%s6 + $0xb0] sm:$0xf]
        %v4331 = vld [vmem:[%s6 + $0xb4] sm:$0xf]
        %v4332 = vld [vmem:[%s6 + $0xb8] sm:$0xf]
        %v4333 = vld [vmem:[%s6 + $0xbc] sm:$0xf]
        %v4334 = vld [vmem:[%s6 + $0xc0] sm:$0xf]
        %v4335 = vld [vmem:[%s6 + $0xc4] sm:$0xf]
        %v4336 = vld [vmem:[%s6 + $0xc8] sm:$0xf]
        %v4337 = vld [vmem:[%s6 + $0xcc] sm:$0xf]
        %v4338 = vld [vmem:[%s6 + $0xd0] sm:$0xf]
        %v4339 = vld [vmem:[%s6 + $0xd4] sm:$0xf]
        %v4340 = vld [vmem:[%s6 + $0xd8] sm:$0xf]
        %v4341 = vld [vmem:[%s6 + $0xdc] sm:$0xf]
        %v4342 = vld [vmem:[%s6 + $0xe0] sm:$0xf]
        %v4343 = vld [vmem:[%s6 + $0xe4] sm:$0xf]
        %v4344 = vld [vmem:[%s6 + $0xe8] sm:$0xf]
        %v4345 = vld [vmem:[%s6 + $0xec] sm:$0xf]
        %v4346 = vld [vmem:[%s6 + $0xf0] sm:$0xf]
        %v4347 = vld [vmem:[%s6 + $0xf4] sm:$0xf]
        %v4348 = vld [vmem:[%s6 + $0xf8] sm:$0xf]
        %v4349 = vld [vmem:[%s6 + $0xfc] sm:$0xf]
        %v4350 = vld [vmem:[%s6 + $0x100] sm:$0xf]
        %v4351 = vld [vmem:[%s6 + $0x104] sm:$0xf]
        %v4352 = vld [vmem:[%s6 + $0x108] sm:$0xf]
        %v4353 = vld [vmem:[%s6 + $0x10c] sm:$0xf]
        %v4354 = vld [vmem:[%s6 + $0x110] sm:$0xf]
        %v4355 = vld [vmem:[%s6 + $0x114] sm:$0xf]
        %v4356 = vld [vmem:[%s6 + $0x118] sm:$0xf]
        %v4357 = vld [vmem:[%s6 + $0x11c] sm:$0xf]
        %v4358 = vld [vmem:[%s6 + $0x120] sm:$0xf]
        %v4359 = vld [vmem:[%s6 + $0x124] sm:$0xf]
        %v4360 = vld [vmem:[%s6 + $0x128] sm:$0xf]
        %v4361 = vld [vmem:[%s6 + $0x12c] sm:$0xf]
        %v4362 = vld [vmem:[%s6 + $0x130] sm:$0xf]
        %v4363 = vld [vmem:[%s6 + $0x134] sm:$0xf]
        %v4364 = vld [vmem:[%s6 + $0x138] sm:$0xf]
        %v4365 = vld [vmem:[%s6 + $0x13c] sm:$0xf]
        %v4366 = vld [vmem:[%s6 + $0x140] sm:$0xf]
        %v4367 = vld [vmem:[%s6 + $0x144] sm:$0xf]
        %v4368 = vld [vmem:[%s6 + $0x148] sm:$0xf]
        %v4369 = vld [vmem:[%s6 + $0x14c] sm:$0xf]
        %v4370 = vld [vmem:[%s6 + $0x150] sm:$0xf]
        %v4371 = vld [vmem:[%s6 + $0x154] sm:$0xf]
        %v4372 = vld [vmem:[%s6 + $0x158] sm:$0xf]
        %v4373 = vld [vmem:[%s6 + $0x15c] sm:$0xf]
        %v4374 = vld [vmem:[%s6 + $0x160] sm:$0xf]
        %v4375 = vld [vmem:[%s6 + $0x164] sm:$0xf]
        %v4376 = vld [vmem:[%s6 + $0x168] sm:$0xf]
        %v4377 = vld [vmem:[%s6 + $0x16c] sm:$0xf]
        %v4378 = vld [vmem:[%s6 + $0x170] sm:$0xf]
        %v4379 = vld [vmem:[%s6 + $0x174] sm:$0xf]
        %v4380 = vld [vmem:[%s6 + $0x178] sm:$0xf]
        %v4381 = vld [vmem:[%s6 + $0x17c] sm:$0xf]
        %v4382 = vld [vmem:[%s6 + $0x180] sm:$0xf]
        %v4383 = vld [vmem:[%s6 + $0x184] sm:$0xf]
        %v4384 = vld [vmem:[%s6 + $0x188] sm:$0xf]
        %v4385 = vld [vmem:[%s6 + $0x18c] sm:$0xf]
        %v4386 = vld [vmem:[%s6 + $0x190] sm:$0xf]
        %v4387 = vld [vmem:[%s6 + $0x194] sm:$0xf]
        %v4388 = vld [vmem:[%s6 + $0x198] sm:$0xf]
        %v4389 = vld [vmem:[%s6 + $0x19c] sm:$0xf]
        %v4390 = vld [vmem:[%s6 + $0x1a0] sm:$0xf]
        %v4391 = vld [vmem:[%s6 + $0x1a4] sm:$0xf]
        %v4392 = vld [vmem:[%s6 + $0x1a8] sm:$0xf]
        %v4393 = vld [vmem:[%s6 + $0x1ac] sm:$0xf]
        %v4394 = vld [vmem:[%s6 + $0x1b0] sm:$0xf]
        %v4395 = vld [vmem:[%s6 + $0x1b4] sm:$0xf]
        %v4396 = vld [vmem:[%s6 + $0x1b8] sm:$0xf]
        %v4397 = vld [vmem:[%s6 + $0x1bc] sm:$0xf]
        %v4398 = vld [vmem:[%s6 + $0x1c0] sm:$0xf]
        %v4399 = vld [vmem:[%s6 + $0x1c4] sm:$0xf]
        %v4400 = vld [vmem:[%s6 + $0x1c8] sm:$0xf]
        %v4401 = vld [vmem:[%s6 + $0x1cc] sm:$0xf]
        %v4402 = vld [vmem:[%s6 + $0x1d0] sm:$0xf]
        %v4403 = vld [vmem:[%s6 + $0x1d4] sm:$0xf]
        %v4404 = vld [vmem:[%s6 + $0x1d8] sm:$0xf]
        %v4405 = vld [vmem:[%s6 + $0x1dc] sm:$0xf]
        %v4406 = vld [vmem:[%s6 + $0x1e0] sm:$0xf]
        %v4407 = vld [vmem:[%s6 + $0x1e4] sm:$0xf]
        %v4408 = vld [vmem:[%s6 + $0x1e8] sm:$0xf]
        %v4409 = vld [vmem:[%s6 + $0x1ec] sm:$0xf]
        %v4410 = vld [vmem:[%s6 + $0x1f0] sm:$0xf]
        %v4411 = vld [vmem:[%s6 + $0x1f4] sm:$0xf]
        %v4412 = vld [vmem:[%s6 + $0x1f8] sm:$0xf]
        %v4413 = vld [vmem:[%s6 + $0x1fc] sm:$0xf]
        %v4414 = vld [vmem:[%s6 + $0x200] sm:$0xf]
        %v4415 = vld [vmem:[%s6 + $0x204] sm:$0xf]
        %v4416 = vld [vmem:[%s6 + $0x208] sm:$0xf]
        %v4417 = vld [vmem:[%s6 + $0x20c] sm:$0xf]
        %v4418 = vld [vmem:[%s6 + $0x210] sm:$0xf]
        %v4419 = vld [vmem:[%s6 + $0x214] sm:$0xf]
        %v4420 = vld [vmem:[%s6 + $0x218] sm:$0xf]
        %v4421 = vld [vmem:[%s6 + $0x21c] sm:$0xf]
        %v4422 = vld [vmem:[%s6 + $0x220] sm:$0xf]
        %v4423 = vld [vmem:[%s6 + $0x224] sm:$0xf]
        %v4424 = vld [vmem:[%s6 + $0x228] sm:$0xf]
        %v4425 = vld [vmem:[%s6 + $0x22c] sm:$0xf]
        %v4426 = vld [vmem:[%s6 + $0x230] sm:$0xf]
        %v4427 = vld [vmem:[%s6 + $0x234] sm:$0xf]
        %v4428 = vld [vmem:[%s6 + $0x238] sm:$0xf]
        %v4429 = vld [vmem:[%s6 + $0x23c] sm:$0xf]
        %v4590 = vunpack.c.l.b16 %v4126
        %v4591 = vunpack.c.h.b16 %v4126
        %v4592 = vunpack.c.l.b16 %v4127
        %v4593 = vunpack.c.h.b16 %v4127
        %v4594 = vunpack.c.l.b16 %v4128
        %v4595 = vunpack.c.h.b16 %v4128
        %v4596 = vunpack.c.l.b16 %v4129
        %v4597 = vunpack.c.h.b16 %v4129
        %v4598 = vunpack.c.l.b16 %v4130
        %v4599 = vunpack.c.l.b16 %v4131
        %v4600 = vunpack.c.h.b16 %v4131
        %v4601 = vunpack.c.l.b16 %v4132
        %v4602 = vunpack.c.h.b16 %v4132
        %v4603 = vunpack.c.l.b16 %v4133
        %v4604 = vunpack.c.h.b16 %v4133
        %v4605 = vunpack.c.l.b16 %v4134
        %v4606 = vunpack.c.h.b16 %v4134
        %v4607 = vunpack.c.l.b16 %v4135
        %v4608 = vunpack.c.l.b16 %v4136
        %v4609 = vunpack.c.h.b16 %v4136
        %v4610 = vunpack.c.l.b16 %v4137
        %v4611 = vunpack.c.h.b16 %v4137
        %v4612 = vunpack.c.l.b16 %v4138
        %v4613 = vunpack.c.h.b16 %v4138
        %v4614 = vunpack.c.l.b16 %v4139
        %v4615 = vunpack.c.h.b16 %v4139
        %v4616 = vunpack.c.l.b16 %v4140
        %v4617 = vunpack.c.l.b16 %v4141
        %v4618 = vunpack.c.h.b16 %v4141
        %v4619 = vunpack.c.l.b16 %v4142
        %v4620 = vunpack.c.h.b16 %v4142
        %v4621 = vunpack.c.l.b16 %v4143
        %v4622 = vunpack.c.h.b16 %v4143
        %v4623 = vunpack.c.l.b16 %v4144
        %v4624 = vunpack.c.h.b16 %v4144
        %v4625 = vunpack.c.l.b16 %v4145
        %v4626 = vunpack.c.l.b16 %v4146
        %v4627 = vunpack.c.h.b16 %v4146
        %v4628 = vunpack.c.l.b16 %v4147
        %v4629 = vunpack.c.h.b16 %v4147
        %v4630 = vunpack.c.l.b16 %v4148
        %v4631 = vunpack.c.h.b16 %v4148
        %v4632 = vunpack.c.l.b16 %v4149
        %v4633 = vunpack.c.h.b16 %v4149
        %v4634 = vunpack.c.l.b16 %v4150
        %v4635 = vunpack.c.l.b16 %v4151
        %v4636 = vunpack.c.h.b16 %v4151
        %v4637 = vunpack.c.l.b16 %v4152
        %v4638 = vunpack.c.h.b16 %v4152
        %v4639 = vunpack.c.l.b16 %v4153
        %v4640 = vunpack.c.h.b16 %v4153
        %v4641 = vunpack.c.l.b16 %v4154
        %v4642 = vunpack.c.h.b16 %v4154
        %v4643 = vunpack.c.l.b16 %v4155
        %v4644 = vunpack.c.l.b16 %v4156
        %v4645 = vunpack.c.h.b16 %v4156
        %v4646 = vunpack.c.l.b16 %v4157
        %v4647 = vunpack.c.h.b16 %v4157
        %v4648 = vunpack.c.l.b16 %v4158
        %v4649 = vunpack.c.h.b16 %v4158
        %v4650 = vunpack.c.l.b16 %v4159
        %v4651 = vunpack.c.h.b16 %v4159
        %v4652 = vunpack.c.l.b16 %v4160
        %v4653 = vunpack.c.l.b16 %v4161
        %v4654 = vunpack.c.h.b16 %v4161
        %v4655 = vunpack.c.l.b16 %v4162
        %v4656 = vunpack.c.h.b16 %v4162
        %v4657 = vunpack.c.l.b16 %v4163
        %v4658 = vunpack.c.h.b16 %v4163
        %v4659 = vunpack.c.l.b16 %v4164
        %v4660 = vunpack.c.h.b16 %v4164
        %v4661 = vunpack.c.l.b16 %v4165
        %v4662 = vunpack.c.l.b16 %v4166
        %v4663 = vunpack.c.h.b16 %v4166
        %v4664 = vunpack.c.l.b16 %v4167
        %v4665 = vunpack.c.h.b16 %v4167
        %v4666 = vunpack.c.l.b16 %v4168
        %v4667 = vunpack.c.h.b16 %v4168
        %v4668 = vunpack.c.l.b16 %v4169
        %v4669 = vunpack.c.h.b16 %v4169
        %v4670 = vunpack.c.l.b16 %v4170
        %v4671 = vunpack.c.l.b16 %v4171
        %v4672 = vunpack.c.h.b16 %v4171
        %v4673 = vunpack.c.l.b16 %v4172
        %v4674 = vunpack.c.h.b16 %v4172
        %v4675 = vunpack.c.l.b16 %v4173
        %v4676 = vunpack.c.h.b16 %v4173
        %v4677 = vunpack.c.l.b16 %v4174
        %v4678 = vunpack.c.h.b16 %v4174
        %v4679 = vunpack.c.l.b16 %v4175
        %v4680 = vunpack.c.l.b16 %v4176
        %v4681 = vunpack.c.h.b16 %v4176
        %v4682 = vunpack.c.l.b16 %v4177
        %v4683 = vunpack.c.h.b16 %v4177
        %v4684 = vunpack.c.l.b16 %v4178
        %v4685 = vunpack.c.h.b16 %v4178
        %v4686 = vunpack.c.l.b16 %v4179
        %v4687 = vunpack.c.h.b16 %v4179
        %v4688 = vunpack.c.l.b16 %v4180
        %v4689 = vunpack.c.l.b16 %v4181
        %v4690 = vunpack.c.h.b16 %v4181
        %v4691 = vunpack.c.l.b16 %v4182
        %v4692 = vunpack.c.h.b16 %v4182
        %v4693 = vunpack.c.l.b16 %v4183
        %v4694 = vunpack.c.h.b16 %v4183
        %v4695 = vunpack.c.l.b16 %v4184
        %v4696 = vunpack.c.h.b16 %v4184
        %v4697 = vunpack.c.l.b16 %v4185
        %v4698 = vunpack.c.l.b16 %v4186
        %v4699 = vunpack.c.h.b16 %v4186
        %v4700 = vunpack.c.l.b16 %v4187
        %v4701 = vunpack.c.h.b16 %v4187
        %v4702 = vunpack.c.l.b16 %v4188
        %v4703 = vunpack.c.h.b16 %v4188
        %v4704 = vunpack.c.l.b16 %v4189
        %v4705 = vunpack.c.h.b16 %v4189
        %v4706 = vunpack.c.l.b16 %v4190
        %v4707 = vunpack.c.l.b16 %v4191
        %v4708 = vunpack.c.h.b16 %v4191
        %v4709 = vunpack.c.l.b16 %v4192
        %v4710 = vunpack.c.h.b16 %v4192
        %v4711 = vunpack.c.l.b16 %v4193
        %v4712 = vunpack.c.h.b16 %v4193
        %v4713 = vunpack.c.l.b16 %v4194
        %v4714 = vunpack.c.h.b16 %v4194
        %v4715 = vunpack.c.l.b16 %v4195
        %v4716 = vunpack.c.l.b16 %v4196
        %v4717 = vunpack.c.h.b16 %v4196
        %v4718 = vunpack.c.l.b16 %v4197
        %v4719 = vunpack.c.h.b16 %v4197
        %v4720 = vunpack.c.l.b16 %v4198
        %v4721 = vunpack.c.h.b16 %v4198
        %v4722 = vunpack.c.l.b16 %v4199
        %v4723 = vunpack.c.h.b16 %v4199
        %v4724 = vunpack.c.l.b16 %v4200
        %v4725 = vunpack.c.l.b16 %v4201
        %v4726 = vunpack.c.h.b16 %v4201
        %v4727 = vunpack.c.l.b16 %v4202
        %v4728 = vunpack.c.h.b16 %v4202
        %v4729 = vunpack.c.l.b16 %v4203
        %v4730 = vunpack.c.h.b16 %v4203
        %v4731 = vunpack.c.l.b16 %v4204
        %v4732 = vunpack.c.h.b16 %v4204
        %v4733 = vunpack.c.l.b16 %v4205
        %v4734 = vunpack.c.l.b16 %v4206
        %v4735 = vunpack.c.h.b16 %v4206
        %v4736 = vunpack.c.l.b16 %v4207
        %v4737 = vunpack.c.h.b16 %v4207
        %v4738 = vunpack.c.l.b16 %v4208
        %v4739 = vunpack.c.h.b16 %v4208
        %v4740 = vunpack.c.l.b16 %v4209
        %v4741 = vunpack.c.h.b16 %v4209
        %v4742 = vunpack.c.l.b16 %v4210
        %v4743 = vunpack.c.l.b16 %v4211
        %v4744 = vunpack.c.h.b16 %v4211
        %v4745 = vunpack.c.l.b16 %v4212
        %v4746 = vunpack.c.h.b16 %v4212
        %v4747 = vunpack.c.l.b16 %v4213
        %v4748 = vunpack.c.h.b16 %v4213
        %v4749 = vunpack.c.l.b16 %v4214
        %v4750 = vunpack.c.h.b16 %v4214
        %v4751 = vunpack.c.l.b16 %v4215
        %v4752 = vunpack.c.l.b16 %v4216
        %v4753 = vunpack.c.h.b16 %v4216
        %v4754 = vunpack.c.l.b16 %v4217
        %v4755 = vunpack.c.h.b16 %v4217
        %v4756 = vunpack.c.l.b16 %v4218
        %v4757 = vunpack.c.h.b16 %v4218
        %v4758 = vunpack.c.l.b16 %v4219
        %v4759 = vunpack.c.h.b16 %v4219
        %v4760 = vunpack.c.l.b16 %v4220
        %v4761 = vunpack.c.l.b16 %v4221
        %v4762 = vunpack.c.h.b16 %v4221
        %v4763 = vunpack.c.l.b16 %v4222
        %v4764 = vunpack.c.h.b16 %v4222
        %v4765 = vunpack.c.l.b16 %v4223
        %v4766 = vunpack.c.h.b16 %v4223
        %v4767 = vunpack.c.l.b16 %v4224
        %v4768 = vunpack.c.h.b16 %v4224
        %v4769 = vunpack.c.l.b16 %v4225
        %v4770 = vunpack.c.l.b16 %v4226
        %v4771 = vunpack.c.h.b16 %v4226
        %v4772 = vunpack.c.l.b16 %v4227
        %v4773 = vunpack.c.h.b16 %v4227
        %v4774 = vunpack.c.l.b16 %v4228
        %v4775 = vunpack.c.h.b16 %v4228
        %v4776 = vunpack.c.l.b16 %v4229
        %v4777 = vunpack.c.h.b16 %v4229
        %v4778 = vunpack.c.l.b16 %v4230
        %v4779 = vunpack.c.l.b16 %v4231
        %v4780 = vunpack.c.h.b16 %v4231
        %v4781 = vunpack.c.l.b16 %v4232
        %v4782 = vunpack.c.h.b16 %v4232
        %v4783 = vunpack.c.l.b16 %v4233
        %v4784 = vunpack.c.h.b16 %v4233
        %v4785 = vunpack.c.l.b16 %v4234
        %v4786 = vunpack.c.h.b16 %v4234
        %v4787 = vunpack.c.l.b16 %v4235
        %v4788 = vunpack.c.l.b16 %v4236
        %v4789 = vunpack.c.h.b16 %v4236
        %v4790 = vunpack.c.l.b16 %v4237
        %v4791 = vunpack.c.h.b16 %v4237
        %v4792 = vunpack.c.l.b16 %v4238
        %v4793 = vunpack.c.h.b16 %v4238
        %v4794 = vunpack.c.l.b16 %v4239
        %v4795 = vunpack.c.h.b16 %v4239
        %v4796 = vunpack.c.l.b16 %v4240
        %v4797 = vunpack.c.l.b16 %v4241
        %v4798 = vunpack.c.h.b16 %v4241
        %v4799 = vunpack.c.l.b16 %v4242
        %v4800 = vunpack.c.h.b16 %v4242
        %v4801 = vunpack.c.l.b16 %v4243
        %v4802 = vunpack.c.h.b16 %v4243
        %v4803 = vunpack.c.l.b16 %v4244
        %v4804 = vunpack.c.h.b16 %v4244
        %v4805 = vunpack.c.l.b16 %v4245
        %v4806 = vunpack.c.l.b16 %v4246
        %v4807 = vunpack.c.h.b16 %v4246
        %v4808 = vunpack.c.l.b16 %v4247
        %v4809 = vunpack.c.h.b16 %v4247
        %v4810 = vunpack.c.l.b16 %v4248
        %v4811 = vunpack.c.h.b16 %v4248
        %v4812 = vunpack.c.l.b16 %v4249
        %v4813 = vunpack.c.h.b16 %v4249
        %v4814 = vunpack.c.l.b16 %v4250
        %v4815 = vunpack.c.l.b16 %v4251
        %v4816 = vunpack.c.h.b16 %v4251
        %v4817 = vunpack.c.l.b16 %v4252
        %v4818 = vunpack.c.h.b16 %v4252
        %v4819 = vunpack.c.l.b16 %v4253
        %v4820 = vunpack.c.h.b16 %v4253
        %v4821 = vunpack.c.l.b16 %v4254
        %v4822 = vunpack.c.h.b16 %v4254
        %v4823 = vunpack.c.l.b16 %v4255
        %v4824 = vunpack.c.l.b16 %v4256
        %v4825 = vunpack.c.h.b16 %v4256
        %v4826 = vunpack.c.l.b16 %v4257
        %v4827 = vunpack.c.h.b16 %v4257
        %v4828 = vunpack.c.l.b16 %v4258
        %v4829 = vunpack.c.h.b16 %v4258
        %v4830 = vunpack.c.l.b16 %v4259
        %v4831 = vunpack.c.h.b16 %v4259
        %v4832 = vunpack.c.l.b16 %v4260
        %v4833 = vunpack.c.l.b16 %v4261
        %v4834 = vunpack.c.h.b16 %v4261
        %v4835 = vunpack.c.l.b16 %v4262
        %v4836 = vunpack.c.h.b16 %v4262
        %v4837 = vunpack.c.l.b16 %v4263
        %v4838 = vunpack.c.h.b16 %v4263
        %v4839 = vunpack.c.l.b16 %v4264
        %v4840 = vunpack.c.h.b16 %v4264
        %v4841 = vunpack.c.l.b16 %v4265
        %v4842 = vunpack.c.l.b16 %v4266
        %v4843 = vunpack.c.h.b16 %v4266
        %v4844 = vunpack.c.l.b16 %v4267
        %v4845 = vunpack.c.h.b16 %v4267
        %v4846 = vunpack.c.l.b16 %v4268
        %v4847 = vunpack.c.h.b16 %v4268
        %v4848 = vunpack.c.l.b16 %v4269
        %v4849 = vunpack.c.h.b16 %v4269
        %v4850 = vunpack.c.l.b16 %v4270
        %v4851 = vunpack.c.l.b16 %v4271
        %v4852 = vunpack.c.h.b16 %v4271
        %v4853 = vunpack.c.l.b16 %v4272
        %v4854 = vunpack.c.h.b16 %v4272
        %v4855 = vunpack.c.l.b16 %v4273
        %v4856 = vunpack.c.h.b16 %v4273
        %v4857 = vunpack.c.l.b16 %v4274
        %v4858 = vunpack.c.h.b16 %v4274
        %v4859 = vunpack.c.l.b16 %v4275
        %v4860 = vunpack.c.l.b16 %v4276
        %v4861 = vunpack.c.h.b16 %v4276
        %v4862 = vunpack.c.l.b16 %v4277
        %v4863 = vunpack.c.h.b16 %v4277
        %v4864 = vunpack.c.l.b16 %v4278
        %v4865 = vunpack.c.h.b16 %v4278
        %v4866 = vunpack.c.l.b16 %v4279
        %v4867 = vunpack.c.h.b16 %v4279
        %v4868 = vunpack.c.l.b16 %v4280
        %v4869 = vunpack.c.l.b16 %v4281
        %v4870 = vunpack.c.h.b16 %v4281
        %v4871 = vunpack.c.l.b16 %v4282
        %v4872 = vunpack.c.h.b16 %v4282
        %v4873 = vunpack.c.l.b16 %v4283
        %v4874 = vunpack.c.h.b16 %v4283
        %v4875 = vunpack.c.l.b16 %v4284
        %v4876 = vunpack.c.h.b16 %v4284
        %v4877 = vunpack.c.l.b16 %v4285
        %v4878 = vpack.c.b16 %v4599, %v4590
        %v4879 = vpack.c.b16 %v4600, %v4591
        %v4880 = vpack.c.b16 %v4601, %v4592
        %v4881 = vpack.c.b16 %v4602, %v4593
        %v4882 = vpack.c.b16 %v4603, %v4594
        %v4883 = vpack.c.b16 %v4604, %v4595
        %v4884 = vpack.c.b16 %v4605, %v4596
        %v4885 = vpack.c.b16 %v4606, %v4597
        %v4886 = vpack.c.b16 %v4607, %v4598
        %v4887 = vpack.c.b16 %v4617, %v4608
        %v4888 = vpack.c.b16 %v4618, %v4609
        %v4889 = vpack.c.b16 %v4619, %v4610
        %v4890 = vpack.c.b16 %v4620, %v4611
        %v4891 = vpack.c.b16 %v4621, %v4612
        %v4892 = vpack.c.b16 %v4622, %v4613
        %v4893 = vpack.c.b16 %v4623, %v4614
        %v4894 = vpack.c.b16 %v4624, %v4615
        %v4895 = vpack.c.b16 %v4625, %v4616
        %v4896 = vpack.c.b16 %v4635, %v4626
        %v4897 = vpack.c.b16 %v4636, %v4627
        %v4898 = vpack.c.b16 %v4637, %v4628
        %v4899 = vpack.c.b16 %v4638, %v4629
        %v4900 = vpack.c.b16 %v4639, %v4630
        %v4901 = vpack.c.b16 %v4640, %v4631
        %v4902 = vpack.c.b16 %v4641, %v4632
        %v4903 = vpack.c.b16 %v4642, %v4633
        %v4904 = vpack.c.b16 %v4643, %v4634
        %v4905 = vpack.c.b16 %v4653, %v4644
        %v4906 = vpack.c.b16 %v4654, %v4645
        %v4907 = vpack.c.b16 %v4655, %v4646
        %v4908 = vpack.c.b16 %v4656, %v4647
        %v4909 = vpack.c.b16 %v4657, %v4648
        %v4910 = vpack.c.b16 %v4658, %v4649
        %v4911 = vpack.c.b16 %v4659, %v4650
        %v4912 = vpack.c.b16 %v4660, %v4651
        %v4913 = vpack.c.b16 %v4661, %v4652
        %v4914 = vpack.c.b16 %v4671, %v4662
        %v4915 = vpack.c.b16 %v4672, %v4663
        %v4916 = vpack.c.b16 %v4673, %v4664
        %v4917 = vpack.c.b16 %v4674, %v4665
        %v4918 = vpack.c.b16 %v4675, %v4666
        %v4919 = vpack.c.b16 %v4676, %v4667
        %v4920 = vpack.c.b16 %v4677, %v4668
        %v4921 = vpack.c.b16 %v4678, %v4669
        %v4922 = vpack.c.b16 %v4679, %v4670
        %v4923 = vpack.c.b16 %v4689, %v4680
        %v4924 = vpack.c.b16 %v4690, %v4681
        %v4925 = vpack.c.b16 %v4691, %v4682
        %v4926 = vpack.c.b16 %v4692, %v4683
        %v4927 = vpack.c.b16 %v4693, %v4684
        %v4928 = vpack.c.b16 %v4694, %v4685
        %v4929 = vpack.c.b16 %v4695, %v4686
        %v4930 = vpack.c.b16 %v4696, %v4687
        %v4931 = vpack.c.b16 %v4697, %v4688
        %v4932 = vpack.c.b16 %v4707, %v4698
        %v4933 = vpack.c.b16 %v4708, %v4699
        %v4934 = vpack.c.b16 %v4709, %v4700
        %v4935 = vpack.c.b16 %v4710, %v4701
        %v4936 = vpack.c.b16 %v4711, %v4702
        %v4937 = vpack.c.b16 %v4712, %v4703
        %v4938 = vpack.c.b16 %v4713, %v4704
        %v4939 = vpack.c.b16 %v4714, %v4705
        %v4940 = vpack.c.b16 %v4715, %v4706
        %v4941 = vpack.c.b16 %v4725, %v4716
        %v4942 = vpack.c.b16 %v4726, %v4717
        %v4943 = vpack.c.b16 %v4727, %v4718
        %v4944 = vpack.c.b16 %v4728, %v4719
        %v4945 = vpack.c.b16 %v4729, %v4720
        %v4946 = vpack.c.b16 %v4730, %v4721
        %v4947 = vpack.c.b16 %v4731, %v4722
        %v4948 = vpack.c.b16 %v4732, %v4723
        %v4949 = vpack.c.b16 %v4733, %v4724
        %v4950 = vpack.c.b16 %v4743, %v4734
        %v4951 = vpack.c.b16 %v4744, %v4735
        %v4952 = vpack.c.b16 %v4745, %v4736
        %v4953 = vpack.c.b16 %v4746, %v4737
        %v4954 = vpack.c.b16 %v4747, %v4738
        %v4955 = vpack.c.b16 %v4748, %v4739
        %v4956 = vpack.c.b16 %v4749, %v4740
        %v4957 = vpack.c.b16 %v4750, %v4741
        %v4958 = vpack.c.b16 %v4751, %v4742
        %v4959 = vpack.c.b16 %v4761, %v4752
        %v4960 = vpack.c.b16 %v4762, %v4753
        %v4961 = vpack.c.b16 %v4763, %v4754
        %v4962 = vpack.c.b16 %v4764, %v4755
        %v4963 = vpack.c.b16 %v4765, %v4756
        %v4964 = vpack.c.b16 %v4766, %v4757
        %v4965 = vpack.c.b16 %v4767, %v4758
        %v4966 = vpack.c.b16 %v4768, %v4759
        %v4967 = vpack.c.b16 %v4769, %v4760
        %v4968 = vpack.c.b16 %v4779, %v4770
        %v4969 = vpack.c.b16 %v4780, %v4771
        %v4970 = vpack.c.b16 %v4781, %v4772
        %v4971 = vpack.c.b16 %v4782, %v4773
        %v4972 = vpack.c.b16 %v4783, %v4774
        %v4973 = vpack.c.b16 %v4784, %v4775
        %v4974 = vpack.c.b16 %v4785, %v4776
        %v4975 = vpack.c.b16 %v4786, %v4777
        %v4976 = vpack.c.b16 %v4787, %v4778
        %v4977 = vpack.c.b16 %v4797, %v4788
        %v4978 = vpack.c.b16 %v4798, %v4789
        %v4979 = vpack.c.b16 %v4799, %v4790
        %v4980 = vpack.c.b16 %v4800, %v4791
        %v4981 = vpack.c.b16 %v4801, %v4792
        %v4982 = vpack.c.b16 %v4802, %v4793
        %v4983 = vpack.c.b16 %v4803, %v4794
        %v4984 = vpack.c.b16 %v4804, %v4795
        %v4985 = vpack.c.b16 %v4805, %v4796
        %v4986 = vpack.c.b16 %v4815, %v4806
        %v4987 = vpack.c.b16 %v4816, %v4807
        %v4988 = vpack.c.b16 %v4817, %v4808
        %v4989 = vpack.c.b16 %v4818, %v4809
        %v4990 = vpack.c.b16 %v4819, %v4810
        %v4991 = vpack.c.b16 %v4820, %v4811
        %v4992 = vpack.c.b16 %v4821, %v4812
        %v4993 = vpack.c.b16 %v4822, %v4813
        %v4994 = vpack.c.b16 %v4823, %v4814
        %v4995 = vpack.c.b16 %v4833, %v4824
        %v4996 = vpack.c.b16 %v4834, %v4825
        %v4997 = vpack.c.b16 %v4835, %v4826
        %v4998 = vpack.c.b16 %v4836, %v4827
        %v4999 = vpack.c.b16 %v4837, %v4828
        %v5000 = vpack.c.b16 %v4838, %v4829
        %v5001 = vpack.c.b16 %v4839, %v4830
        %v5002 = vpack.c.b16 %v4840, %v4831
        %v5003 = vpack.c.b16 %v4841, %v4832
        %v5004 = vpack.c.b16 %v4851, %v4842
        %v5005 = vpack.c.b16 %v4852, %v4843
        %v5006 = vpack.c.b16 %v4853, %v4844
        %v5007 = vpack.c.b16 %v4854, %v4845
        %v5008 = vpack.c.b16 %v4855, %v4846
        %v5009 = vpack.c.b16 %v4856, %v4847
        %v5010 = vpack.c.b16 %v4857, %v4848
        %v5011 = vpack.c.b16 %v4858, %v4849
        %v5012 = vpack.c.b16 %v4859, %v4850
        %v5013 = vpack.c.b16 %v4869, %v4860
        %v5014 = vpack.c.b16 %v4870, %v4861
        %v5015 = vpack.c.b16 %v4871, %v4862
        %v5016 = vpack.c.b16 %v4872, %v4863
        %v5017 = vpack.c.b16 %v4873, %v4864
        %v5018 = vpack.c.b16 %v4874, %v4865
        %v5019 = vpack.c.b16 %v4875, %v4866
        %v5020 = vpack.c.b16 %v4876, %v4867
        %v5021 = vpack.c.b16 %v4877, %v4868
        %v5310 = vunpack.c.l.b16 %v4286
        %v5311 = vunpack.c.l.b16 %v4287
        %v5312 = vunpack.c.l.b16 %v4288
        %v5313 = vunpack.c.l.b16 %v4289
        %v5314 = vunpack.c.l.b16 %v4290
        %v5315 = vunpack.c.l.b16 %v4291
        %v5316 = vunpack.c.l.b16 %v4292
        %v5317 = vunpack.c.l.b16 %v4293
        %v5318 = vunpack.c.l.b16 %v4294
        %v5319 = vunpack.c.l.b16 %v4295
        %v5320 = vunpack.c.l.b16 %v4296
        %v5321 = vunpack.c.l.b16 %v4297
        %v5322 = vunpack.c.l.b16 %v4298
        %v5323 = vunpack.c.l.b16 %v4299
        %v5324 = vunpack.c.l.b16 %v4300
        %v5325 = vunpack.c.l.b16 %v4301
        %v5326 = vunpack.c.l.b16 %v4302
        %v5327 = vunpack.c.l.b16 %v4303
        %v5328 = vunpack.c.l.b16 %v4304
        %v5329 = vunpack.c.l.b16 %v4305
        %v5330 = vunpack.c.l.b16 %v4306
        %v5331 = vunpack.c.l.b16 %v4307
        %v5332 = vunpack.c.l.b16 %v4308
        %v5333 = vunpack.c.l.b16 %v4309
        %v5334 = vunpack.c.l.b16 %v4310
        %v5335 = vunpack.c.l.b16 %v4311
        %v5336 = vunpack.c.l.b16 %v4312
        %v5337 = vunpack.c.l.b16 %v4313
        %v5338 = vunpack.c.l.b16 %v4314
        %v5339 = vunpack.c.l.b16 %v4315
        %v5340 = vunpack.c.l.b16 %v4316
        %v5341 = vunpack.c.l.b16 %v4317
        %v5342 = vunpack.c.l.b16 %v4318
        %v5343 = vunpack.c.l.b16 %v4319
        %v5344 = vunpack.c.l.b16 %v4320
        %v5345 = vunpack.c.l.b16 %v4321
        %v5346 = vunpack.c.l.b16 %v4322
        %v5347 = vunpack.c.l.b16 %v4323
        %v5348 = vunpack.c.l.b16 %v4324
        %v5349 = vunpack.c.l.b16 %v4325
        %v5350 = vunpack.c.l.b16 %v4326
        %v5351 = vunpack.c.l.b16 %v4327
        %v5352 = vunpack.c.l.b16 %v4328
        %v5353 = vunpack.c.l.b16 %v4329
        %v5354 = vunpack.c.l.b16 %v4330
        %v5355 = vunpack.c.l.b16 %v4331
        %v5356 = vunpack.c.l.b16 %v4332
        %v5357 = vunpack.c.l.b16 %v4333
        %v5358 = vunpack.c.l.b16 %v4334
        %v5359 = vunpack.c.l.b16 %v4335
        %v5360 = vunpack.c.l.b16 %v4336
        %v5361 = vunpack.c.l.b16 %v4337
        %v5362 = vunpack.c.l.b16 %v4338
        %v5363 = vunpack.c.l.b16 %v4339
        %v5364 = vunpack.c.l.b16 %v4340
        %v5365 = vunpack.c.l.b16 %v4341
        %v5366 = vunpack.c.l.b16 %v4342
        %v5367 = vunpack.c.l.b16 %v4343
        %v5368 = vunpack.c.l.b16 %v4344
        %v5369 = vunpack.c.l.b16 %v4345
        %v5370 = vunpack.c.l.b16 %v4346
        %v5371 = vunpack.c.l.b16 %v4347
        %v5372 = vunpack.c.l.b16 %v4348
        %v5373 = vunpack.c.l.b16 %v4349
        %v5374 = vunpack.c.l.b16 %v4350
        %v5375 = vunpack.c.l.b16 %v4351
        %v5376 = vunpack.c.l.b16 %v4352
        %v5377 = vunpack.c.l.b16 %v4353
        %v5378 = vunpack.c.l.b16 %v4354
        %v5379 = vunpack.c.l.b16 %v4355
        %v5380 = vunpack.c.l.b16 %v4356
        %v5381 = vunpack.c.l.b16 %v4357
        %v5382 = vunpack.c.l.b16 %v4358
        %v5383 = vunpack.c.l.b16 %v4359
        %v5384 = vunpack.c.l.b16 %v4360
        %v5385 = vunpack.c.l.b16 %v4361
        %v5386 = vunpack.c.l.b16 %v4362
        %v5387 = vunpack.c.l.b16 %v4363
        %v5388 = vunpack.c.l.b16 %v4364
        %v5389 = vunpack.c.l.b16 %v4365
        %v5390 = vunpack.c.l.b16 %v4366
        %v5391 = vunpack.c.l.b16 %v4367
        %v5392 = vunpack.c.l.b16 %v4368
        %v5393 = vunpack.c.l.b16 %v4369
        %v5394 = vunpack.c.l.b16 %v4370
        %v5395 = vunpack.c.l.b16 %v4371
        %v5396 = vunpack.c.l.b16 %v4372
        %v5397 = vunpack.c.l.b16 %v4373
        %v5398 = vunpack.c.l.b16 %v4374
        %v5399 = vunpack.c.l.b16 %v4375
        %v5400 = vunpack.c.l.b16 %v4376
        %v5401 = vunpack.c.l.b16 %v4377
        %v5402 = vunpack.c.l.b16 %v4378
        %v5403 = vunpack.c.l.b16 %v4379
        %v5404 = vunpack.c.l.b16 %v4380
        %v5405 = vunpack.c.l.b16 %v4381
        %v5406 = vunpack.c.l.b16 %v4382
        %v5407 = vunpack.c.l.b16 %v4383
        %v5408 = vunpack.c.l.b16 %v4384
        %v5409 = vunpack.c.l.b16 %v4385
        %v5410 = vunpack.c.l.b16 %v4386
        %v5411 = vunpack.c.l.b16 %v4387
        %v5412 = vunpack.c.l.b16 %v4388
        %v5413 = vunpack.c.l.b16 %v4389
        %v5414 = vunpack.c.l.b16 %v4390
        %v5415 = vunpack.c.l.b16 %v4391
        %v5416 = vunpack.c.l.b16 %v4392
        %v5417 = vunpack.c.l.b16 %v4393
        %v5418 = vunpack.c.l.b16 %v4394
        %v5419 = vunpack.c.l.b16 %v4395
        %v5420 = vunpack.c.l.b16 %v4396
        %v5421 = vunpack.c.l.b16 %v4397
        %v5422 = vunpack.c.l.b16 %v4398
        %v5423 = vunpack.c.l.b16 %v4399
        %v5424 = vunpack.c.l.b16 %v4400
        %v5425 = vunpack.c.l.b16 %v4401
        %v5426 = vunpack.c.l.b16 %v4402
        %v5427 = vunpack.c.l.b16 %v4403
        %v5428 = vunpack.c.l.b16 %v4404
        %v5429 = vunpack.c.l.b16 %v4405
        %v5430 = vunpack.c.l.b16 %v4406
        %v5431 = vunpack.c.l.b16 %v4407
        %v5432 = vunpack.c.l.b16 %v4408
        %v5433 = vunpack.c.l.b16 %v4409
        %v5434 = vunpack.c.l.b16 %v4410
        %v5435 = vunpack.c.l.b16 %v4411
        %v5436 = vunpack.c.l.b16 %v4412
        %v5437 = vunpack.c.l.b16 %v4413
        %v5438 = vunpack.c.l.b16 %v4414
        %v5439 = vunpack.c.l.b16 %v4415
        %v5440 = vunpack.c.l.b16 %v4416
        %v5441 = vunpack.c.l.b16 %v4417
        %v5442 = vunpack.c.l.b16 %v4418
        %v5443 = vunpack.c.l.b16 %v4419
        %v5444 = vunpack.c.l.b16 %v4420
        %v5445 = vunpack.c.l.b16 %v4421
        %v5446 = vunpack.c.l.b16 %v4422
        %v5447 = vunpack.c.l.b16 %v4423
        %v5448 = vunpack.c.l.b16 %v4424
        %v5449 = vunpack.c.l.b16 %v4425
        %v5450 = vunpack.c.l.b16 %v4426
        %v5451 = vunpack.c.l.b16 %v4427
        %v5452 = vunpack.c.l.b16 %v4428
        %v5453 = vunpack.c.l.b16 %v4429
        %v5454 = vpack.c.b16 %v5311, %v5310
        %v5455 = vpack.c.b16 %v5313, %v5312
        %v5456 = vpack.c.b16 %v5315, %v5314
        %v5457 = vpack.c.b16 %v5317, %v5316
        %v5458 = vpack.c.b16 %v5319, %v5318
        %v5459 = vpack.c.b16 %v5321, %v5320
        %v5460 = vpack.c.b16 %v5323, %v5322
        %v5461 = vpack.c.b16 %v5325, %v5324
        %v5462 = vpack.c.b16 %v5327, %v5326
        %v5463 = vpack.c.b16 %v5329, %v5328
        %v5464 = vpack.c.b16 %v5331, %v5330
        %v5465 = vpack.c.b16 %v5333, %v5332
        %v5466 = vpack.c.b16 %v5335, %v5334
        %v5467 = vpack.c.b16 %v5337, %v5336
        %v5468 = vpack.c.b16 %v5339, %v5338
        %v5469 = vpack.c.b16 %v5341, %v5340
        %v5470 = vpack.c.b16 %v5343, %v5342
        %v5471 = vpack.c.b16 %v5345, %v5344
        %v5472 = vpack.c.b16 %v5347, %v5346
        %v5473 = vpack.c.b16 %v5349, %v5348
        %v5474 = vpack.c.b16 %v5351, %v5350
        %v5475 = vpack.c.b16 %v5353, %v5352
        %v5476 = vpack.c.b16 %v5355, %v5354
        %v5477 = vpack.c.b16 %v5357, %v5356
        %v5478 = vpack.c.b16 %v5359, %v5358
        %v5479 = vpack.c.b16 %v5361, %v5360
        %v5480 = vpack.c.b16 %v5363, %v5362
        %v5481 = vpack.c.b16 %v5365, %v5364
        %v5482 = vpack.c.b16 %v5367, %v5366
        %v5483 = vpack.c.b16 %v5369, %v5368
        %v5484 = vpack.c.b16 %v5371, %v5370
        %v5485 = vpack.c.b16 %v5373, %v5372
        %v5486 = vpack.c.b16 %v5375, %v5374
        %v5487 = vpack.c.b16 %v5377, %v5376
        %v5488 = vpack.c.b16 %v5379, %v5378
        %v5489 = vpack.c.b16 %v5381, %v5380
        %v5490 = vpack.c.b16 %v5383, %v5382
        %v5491 = vpack.c.b16 %v5385, %v5384
        %v5492 = vpack.c.b16 %v5387, %v5386
        %v5493 = vpack.c.b16 %v5389, %v5388
        %v5494 = vpack.c.b16 %v5391, %v5390
        %v5495 = vpack.c.b16 %v5393, %v5392
        %v5496 = vpack.c.b16 %v5395, %v5394
        %v5497 = vpack.c.b16 %v5397, %v5396
        %v5498 = vpack.c.b16 %v5399, %v5398
        %v5499 = vpack.c.b16 %v5401, %v5400
        %v5500 = vpack.c.b16 %v5403, %v5402
        %v5501 = vpack.c.b16 %v5405, %v5404
        %v5502 = vpack.c.b16 %v5407, %v5406
        %v5503 = vpack.c.b16 %v5409, %v5408
        %v5504 = vpack.c.b16 %v5411, %v5410
        %v5505 = vpack.c.b16 %v5413, %v5412
        %v5506 = vpack.c.b16 %v5415, %v5414
        %v5507 = vpack.c.b16 %v5417, %v5416
        %v5508 = vpack.c.b16 %v5419, %v5418
        %v5509 = vpack.c.b16 %v5421, %v5420
        %v5510 = vpack.c.b16 %v5423, %v5422
        %v5511 = vpack.c.b16 %v5425, %v5424
        %v5512 = vpack.c.b16 %v5427, %v5426
        %v5513 = vpack.c.b16 %v5429, %v5428
        %v5514 = vpack.c.b16 %v5431, %v5430
        %v5515 = vpack.c.b16 %v5433, %v5432
        %v5516 = vpack.c.b16 %v5435, %v5434
        %v5517 = vpack.c.b16 %v5437, %v5436
        %v5518 = vpack.c.b16 %v5439, %v5438
        %v5519 = vpack.c.b16 %v5441, %v5440
        %v5520 = vpack.c.b16 %v5443, %v5442
        %v5521 = vpack.c.b16 %v5445, %v5444
        %v5522 = vpack.c.b16 %v5447, %v5446
        %v5523 = vpack.c.b16 %v5449, %v5448
        %v5524 = vpack.c.b16 %v5451, %v5450
        %v5525 = vpack.c.b16 %v5453, %v5452
        %5598 = vmatprep.subr.bf16.mxu0 0
        %5599 = vmatpush1.bf16.msra.mxu0 %v5461
        %5600 = vmatprep.subr.bf16.mxu0 0
        %5601 = vmatpush1.bf16.msra.mxu0 %v5460
        %5602 = vmatprep.subr.bf16.mxu0 0
        %5603 = vmatpush1.bf16.msra.mxu0 %v5459
        %5604 = vmatprep.subr.bf16.mxu0 0
        %5605 = vmatpush1.bf16.msra.mxu0 %v5458
        %5606 = vmatprep.subr.bf16.mxu0 0
        %5607 = vmatpush1.bf16.msra.mxu0 %v5457
        %5608 = vmatprep.subr.bf16.mxu0 0
        %5609 = vmatpush1.bf16.msra.mxu0 %v5456
        %5610 = vmatprep.subr.bf16.mxu0 0
        %5611 = vmatpush1.bf16.msra.mxu0 %v5455
        %5612 = vmatprep.subr.bf16.mxu0 0
        %5613 = vmatpush1.bf16.msra.mxu0 %v5454
        %5614 = vmatprep.subr.bf16.mxu0 0
        %5615 = vmatpush2.bf16.msra.mxu0 %v5469
        %5616 = vmatprep.subr.bf16.mxu0 0
        %5617 = vmatpush2.bf16.msra.mxu0 %v5468
        %5618 = vmatprep.subr.bf16.mxu0 0
        %5619 = vmatpush2.bf16.msra.mxu0 %v5467
        %5620 = vmatprep.subr.bf16.mxu0 0
        %5621 = vmatpush2.bf16.msra.mxu0 %v5466
        %5622 = vmatprep.subr.bf16.mxu0 0
        %5623 = vmatpush2.bf16.msra.mxu0 %v5465
        %5624 = vmatprep.subr.bf16.mxu0 0
        %5625 = vmatpush2.bf16.msra.mxu0 %v5464
        %5626 = vmatprep.subr.bf16.mxu0 0
        %5627 = vmatpush2.bf16.msra.mxu0 %v5463
        %5628 = vmatprep.subr.bf16.mxu0 0
        %5629 = vmatpush2.bf16.msra.mxu0 %v5462
        %5630 = vmatprep.mubr.bf16.mxu0 %v4879
        %5631 = vmatmul.mubr.bf16.gmra.mxu0 %v4878
        %v5632 = vpop.f32.mrf.mxu0
        %v5633 = vadd.f32 0.0, %v5632
        %v5634 = vpop.f32.mrf.mxu0
        %v5635 = vpop.f32.mrf.mxu0
        %v5636 = vadd.f32 0.0, %v5635
        %v5637 = vpop.f32.mrf.mxu0
        %5638 = vmatprep.mubr.bf16.mxu0 %v4888
        %5639 = vmatmul.mubr.bf16.gmra.mxu0 %v4887
        %v5640 = vpop.f32.mrf.mxu0
        %v5641 = vadd.f32 0.0, %v5640
        %v5642 = vpop.f32.mrf.mxu0
        %v5643 = vpop.f32.mrf.mxu0
        %v5644 = vadd.f32 0.0, %v5643
        %v5645 = vpop.f32.mrf.mxu0
        %5646 = vmatprep.mubr.bf16.mxu0 %v4897
        %5647 = vmatmul.mubr.bf16.gmra.mxu0 %v4896
        %v5648 = vpop.f32.mrf.mxu0
        %v5649 = vadd.f32 0.0, %v5648
        %v5650 = vpop.f32.mrf.mxu0
        %v5651 = vpop.f32.mrf.mxu0
        %v5652 = vadd.f32 0.0, %v5651
        %v5653 = vpop.f32.mrf.mxu0
        %5654 = vmatprep.mubr.bf16.mxu0 %v4906
        %5655 = vmatmul.mubr.bf16.gmra.mxu0 %v4905
        %v5656 = vpop.f32.mrf.mxu0
        %v5657 = vadd.f32 0.0, %v5656
        %v5658 = vpop.f32.mrf.mxu0
        %v5659 = vpop.f32.mrf.mxu0
        %v5660 = vadd.f32 0.0, %v5659
        %v5661 = vpop.f32.mrf.mxu0
        %5662 = vmatprep.mubr.bf16.mxu0 %v4915
        %5663 = vmatmul.mubr.bf16.gmra.mxu0 %v4914
        %v5664 = vpop.f32.mrf.mxu0
        %v5665 = vadd.f32 0.0, %v5664
        %v5666 = vpop.f32.mrf.mxu0
        %v5667 = vpop.f32.mrf.mxu0
        %v5668 = vadd.f32 0.0, %v5667
        %v5669 = vpop.f32.mrf.mxu0
        %5670 = vmatprep.mubr.bf16.mxu0 %v4924
        %5671 = vmatmul.mubr.bf16.gmra.mxu0 %v4923
        %v5672 = vpop.f32.mrf.mxu0
        %v5673 = vadd.f32 0.0, %v5672
        %v5674 = vpop.f32.mrf.mxu0
        %v5675 = vpop.f32.mrf.mxu0
        %v5676 = vadd.f32 0.0, %v5675
        %v5677 = vpop.f32.mrf.mxu0
        %5678 = vmatprep.mubr.bf16.mxu0 %v4933
        %5679 = vmatmul.mubr.bf16.gmra.mxu0 %v4932
        %v5680 = vpop.f32.mrf.mxu0
        %v5681 = vadd.f32 0.0, %v5680
        %v5682 = vpop.f32.mrf.mxu0
        %v5683 = vpop.f32.mrf.mxu0
        %v5684 = vadd.f32 0.0, %v5683
        %v5685 = vpop.f32.mrf.mxu0
        %5686 = vmatprep.mubr.bf16.mxu0 %v4942
        %5687 = vmatmul.mubr.bf16.gmra.mxu0 %v4941
        %v5688 = vpop.f32.mrf.mxu0
        %v5689 = vadd.f32 0.0, %v5688
        %v5690 = vpop.f32.mrf.mxu0
        %v5691 = vpop.f32.mrf.mxu0
        %v5692 = vadd.f32 0.0, %v5691
        %v5693 = vpop.f32.mrf.mxu0
        %5694 = vmatprep.mubr.bf16.mxu0 %v4951
        %5695 = vmatmul.mubr.bf16.gmra.mxu0 %v4950
        %v5696 = vpop.f32.mrf.mxu0
        %v5697 = vadd.f32 0.0, %v5696
        %v5698 = vpop.f32.mrf.mxu0
        %v5699 = vpop.f32.mrf.mxu0
        %v5700 = vadd.f32 0.0, %v5699
        %v5701 = vpop.f32.mrf.mxu0
        %5702 = vmatprep.mubr.bf16.mxu0 %v4960
        %5703 = vmatmul.mubr.bf16.gmra.mxu0 %v4959
        %v5704 = vpop.f32.mrf.mxu0
        %v5705 = vadd.f32 0.0, %v5704
        %v5706 = vpop.f32.mrf.mxu0
        %v5707 = vpop.f32.mrf.mxu0
        %v5708 = vadd.f32 0.0, %v5707
        %v5709 = vpop.f32.mrf.mxu0
        %5710 = vmatprep.mubr.bf16.mxu0 %v4969
        %5711 = vmatmul.mubr.bf16.gmra.mxu0 %v4968
        %v5712 = vpop.f32.mrf.mxu0
        %v5713 = vadd.f32 0.0, %v5712
        %v5714 = vpop.f32.mrf.mxu0
        %v5715 = vpop.f32.mrf.mxu0
        %v5716 = vadd.f32 0.0, %v5715
        %v5717 = vpop.f32.mrf.mxu0
        %5718 = vmatprep.mubr.bf16.mxu0 %v4978
        %5719 = vmatmul.mubr.bf16.gmra.mxu0 %v4977
        %v5720 = vpop.f32.mrf.mxu0
        %v5721 = vadd.f32 0.0, %v5720
        %v5722 = vpop.f32.mrf.mxu0
        %v5723 = vpop.f32.mrf.mxu0
        %v5724 = vadd.f32 0.0, %v5723
        %v5725 = vpop.f32.mrf.mxu0
        %5726 = vmatprep.mubr.bf16.mxu0 %v4987
        %5727 = vmatmul.mubr.bf16.gmra.mxu0 %v4986
        %v5728 = vpop.f32.mrf.mxu0
        %v5729 = vadd.f32 0.0, %v5728
        %v5730 = vpop.f32.mrf.mxu0
        %v5731 = vpop.f32.mrf.mxu0
        %v5732 = vadd.f32 0.0, %v5731
        %v5733 = vpop.f32.mrf.mxu0
        %5734 = vmatprep.mubr.bf16.mxu0 %v4996
        %5735 = vmatmul.mubr.bf16.gmra.mxu0 %v4995
        %v5736 = vpop.f32.mrf.mxu0
        %v5737 = vadd.f32 0.0, %v5736
        %v5738 = vpop.f32.mrf.mxu0
        %v5739 = vpop.f32.mrf.mxu0
        %v5740 = vadd.f32 0.0, %v5739
        %v5741 = vpop.f32.mrf.mxu0
        %5742 = vmatprep.mubr.bf16.mxu0 %v5005
        %5743 = vmatmul.mubr.bf16.gmra.mxu0 %v5004
        %v5744 = vpop.f32.mrf.mxu0
        %v5745 = vadd.f32 0.0, %v5744
        %v5746 = vpop.f32.mrf.mxu0
        %v5747 = vpop.f32.mrf.mxu0
        %v5748 = vadd.f32 0.0, %v5747
        %v5749 = vpop.f32.mrf.mxu0
        %5750 = vmatprep.mubr.bf16.mxu0 %v5014
        %5751 = vmatmul.mubr.bf16.gmra.mxu0 %v5013
        %v5752 = vpop.f32.mrf.mxu0
        %v5753 = vadd.f32 0.0, %v5752
        %v5754 = vpop.f32.mrf.mxu0
        %v5755 = vpop.f32.mrf.mxu0
        %v5756 = vadd.f32 0.0, %v5755
        %v5757 = vpop.f32.mrf.mxu0
        %5758 = vdwg.mxu0
        %5759 = vmatprep.subr.bf16.mxu0 0
        %5760 = vmatpush1.bf16.msra.mxu0 %v5477
        %5761 = vmatprep.subr.bf16.mxu0 0
        %5762 = vmatpush1.bf16.msra.mxu0 %v5476
        %5763 = vmatprep.subr.bf16.mxu0 0
        %5764 = vmatpush1.bf16.msra.mxu0 %v5475
        %5765 = vmatprep.subr.bf16.mxu0 0
        %5766 = vmatpush1.bf16.msra.mxu0 %v5474
        %5767 = vmatprep.subr.bf16.mxu0 0
        %5768 = vmatpush1.bf16.msra.mxu0 %v5473
        %5769 = vmatprep.subr.bf16.mxu0 0
        %5770 = vmatpush1.bf16.msra.mxu0 %v5472
        %5771 = vmatprep.subr.bf16.mxu0 0
        %5772 = vmatpush1.bf16.msra.mxu0 %v5471
        %5773 = vmatprep.subr.bf16.mxu0 0
        %5774 = vmatpush1.bf16.msra.mxu0 %v5470
        %5775 = vmatprep.subr.bf16.mxu0 0
        %5776 = vmatpush2.bf16.msra.mxu0 %v5485
        %5777 = vmatprep.subr.bf16.mxu0 0
        %5778 = vmatpush2.bf16.msra.mxu0 %v5484
        %5779 = vmatprep.subr.bf16.mxu0 0
        %5780 = vmatpush2.bf16.msra.mxu0 %v5483
        %5781 = vmatprep.subr.bf16.mxu0 0
        %5782 = vmatpush2.bf16.msra.mxu0 %v5482
        %5783 = vmatprep.subr.bf16.mxu0 0
        %5784 = vmatpush2.bf16.msra.mxu0 %v5481
        %5785 = vmatprep.subr.bf16.mxu0 0
        %5786 = vmatpush2.bf16.msra.mxu0 %v5480
        %5787 = vmatprep.subr.bf16.mxu0 0
        %5788 = vmatpush2.bf16.msra.mxu0 %v5479
        %5789 = vmatprep.subr.bf16.mxu0 0
        %5790 = vmatpush2.bf16.msra.mxu0 %v5478
        %5791 = vmatprep.mubr.bf16.mxu0 %v4881
        %5792 = vmatmul.mubr.bf16.gmra.mxu0 %v4880
        %v5793 = vpop.f32.mrf.mxu0
        %v5794 = vadd.f32 %v5633, %v5793
        %v5795 = vpop.f32.mrf.mxu0
        %v5796 = vpop.f32.mrf.mxu0
        %v5797 = vadd.f32 %v5636, %v5796
        %v5798 = vpop.f32.mrf.mxu0
        %5799 = vmatprep.mubr.bf16.mxu0 %v4890
        %5800 = vmatmul.mubr.bf16.gmra.mxu0 %v4889
        %v5801 = vpop.f32.mrf.mxu0
        %v5802 = vadd.f32 %v5641, %v5801
        %v5803 = vpop.f32.mrf.mxu0
        %v5804 = vpop.f32.mrf.mxu0
        %v5805 = vadd.f32 %v5644, %v5804
        %v5806 = vpop.f32.mrf.mxu0
        %5807 = vmatprep.mubr.bf16.mxu0 %v4899
        %5808 = vmatmul.mubr.bf16.gmra.mxu0 %v4898
        %v5809 = vpop.f32.mrf.mxu0
        %v5810 = vadd.f32 %v5649, %v5809
        %v5811 = vpop.f32.mrf.mxu0
        %v5812 = vpop.f32.mrf.mxu0
        %v5813 = vadd.f32 %v5652, %v5812
        %v5814 = vpop.f32.mrf.mxu0
        %5815 = vmatprep.mubr.bf16.mxu0 %v4908
        %5816 = vmatmul.mubr.bf16.gmra.mxu0 %v4907
        %v5817 = vpop.f32.mrf.mxu0
        %v5818 = vadd.f32 %v5657, %v5817
        %v5819 = vpop.f32.mrf.mxu0
        %v5820 = vpop.f32.mrf.mxu0
        %v5821 = vadd.f32 %v5660, %v5820
        %v5822 = vpop.f32.mrf.mxu0
        %5823 = vmatprep.mubr.bf16.mxu0 %v4917
        %5824 = vmatmul.mubr.bf16.gmra.mxu0 %v4916
        %v5825 = vpop.f32.mrf.mxu0
        %v5826 = vadd.f32 %v5665, %v5825
        %v5827 = vpop.f32.mrf.mxu0
        %v5828 = vpop.f32.mrf.mxu0
        %v5829 = vadd.f32 %v5668, %v5828
        %v5830 = vpop.f32.mrf.mxu0
        %5831 = vmatprep.mubr.bf16.mxu0 %v4926
        %5832 = vmatmul.mubr.bf16.gmra.mxu0 %v4925
        %v5833 = vpop.f32.mrf.mxu0
        %v5834 = vadd.f32 %v5673, %v5833
        %v5835 = vpop.f32.mrf.mxu0
        %v5836 = vpop.f32.mrf.mxu0
        %v5837 = vadd.f32 %v5676, %v5836
        %v5838 = vpop.f32.mrf.mxu0
        %5839 = vmatprep.mubr.bf16.mxu0 %v4935
        %5840 = vmatmul.mubr.bf16.gmra.mxu0 %v4934
        %v5841 = vpop.f32.mrf.mxu0
        %v5842 = vadd.f32 %v5681, %v5841
        %v5843 = vpop.f32.mrf.mxu0
        %v5844 = vpop.f32.mrf.mxu0
        %v5845 = vadd.f32 %v5684, %v5844
        %v5846 = vpop.f32.mrf.mxu0
        %5847 = vmatprep.mubr.bf16.mxu0 %v4944
        %5848 = vmatmul.mubr.bf16.gmra.mxu0 %v4943
        %v5849 = vpop.f32.mrf.mxu0
        %v5850 = vadd.f32 %v5689, %v5849
        %v5851 = vpop.f32.mrf.mxu0
        %v5852 = vpop.f32.mrf.mxu0
        %v5853 = vadd.f32 %v5692, %v5852
        %v5854 = vpop.f32.mrf.mxu0
        %5855 = vmatprep.mubr.bf16.mxu0 %v4953
        %5856 = vmatmul.mubr.bf16.gmra.mxu0 %v4952
        %v5857 = vpop.f32.mrf.mxu0
        %v5858 = vadd.f32 %v5697, %v5857
        %v5859 = vpop.f32.mrf.mxu0
        %v5860 = vpop.f32.mrf.mxu0
        %v5861 = vadd.f32 %v5700, %v5860
        %v5862 = vpop.f32.mrf.mxu0
        %5863 = vmatprep.mubr.bf16.mxu0 %v4962
        %5864 = vmatmul.mubr.bf16.gmra.mxu0 %v4961
        %v5865 = vpop.f32.mrf.mxu0
        %v5866 = vadd.f32 %v5705, %v5865
        %v5867 = vpop.f32.mrf.mxu0
        %v5868 = vpop.f32.mrf.mxu0
        %v5869 = vadd.f32 %v5708, %v5868
        %v5870 = vpop.f32.mrf.mxu0
        %5871 = vmatprep.mubr.bf16.mxu0 %v4971
        %5872 = vmatmul.mubr.bf16.gmra.mxu0 %v4970
        %v5873 = vpop.f32.mrf.mxu0
        %v5874 = vadd.f32 %v5713, %v5873
        %v5875 = vpop.f32.mrf.mxu0
        %v5876 = vpop.f32.mrf.mxu0
        %v5877 = vadd.f32 %v5716, %v5876
        %v5878 = vpop.f32.mrf.mxu0
        %5879 = vmatprep.mubr.bf16.mxu0 %v4980
        %5880 = vmatmul.mubr.bf16.gmra.mxu0 %v4979
        %v5881 = vpop.f32.mrf.mxu0
        %v5882 = vadd.f32 %v5721, %v5881
        %v5883 = vpop.f32.mrf.mxu0
        %v5884 = vpop.f32.mrf.mxu0
        %v5885 = vadd.f32 %v5724, %v5884
        %v5886 = vpop.f32.mrf.mxu0
        %5887 = vmatprep.mubr.bf16.mxu0 %v4989
        %5888 = vmatmul.mubr.bf16.gmra.mxu0 %v4988
        %v5889 = vpop.f32.mrf.mxu0
        %v5890 = vadd.f32 %v5729, %v5889
        %v5891 = vpop.f32.mrf.mxu0
        %v5892 = vpop.f32.mrf.mxu0
        %v5893 = vadd.f32 %v5732, %v5892
        %v5894 = vpop.f32.mrf.mxu0
        %5895 = vmatprep.mubr.bf16.mxu0 %v4998
        %5896 = vmatmul.mubr.bf16.gmra.mxu0 %v4997
        %v5897 = vpop.f32.mrf.mxu0
        %v5898 = vadd.f32 %v5737, %v5897
        %v5899 = vpop.f32.mrf.mxu0
        %v5900 = vpop.f32.mrf.mxu0
        %v5901 = vadd.f32 %v5740, %v5900
        %v5902 = vpop.f32.mrf.mxu0
        %5903 = vmatprep.mubr.bf16.mxu0 %v5007
        %5904 = vmatmul.mubr.bf16.gmra.mxu0 %v5006
        %v5905 = vpop.f32.mrf.mxu0
        %v5906 = vadd.f32 %v5745, %v5905
        %v5907 = vpop.f32.mrf.mxu0
        %v5908 = vpop.f32.mrf.mxu0
        %v5909 = vadd.f32 %v5748, %v5908
        %v5910 = vpop.f32.mrf.mxu0
        %5911 = vmatprep.mubr.bf16.mxu0 %v5016
        %5912 = vmatmul.mubr.bf16.gmra.mxu0 %v5015
        %v5913 = vpop.f32.mrf.mxu0
        %v5914 = vadd.f32 %v5753, %v5913
        %v5915 = vpop.f32.mrf.mxu0
        %v5916 = vpop.f32.mrf.mxu0
        %v5917 = vadd.f32 %v5756, %v5916
        %v5918 = vpop.f32.mrf.mxu0
        %5919 = vdwg.mxu0
        %5920 = vmatprep.subr.bf16.mxu0 0
        %5921 = vmatpush1.bf16.msra.mxu0 %v5493
        %5922 = vmatprep.subr.bf16.mxu0 0
        %5923 = vmatpush1.bf16.msra.mxu0 %v5492
        %5924 = vmatprep.subr.bf16.mxu0 0
        %5925 = vmatpush1.bf16.msra.mxu0 %v5491
        %5926 = vmatprep.subr.bf16.mxu0 0
        %5927 = vmatpush1.bf16.msra.mxu0 %v5490
        %5928 = vmatprep.subr.bf16.mxu0 0
        %5929 = vmatpush1.bf16.msra.mxu0 %v5489
        %5930 = vmatprep.subr.bf16.mxu0 0
        %5931 = vmatpush1.bf16.msra.mxu0 %v5488
        %5932 = vmatprep.subr.bf16.mxu0 0
        %5933 = vmatpush1.bf16.msra.mxu0 %v5487
        %5934 = vmatprep.subr.bf16.mxu0 0
        %5935 = vmatpush1.bf16.msra.mxu0 %v5486
        %5936 = vmatprep.subr.bf16.mxu0 0
        %5937 = vmatpush2.bf16.msra.mxu0 %v5501
        %5938 = vmatprep.subr.bf16.mxu0 0
        %5939 = vmatpush2.bf16.msra.mxu0 %v5500
        %5940 = vmatprep.subr.bf16.mxu0 0
        %5941 = vmatpush2.bf16.msra.mxu0 %v5499
        %5942 = vmatprep.subr.bf16.mxu0 0
        %5943 = vmatpush2.bf16.msra.mxu0 %v5498
        %5944 = vmatprep.subr.bf16.mxu0 0
        %5945 = vmatpush2.bf16.msra.mxu0 %v5497
        %5946 = vmatprep.subr.bf16.mxu0 0
        %5947 = vmatpush2.bf16.msra.mxu0 %v5496
        %5948 = vmatprep.subr.bf16.mxu0 0
        %5949 = vmatpush2.bf16.msra.mxu0 %v5495
        %5950 = vmatprep.subr.bf16.mxu0 0
        %5951 = vmatpush2.bf16.msra.mxu0 %v5494
        %5952 = vmatprep.mubr.bf16.mxu0 %v4883
        %5953 = vmatmul.mubr.bf16.gmra.mxu0 %v4882
        %v5954 = vpop.f32.mrf.mxu0
        %v5955 = vadd.f32 %v5794, %v5954
        %v5956 = vpop.f32.mrf.mxu0
        %v5957 = vpop.f32.mrf.mxu0
        %v5958 = vadd.f32 %v5797, %v5957
        %v5959 = vpop.f32.mrf.mxu0
        %5960 = vmatprep.mubr.bf16.mxu0 %v4892
        %5961 = vmatmul.mubr.bf16.gmra.mxu0 %v4891
        %v5962 = vpop.f32.mrf.mxu0
        %v5963 = vadd.f32 %v5802, %v5962
        %v5964 = vpop.f32.mrf.mxu0
        %v5965 = vpop.f32.mrf.mxu0
        %v5966 = vadd.f32 %v5805, %v5965
        %v5967 = vpop.f32.mrf.mxu0
        %5968 = vmatprep.mubr.bf16.mxu0 %v4901
        %5969 = vmatmul.mubr.bf16.gmra.mxu0 %v4900
        %v5970 = vpop.f32.mrf.mxu0
        %v5971 = vadd.f32 %v5810, %v5970
        %v5972 = vpop.f32.mrf.mxu0
        %v5973 = vpop.f32.mrf.mxu0
        %v5974 = vadd.f32 %v5813, %v5973
        %v5975 = vpop.f32.mrf.mxu0
        %5976 = vmatprep.mubr.bf16.mxu0 %v4910
        %5977 = vmatmul.mubr.bf16.gmra.mxu0 %v4909
        %v5978 = vpop.f32.mrf.mxu0
        %v5979 = vadd.f32 %v5818, %v5978
        %v5980 = vpop.f32.mrf.mxu0
        %v5981 = vpop.f32.mrf.mxu0
        %v5982 = vadd.f32 %v5821, %v5981
        %v5983 = vpop.f32.mrf.mxu0
        %5984 = vmatprep.mubr.bf16.mxu0 %v4919
        %5985 = vmatmul.mubr.bf16.gmra.mxu0 %v4918
        %v5986 = vpop.f32.mrf.mxu0
        %v5987 = vadd.f32 %v5826, %v5986
        %v5988 = vpop.f32.mrf.mxu0
        %v5989 = vpop.f32.mrf.mxu0
        %v5990 = vadd.f32 %v5829, %v5989
        %v5991 = vpop.f32.mrf.mxu0
        %5992 = vmatprep.mubr.bf16.mxu0 %v4928
        %5993 = vmatmul.mubr.bf16.gmra.mxu0 %v4927
        %v5994 = vpop.f32.mrf.mxu0
        %v5995 = vadd.f32 %v5834, %v5994
        %v5996 = vpop.f32.mrf.mxu0
        %v5997 = vpop.f32.mrf.mxu0
        %v5998 = vadd.f32 %v5837, %v5997
        %v5999 = vpop.f32.mrf.mxu0
        %6000 = vmatprep.mubr.bf16.mxu0 %v4937
        %6001 = vmatmul.mubr.bf16.gmra.mxu0 %v4936
        %v6002 = vpop.f32.mrf.mxu0
        %v6003 = vadd.f32 %v5842, %v6002
        %v6004 = vpop.f32.mrf.mxu0
        %v6005 = vpop.f32.mrf.mxu0
        %v6006 = vadd.f32 %v5845, %v6005
        %v6007 = vpop.f32.mrf.mxu0
        %6008 = vmatprep.mubr.bf16.mxu0 %v4946
        %6009 = vmatmul.mubr.bf16.gmra.mxu0 %v4945
        %v6010 = vpop.f32.mrf.mxu0
        %v6011 = vadd.f32 %v5850, %v6010
        %v6012 = vpop.f32.mrf.mxu0
        %v6013 = vpop.f32.mrf.mxu0
        %v6014 = vadd.f32 %v5853, %v6013
        %v6015 = vpop.f32.mrf.mxu0
        %6016 = vmatprep.mubr.bf16.mxu0 %v4955
        %6017 = vmatmul.mubr.bf16.gmra.mxu0 %v4954
        %v6018 = vpop.f32.mrf.mxu0
        %v6019 = vadd.f32 %v5858, %v6018
        %v6020 = vpop.f32.mrf.mxu0
        %v6021 = vpop.f32.mrf.mxu0
        %v6022 = vadd.f32 %v5861, %v6021
        %v6023 = vpop.f32.mrf.mxu0
        %6024 = vmatprep.mubr.bf16.mxu0 %v4964
        %6025 = vmatmul.mubr.bf16.gmra.mxu0 %v4963
        %v6026 = vpop.f32.mrf.mxu0
        %v6027 = vadd.f32 %v5866, %v6026
        %v6028 = vpop.f32.mrf.mxu0
        %v6029 = vpop.f32.mrf.mxu0
        %v6030 = vadd.f32 %v5869, %v6029
        %v6031 = vpop.f32.mrf.mxu0
        %6032 = vmatprep.mubr.bf16.mxu0 %v4973
        %6033 = vmatmul.mubr.bf16.gmra.mxu0 %v4972
        %v6034 = vpop.f32.mrf.mxu0
        %v6035 = vadd.f32 %v5874, %v6034
        %v6036 = vpop.f32.mrf.mxu0
        %v6037 = vpop.f32.mrf.mxu0
        %v6038 = vadd.f32 %v5877, %v6037
        %v6039 = vpop.f32.mrf.mxu0
        %6040 = vmatprep.mubr.bf16.mxu0 %v4982
        %6041 = vmatmul.mubr.bf16.gmra.mxu0 %v4981
        %v6042 = vpop.f32.mrf.mxu0
        %v6043 = vadd.f32 %v5882, %v6042
        %v6044 = vpop.f32.mrf.mxu0
        %v6045 = vpop.f32.mrf.mxu0
        %v6046 = vadd.f32 %v5885, %v6045
        %v6047 = vpop.f32.mrf.mxu0
        %6048 = vmatprep.mubr.bf16.mxu0 %v4991
        %6049 = vmatmul.mubr.bf16.gmra.mxu0 %v4990
        %v6050 = vpop.f32.mrf.mxu0
        %v6051 = vadd.f32 %v5890, %v6050
        %v6052 = vpop.f32.mrf.mxu0
        %v6053 = vpop.f32.mrf.mxu0
        %v6054 = vadd.f32 %v5893, %v6053
        %v6055 = vpop.f32.mrf.mxu0
        %6056 = vmatprep.mubr.bf16.mxu0 %v5000
        %6057 = vmatmul.mubr.bf16.gmra.mxu0 %v4999
        %v6058 = vpop.f32.mrf.mxu0
        %v6059 = vadd.f32 %v5898, %v6058
        %v6060 = vpop.f32.mrf.mxu0
        %v6061 = vpop.f32.mrf.mxu0
        %v6062 = vadd.f32 %v5901, %v6061
        %v6063 = vpop.f32.mrf.mxu0
        %6064 = vmatprep.mubr.bf16.mxu0 %v5009
        %6065 = vmatmul.mubr.bf16.gmra.mxu0 %v5008
        %v6066 = vpop.f32.mrf.mxu0
        %v6067 = vadd.f32 %v5906, %v6066
        %v6068 = vpop.f32.mrf.mxu0
        %v6069 = vpop.f32.mrf.mxu0
        %v6070 = vadd.f32 %v5909, %v6069
        %v6071 = vpop.f32.mrf.mxu0
        %6072 = vmatprep.mubr.bf16.mxu0 %v5018
        %6073 = vmatmul.mubr.bf16.gmra.mxu0 %v5017
        %v6074 = vpop.f32.mrf.mxu0
        %v6075 = vadd.f32 %v5914, %v6074
        %v6076 = vpop.f32.mrf.mxu0
        %v6077 = vpop.f32.mrf.mxu0
        %v6078 = vadd.f32 %v5917, %v6077
        %v6079 = vpop.f32.mrf.mxu0
        %6080 = vdwg.mxu0
        %6081 = vmatprep.subr.bf16.mxu0 0
        %6082 = vmatpush1.bf16.msra.mxu0 %v5509
        %6083 = vmatprep.subr.bf16.mxu0 0
        %6084 = vmatpush1.bf16.msra.mxu0 %v5508
        %6085 = vmatprep.subr.bf16.mxu0 0
        %6086 = vmatpush1.bf16.msra.mxu0 %v5507
        %6087 = vmatprep.subr.bf16.mxu0 0
        %6088 = vmatpush1.bf16.msra.mxu0 %v5506
        %6089 = vmatprep.subr.bf16.mxu0 0
        %6090 = vmatpush1.bf16.msra.mxu0 %v5505
        %6091 = vmatprep.subr.bf16.mxu0 0
        %6092 = vmatpush1.bf16.msra.mxu0 %v5504
        %6093 = vmatprep.subr.bf16.mxu0 0
        %6094 = vmatpush1.bf16.msra.mxu0 %v5503
        %6095 = vmatprep.subr.bf16.mxu0 0
        %6096 = vmatpush1.bf16.msra.mxu0 %v5502
        %6097 = vmatprep.subr.bf16.mxu0 0
        %6098 = vmatpush2.bf16.msra.mxu0 %v5517
        %6099 = vmatprep.subr.bf16.mxu0 0
        %6100 = vmatpush2.bf16.msra.mxu0 %v5516
        %6101 = vmatprep.subr.bf16.mxu0 0
        %6102 = vmatpush2.bf16.msra.mxu0 %v5515
        %6103 = vmatprep.subr.bf16.mxu0 0
        %6104 = vmatpush2.bf16.msra.mxu0 %v5514
        %6105 = vmatprep.subr.bf16.mxu0 0
        %6106 = vmatpush2.bf16.msra.mxu0 %v5513
        %6107 = vmatprep.subr.bf16.mxu0 0
        %6108 = vmatpush2.bf16.msra.mxu0 %v5512
        %6109 = vmatprep.subr.bf16.mxu0 0
        %6110 = vmatpush2.bf16.msra.mxu0 %v5511
        %6111 = vmatprep.subr.bf16.mxu0 0
        %6112 = vmatpush2.bf16.msra.mxu0 %v5510
        %6113 = vmatprep.mubr.bf16.mxu0 %v4885
        %6114 = vmatmul.mubr.bf16.gmra.mxu0 %v4884
        %v6115 = vpop.f32.mrf.mxu0
        %v6116 = vadd.f32 %v5955, %v6115
        %v6117 = vpop.f32.mrf.mxu0
        %v6118 = vpop.f32.mrf.mxu0
        %v6119 = vadd.f32 %v5958, %v6118
        %v6120 = vpop.f32.mrf.mxu0
        %6121 = vmatprep.mubr.bf16.mxu0 %v4894
        %6122 = vmatmul.mubr.bf16.gmra.mxu0 %v4893
        %v6123 = vpop.f32.mrf.mxu0
        %v6124 = vadd.f32 %v5963, %v6123
        %v6125 = vpop.f32.mrf.mxu0
        %v6126 = vpop.f32.mrf.mxu0
        %v6127 = vadd.f32 %v5966, %v6126
        %v6128 = vpop.f32.mrf.mxu0
        %6129 = vmatprep.mubr.bf16.mxu0 %v4903
        %6130 = vmatmul.mubr.bf16.gmra.mxu0 %v4902
        %v6131 = vpop.f32.mrf.mxu0
        %v6132 = vadd.f32 %v5971, %v6131
        %v6133 = vpop.f32.mrf.mxu0
        %v6134 = vpop.f32.mrf.mxu0
        %v6135 = vadd.f32 %v5974, %v6134
        %v6136 = vpop.f32.mrf.mxu0
        %6137 = vmatprep.mubr.bf16.mxu0 %v4912
        %6138 = vmatmul.mubr.bf16.gmra.mxu0 %v4911
        %v6139 = vpop.f32.mrf.mxu0
        %v6140 = vadd.f32 %v5979, %v6139
        %v6141 = vpop.f32.mrf.mxu0
        %v6142 = vpop.f32.mrf.mxu0
        %v6143 = vadd.f32 %v5982, %v6142
        %v6144 = vpop.f32.mrf.mxu0
        %6145 = vmatprep.mubr.bf16.mxu0 %v4921
        %6146 = vmatmul.mubr.bf16.gmra.mxu0 %v4920
        %v6147 = vpop.f32.mrf.mxu0
        %v6148 = vadd.f32 %v5987, %v6147
        %v6149 = vpop.f32.mrf.mxu0
        %v6150 = vpop.f32.mrf.mxu0
        %v6151 = vadd.f32 %v5990, %v6150
        %v6152 = vpop.f32.mrf.mxu0
        %6153 = vmatprep.mubr.bf16.mxu0 %v4930
        %6154 = vmatmul.mubr.bf16.gmra.mxu0 %v4929
        %v6155 = vpop.f32.mrf.mxu0
        %v6156 = vadd.f32 %v5995, %v6155
        %v6157 = vpop.f32.mrf.mxu0
        %v6158 = vpop.f32.mrf.mxu0
        %v6159 = vadd.f32 %v5998, %v6158
        %v6160 = vpop.f32.mrf.mxu0
        %6161 = vmatprep.mubr.bf16.mxu0 %v4939
        %6162 = vmatmul.mubr.bf16.gmra.mxu0 %v4938
        %v6163 = vpop.f32.mrf.mxu0
        %v6164 = vadd.f32 %v6003, %v6163
        %v6165 = vpop.f32.mrf.mxu0
        %v6166 = vpop.f32.mrf.mxu0
        %v6167 = vadd.f32 %v6006, %v6166
        %v6168 = vpop.f32.mrf.mxu0
        %6169 = vmatprep.mubr.bf16.mxu0 %v4948
        %6170 = vmatmul.mubr.bf16.gmra.mxu0 %v4947
        %v6171 = vpop.f32.mrf.mxu0
        %v6172 = vadd.f32 %v6011, %v6171
        %v6173 = vpop.f32.mrf.mxu0
        %v6174 = vpop.f32.mrf.mxu0
        %v6175 = vadd.f32 %v6014, %v6174
        %v6176 = vpop.f32.mrf.mxu0
        %6177 = vmatprep.mubr.bf16.mxu0 %v4957
        %6178 = vmatmul.mubr.bf16.gmra.mxu0 %v4956
        %v6179 = vpop.f32.mrf.mxu0
        %v6180 = vadd.f32 %v6019, %v6179
        %v6181 = vpop.f32.mrf.mxu0
        %v6182 = vpop.f32.mrf.mxu0
        %v6183 = vadd.f32 %v6022, %v6182
        %v6184 = vpop.f32.mrf.mxu0
        %6185 = vmatprep.mubr.bf16.mxu0 %v4966
        %6186 = vmatmul.mubr.bf16.gmra.mxu0 %v4965
        %v6187 = vpop.f32.mrf.mxu0
        %v6188 = vadd.f32 %v6027, %v6187
        %v6189 = vpop.f32.mrf.mxu0
        %v6190 = vpop.f32.mrf.mxu0
        %v6191 = vadd.f32 %v6030, %v6190
        %v6192 = vpop.f32.mrf.mxu0
        %6193 = vmatprep.mubr.bf16.mxu0 %v4975
        %6194 = vmatmul.mubr.bf16.gmra.mxu0 %v4974
        %v6195 = vpop.f32.mrf.mxu0
        %v6196 = vadd.f32 %v6035, %v6195
        %v6197 = vpop.f32.mrf.mxu0
        %v6198 = vpop.f32.mrf.mxu0
        %v6199 = vadd.f32 %v6038, %v6198
        %v6200 = vpop.f32.mrf.mxu0
        %6201 = vmatprep.mubr.bf16.mxu0 %v4984
        %6202 = vmatmul.mubr.bf16.gmra.mxu0 %v4983
        %v6203 = vpop.f32.mrf.mxu0
        %v6204 = vadd.f32 %v6043, %v6203
        %v6205 = vpop.f32.mrf.mxu0
        %v6206 = vpop.f32.mrf.mxu0
        %v6207 = vadd.f32 %v6046, %v6206
        %v6208 = vpop.f32.mrf.mxu0
        %6209 = vmatprep.mubr.bf16.mxu0 %v4993
        %6210 = vmatmul.mubr.bf16.gmra.mxu0 %v4992
        %v6211 = vpop.f32.mrf.mxu0
        %v6212 = vadd.f32 %v6051, %v6211
        %v6213 = vpop.f32.mrf.mxu0
        %v6214 = vpop.f32.mrf.mxu0
        %v6215 = vadd.f32 %v6054, %v6214
        %v6216 = vpop.f32.mrf.mxu0
        %6217 = vmatprep.mubr.bf16.mxu0 %v5002
        %6218 = vmatmul.mubr.bf16.gmra.mxu0 %v5001
        %v6219 = vpop.f32.mrf.mxu0
        %v6220 = vadd.f32 %v6059, %v6219
        %v6221 = vpop.f32.mrf.mxu0
        %v6222 = vpop.f32.mrf.mxu0
        %v6223 = vadd.f32 %v6062, %v6222
        %v6224 = vpop.f32.mrf.mxu0
        %6225 = vmatprep.mubr.bf16.mxu0 %v5011
        %6226 = vmatmul.mubr.bf16.gmra.mxu0 %v5010
        %v6227 = vpop.f32.mrf.mxu0
        %v6228 = vadd.f32 %v6067, %v6227
        %v6229 = vpop.f32.mrf.mxu0
        %v6230 = vpop.f32.mrf.mxu0
        %v6231 = vadd.f32 %v6070, %v6230
        %v6232 = vpop.f32.mrf.mxu0
        %6233 = vmatprep.mubr.bf16.mxu0 %v5020
        %6234 = vmatmul.mubr.bf16.gmra.mxu0 %v5019
        %v6235 = vpop.f32.mrf.mxu0
        %v6236 = vadd.f32 %v6075, %v6235
        %v6237 = vpop.f32.mrf.mxu0
        %v6238 = vpop.f32.mrf.mxu0
        %v6239 = vadd.f32 %v6078, %v6238
        %v6240 = vpop.f32.mrf.mxu0
        %6241 = vdwg.mxu0
        %6242 = vmatprep.subr.bf16.mxu0 0
        %6243 = vmatpush1.bf16.msra.mxu0 %v5525
        %6244 = vmatprep.subr.bf16.mxu0 0
        %6245 = vmatpush1.bf16.msra.mxu0 %v5524
        %6246 = vmatprep.subr.bf16.mxu0 0
        %6247 = vmatpush1.bf16.msra.mxu0 %v5523
        %6248 = vmatprep.subr.bf16.mxu0 0
        %6249 = vmatpush1.bf16.msra.mxu0 %v5522
        %6250 = vmatprep.subr.bf16.mxu0 0
        %6251 = vmatpush1.bf16.msra.mxu0 %v5521
        %6252 = vmatprep.subr.bf16.mxu0 0
        %6253 = vmatpush1.bf16.msra.mxu0 %v5520
        %6254 = vmatprep.subr.bf16.mxu0 0
        %6255 = vmatpush1.bf16.msra.mxu0 %v5519
        %6256 = vmatprep.subr.bf16.mxu0 0
        %6257 = vmatpush1.bf16.msra.mxu0 %v5518
        %6258 = vmatprep.subr.bf16.mxu0 0
        %6259 = vmatpush2.bf16.msra.mxu0 0
        %6260 = vmatprep.subr.bf16.mxu0 0
        %6261 = vmatpush2.bf16.msra.mxu0 0
        %6262 = vmatprep.subr.bf16.mxu0 0
        %6263 = vmatpush2.bf16.msra.mxu0 0
        %6264 = vmatprep.subr.bf16.mxu0 0
        %6265 = vmatpush2.bf16.msra.mxu0 0
        %6266 = vmatprep.subr.bf16.mxu0 0
        %6267 = vmatpush2.bf16.msra.mxu0 0
        %6268 = vmatprep.subr.bf16.mxu0 0
        %6269 = vmatpush2.bf16.msra.mxu0 0
        %6270 = vmatprep.subr.bf16.mxu0 0
        %6271 = vmatpush2.bf16.msra.mxu0 0
        %6272 = vmatprep.subr.bf16.mxu0 0
        %6273 = vmatpush2.bf16.msra.mxu0 0
        %6274 = vmatprep.mubr.bf16.mxu0 0
        %6275 = vmatmul.mubr.bf16.gmra.mxu0 %v4886
        %v6276 = vpop.f32.mrf.mxu0
        %v6277 = vadd.f32 %v6116, %v6276
        %v6278 = vpop.f32.mrf.mxu0
        %v6279 = vpop.f32.mrf.mxu0
        %v6280 = vadd.f32 %v6119, %v6279
        %v6281 = vpop.f32.mrf.mxu0
        %6282 = vmatprep.mubr.bf16.mxu0 0
        %6283 = vmatmul.mubr.bf16.gmra.mxu0 %v4895
        %v6284 = vpop.f32.mrf.mxu0
        %v6285 = vadd.f32 %v6124, %v6284
        %v6286 = vpop.f32.mrf.mxu0
        %v6287 = vpop.f32.mrf.mxu0
        %v6288 = vadd.f32 %v6127, %v6287
        %v6289 = vpop.f32.mrf.mxu0
        %6290 = vmatprep.mubr.bf16.mxu0 0
        %6291 = vmatmul.mubr.bf16.gmra.mxu0 %v4904
        %v6292 = vpop.f32.mrf.mxu0
        %v6293 = vadd.f32 %v6132, %v6292
        %v6294 = vpop.f32.mrf.mxu0
        %v6295 = vpop.f32.mrf.mxu0
        %v6296 = vadd.f32 %v6135, %v6295
        %v6297 = vpop.f32.mrf.mxu0
        %6298 = vmatprep.mubr.bf16.mxu0 0
        %6299 = vmatmul.mubr.bf16.gmra.mxu0 %v4913
        %v6300 = vpop.f32.mrf.mxu0
        %v6301 = vadd.f32 %v6140, %v6300
        %v6302 = vpop.f32.mrf.mxu0
        %v6303 = vpop.f32.mrf.mxu0
        %v6304 = vadd.f32 %v6143, %v6303
        %v6305 = vpop.f32.mrf.mxu0
        %6306 = vmatprep.mubr.bf16.mxu0 0
        %6307 = vmatmul.mubr.bf16.gmra.mxu0 %v4922
        %v6308 = vpop.f32.mrf.mxu0
        %v6309 = vadd.f32 %v6148, %v6308
        %v6310 = vpop.f32.mrf.mxu0
        %v6311 = vpop.f32.mrf.mxu0
        %v6312 = vadd.f32 %v6151, %v6311
        %v6313 = vpop.f32.mrf.mxu0
        %6314 = vmatprep.mubr.bf16.mxu0 0
        %6315 = vmatmul.mubr.bf16.gmra.mxu0 %v4931
        %v6316 = vpop.f32.mrf.mxu0
        %v6317 = vadd.f32 %v6156, %v6316
        %v6318 = vpop.f32.mrf.mxu0
        %v6319 = vpop.f32.mrf.mxu0
        %v6320 = vadd.f32 %v6159, %v6319
        %v6321 = vpop.f32.mrf.mxu0
        %6322 = vmatprep.mubr.bf16.mxu0 0
        %6323 = vmatmul.mubr.bf16.gmra.mxu0 %v4940
        %v6324 = vpop.f32.mrf.mxu0
        %v6325 = vadd.f32 %v6164, %v6324
        %v6326 = vpop.f32.mrf.mxu0
        %v6327 = vpop.f32.mrf.mxu0
        %v6328 = vadd.f32 %v6167, %v6327
        %v6329 = vpop.f32.mrf.mxu0
        %6330 = vmatprep.mubr.bf16.mxu0 0
        %6331 = vmatmul.mubr.bf16.gmra.mxu0 %v4949
        %v6332 = vpop.f32.mrf.mxu0
        %v6333 = vadd.f32 %v6172, %v6332
        %v6334 = vpop.f32.mrf.mxu0
        %v6335 = vpop.f32.mrf.mxu0
        %v6336 = vadd.f32 %v6175, %v6335
        %v6337 = vpop.f32.mrf.mxu0
        %6338 = vmatprep.mubr.bf16.mxu0 0
        %6339 = vmatmul.mubr.bf16.gmra.mxu0 %v4958
        %v6340 = vpop.f32.mrf.mxu0
        %v6341 = vadd.f32 %v6180, %v6340
        %v6342 = vpop.f32.mrf.mxu0
        %v6343 = vpop.f32.mrf.mxu0
        %v6344 = vadd.f32 %v6183, %v6343
        %v6345 = vpop.f32.mrf.mxu0
        %6346 = vmatprep.mubr.bf16.mxu0 0
        %6347 = vmatmul.mubr.bf16.gmra.mxu0 %v4967
        %v6348 = vpop.f32.mrf.mxu0
        %v6349 = vadd.f32 %v6188, %v6348
        %v6350 = vpop.f32.mrf.mxu0
        %v6351 = vpop.f32.mrf.mxu0
        %v6352 = vadd.f32 %v6191, %v6351
        %v6353 = vpop.f32.mrf.mxu0
        %6354 = vmatprep.mubr.bf16.mxu0 0
        %6355 = vmatmul.mubr.bf16.gmra.mxu0 %v4976
        %v6356 = vpop.f32.mrf.mxu0
        %v6357 = vadd.f32 %v6196, %v6356
        %v6358 = vpop.f32.mrf.mxu0
        %v6359 = vpop.f32.mrf.mxu0
        %v6360 = vadd.f32 %v6199, %v6359
        %v6361 = vpop.f32.mrf.mxu0
        %6362 = vmatprep.mubr.bf16.mxu0 0
        %6363 = vmatmul.mubr.bf16.gmra.mxu0 %v4985
        %v6364 = vpop.f32.mrf.mxu0
        %v6365 = vadd.f32 %v6204, %v6364
        %v6366 = vpop.f32.mrf.mxu0
        %v6367 = vpop.f32.mrf.mxu0
        %v6368 = vadd.f32 %v6207, %v6367
        %v6369 = vpop.f32.mrf.mxu0
        %6370 = vmatprep.mubr.bf16.mxu0 0
        %6371 = vmatmul.mubr.bf16.gmra.mxu0 %v4994
        %v6372 = vpop.f32.mrf.mxu0
        %v6373 = vadd.f32 %v6212, %v6372
        %v6374 = vpop.f32.mrf.mxu0
        %v6375 = vpop.f32.mrf.mxu0
        %v6376 = vadd.f32 %v6215, %v6375
        %v6377 = vpop.f32.mrf.mxu0
        %6378 = vmatprep.mubr.bf16.mxu0 0
        %6379 = vmatmul.mubr.bf16.gmra.mxu0 %v5003
        %v6380 = vpop.f32.mrf.mxu0
        %v6381 = vadd.f32 %v6220, %v6380
        %v6382 = vpop.f32.mrf.mxu0
        %v6383 = vpop.f32.mrf.mxu0
        %v6384 = vadd.f32 %v6223, %v6383
        %v6385 = vpop.f32.mrf.mxu0
        %6386 = vmatprep.mubr.bf16.mxu0 0
        %6387 = vmatmul.mubr.bf16.gmra.mxu0 %v5012
        %v6388 = vpop.f32.mrf.mxu0
        %v6389 = vadd.f32 %v6228, %v6388
        %v6390 = vpop.f32.mrf.mxu0
        %v6391 = vpop.f32.mrf.mxu0
        %v6392 = vadd.f32 %v6231, %v6391
        %v6393 = vpop.f32.mrf.mxu0
        %6394 = vmatprep.mubr.bf16.mxu0 0
        %6395 = vmatmul.mubr.bf16.gmra.mxu0 %v5021
        %v6396 = vpop.f32.mrf.mxu0
        %v6397 = vadd.f32 %v6236, %v6396
        %v6398 = vpop.f32.mrf.mxu0
        %v6399 = vpop.f32.mrf.mxu0
        %v6400 = vadd.f32 %v6239, %v6399
        %v6401 = vpop.f32.mrf.mxu0
        %6402 = vdwg.mxu0
        %v6403 = vpack.c.bf16 %v6280, %v6277
        %v6404 = vpack.c.bf16 %v6288, %v6285
        %v6405 = vpack.c.bf16 %v6296, %v6293
        %v6406 = vpack.c.bf16 %v6304, %v6301
        %v6407 = vpack.c.bf16 %v6312, %v6309
        %v6408 = vpack.c.bf16 %v6320, %v6317
        %v6409 = vpack.c.bf16 %v6328, %v6325
        %v6410 = vpack.c.bf16 %v6336, %v6333
        %v6411 = vpack.c.bf16 %v6344, %v6341
        %v6412 = vpack.c.bf16 %v6352, %v6349
        %v6413 = vpack.c.bf16 %v6360, %v6357
        %v6414 = vpack.c.bf16 %v6368, %v6365
        %v6415 = vpack.c.bf16 %v6376, %v6373
        %v6416 = vpack.c.bf16 %v6384, %v6381
        %v6417 = vpack.c.bf16 %v6392, %v6389
        %v6418 = vpack.c.bf16 %v6400, %v6397
        %v6435 = vunpack.c.l.b16 %v6403
        %v6436 = vunpack.c.h.b16 %v6403
        %v6437 = vunpack.c.l.b16 %v6404
        %v6438 = vunpack.c.h.b16 %v6404
        %v6439 = vunpack.c.l.b16 %v6405
        %v6440 = vunpack.c.h.b16 %v6405
        %v6441 = vunpack.c.l.b16 %v6406
        %v6442 = vunpack.c.h.b16 %v6406
        %v6443 = vunpack.c.l.b16 %v6407
        %v6444 = vunpack.c.h.b16 %v6407
        %v6445 = vunpack.c.l.b16 %v6408
        %v6446 = vunpack.c.h.b16 %v6408
        %v6447 = vunpack.c.l.b16 %v6409
        %v6448 = vunpack.c.h.b16 %v6409
        %v6449 = vunpack.c.l.b16 %v6410
        %v6450 = vunpack.c.h.b16 %v6410
        %v6451 = vunpack.c.l.b16 %v6411
        %v6452 = vunpack.c.h.b16 %v6411
        %v6453 = vunpack.c.l.b16 %v6412
        %v6454 = vunpack.c.h.b16 %v6412
        %v6455 = vunpack.c.l.b16 %v6413
        %v6456 = vunpack.c.h.b16 %v6413
        %v6457 = vunpack.c.l.b16 %v6414
        %v6458 = vunpack.c.h.b16 %v6414
        %v6459 = vunpack.c.l.b16 %v6415
        %v6460 = vunpack.c.h.b16 %v6415
        %v6461 = vunpack.c.l.b16 %v6416
        %v6462 = vunpack.c.h.b16 %v6416
        %v6463 = vunpack.c.l.b16 %v6417
        %v6464 = vunpack.c.h.b16 %v6417
        %v6465 = vunpack.c.l.b16 %v6418
        %v6466 = vunpack.c.h.b16 %v6418
        %v6467 = vpack.c.b16 %v6435, %v6435
        %v6468 = vpack.c.b16 %v6436, %v6436
        %v6469 = vpack.c.b16 %v6437, %v6437
        %v6470 = vpack.c.b16 %v6438, %v6438
        %v6471 = vpack.c.b16 %v6439, %v6439
        %v6472 = vpack.c.b16 %v6440, %v6440
        %v6473 = vpack.c.b16 %v6441, %v6441
        %v6474 = vpack.c.b16 %v6442, %v6442
        %v6475 = vpack.c.b16 %v6443, %v6443
        %v6476 = vpack.c.b16 %v6444, %v6444
        %v6477 = vpack.c.b16 %v6445, %v6445
        %v6478 = vpack.c.b16 %v6446, %v6446
        %v6479 = vpack.c.b16 %v6447, %v6447
        %v6480 = vpack.c.b16 %v6448, %v6448
        %v6481 = vpack.c.b16 %v6449, %v6449
        %v6482 = vpack.c.b16 %v6450, %v6450
        %v6483 = vpack.c.b16 %v6451, %v6451
        %v6484 = vpack.c.b16 %v6452, %v6452
        %v6485 = vpack.c.b16 %v6453, %v6453
        %v6486 = vpack.c.b16 %v6454, %v6454
        %v6487 = vpack.c.b16 %v6455, %v6455
        %v6488 = vpack.c.b16 %v6456, %v6456
        %v6489 = vpack.c.b16 %v6457, %v6457
        %v6490 = vpack.c.b16 %v6458, %v6458
        %v6491 = vpack.c.b16 %v6459, %v6459
        %v6492 = vpack.c.b16 %v6460, %v6460
        %v6493 = vpack.c.b16 %v6461, %v6461
        %v6494 = vpack.c.b16 %v6462, %v6462
        %v6495 = vpack.c.b16 %v6463, %v6463
        %v6496 = vpack.c.b16 %v6464, %v6464
        %v6497 = vpack.c.b16 %v6465, %v6465
        %v6498 = vpack.c.b16 %v6466, %v6466
        %6531 = vst [vmem:[%s441] sm:$0xf] %v6467
        %6532 = vst [vmem:[%s441 + $0x4] sm:$0xf] %v6468
        %6533 = vst [vmem:[%s441 + $0x8] sm:$0xf] %v6469
        %6534 = vst [vmem:[%s441 + $0xc] sm:$0xf] %v6470
        %6535 = vst [vmem:[%s441 + $0x10] sm:$0xf] %v6471
        %6536 = vst [vmem:[%s441 + $0x14] sm:$0xf] %v6472
        %6537 = vst [vmem:[%s441 + $0x18] sm:$0xf] %v6473
        %6538 = vst [vmem:[%s441 + $0x1c] sm:$0xf] %v6474
        %6539 = vst [vmem:[%s441 + $0x20] sm:$0xf] %v6475
        %6540 = vst [vmem:[%s441 + $0x24] sm:$0xf] %v6476
        %6541 = vst [vmem:[%s441 + $0x28] sm:$0xf] %v6477
        %6542 = vst [vmem:[%s441 + $0x2c] sm:$0xf] %v6478
        %6543 = vst [vmem:[%s441 + $0x30] sm:$0xf] %v6479
        %6544 = vst [vmem:[%s441 + $0x34] sm:$0xf] %v6480
        %6545 = vst [vmem:[%s441 + $0x38] sm:$0xf] %v6481
        %6546 = vst [vmem:[%s441 + $0x3c] sm:$0xf] %v6482
        %6547 = vst [vmem:[%s441 + $0x40] sm:$0xf] %v6483
        %6548 = vst [vmem:[%s441 + $0x44] sm:$0xf] %v6484
        %6549 = vst [vmem:[%s441 + $0x48] sm:$0xf] %v6485
        %6550 = vst [vmem:[%s441 + $0x4c] sm:$0xf] %v6486
        %6551 = vst [vmem:[%s441 + $0x50] sm:$0xf] %v6487
        %6552 = vst [vmem:[%s441 + $0x54] sm:$0xf] %v6488
        %6553 = vst [vmem:[%s441 + $0x58] sm:$0xf] %v6489
        %6554 = vst [vmem:[%s441 + $0x5c] sm:$0xf] %v6490
        %6555 = vst [vmem:[%s441 + $0x60] sm:$0xf] %v6491
        %6556 = vst [vmem:[%s441 + $0x64] sm:$0xf] %v6492
        %6557 = vst [vmem:[%s441 + $0x68] sm:$0xf] %v6493
        %6558 = vst [vmem:[%s441 + $0x6c] sm:$0xf] %v6494
        %6559 = vst [vmem:[%s441 + $0x70] sm:$0xf] %v6495
        %6560 = vst [vmem:[%s441 + $0x74] sm:$0xf] %v6496
        %6561 = vst [vmem:[%s441 + $0x78] sm:$0xf] %v6497
        %6562 = vst [vmem:[%s441 + $0x7c] sm:$0xf] %v6498
        %s6563 = sand.u32 %s178, 1
        %s6564 = sand.u32 %s178, 1
        %s6565 = smul.addr %s6564, 128
        %s6566 = scalar_lea.vmem [#allocation5], %s6565
        // Predicated region
        $region90: #{bottleneck_forward.1} parent=84 // pred_check
          %p6567 = pneg %p188
        $region91: #{bottleneck_forward.1} parent=84 // pred_check_branch
          %6569 = sbr.rel (%p6567) target = $region93
        $region92: #{bottleneck_forward.1} parent=84 // pred_region
          %s6570 = smul.addr %s18, 64
          %s6571 = smul.addr %s6570, 4
          %s6572 = scalar_lea.vmem %s7, %s6571
          // Predicated region
          $region94: #{bottleneck_forward.1} parent=92 // pred_check
            _
          $region95: #{bottleneck_forward.1} parent=92 // pred_check_branch
            %6574 = sbr.rel (0) target = $region97
          $region96: #{bottleneck_forward.1} parent=92 // pred_region
            // Predicated region
            $region98: #{bottleneck_forward.1} parent=96 // pred_check
              _
            $region99: #{bottleneck_forward.1} parent=96 // pred_check_branch
              %6576 = sbr.rel target = $region101
            $region100: #{bottleneck_forward.1} parent=96 // pred_region
              // Predicated region
              $region113: #{bottleneck_forward.1} parent=100 // pred_check
                _
              $region114: #{bottleneck_forward.1} parent=100 // pred_check_branch
                %6654 = sbr.rel (0) target = $region116
              $region115: #{bottleneck_forward.1} parent=100 // pred_region
                loop: start=0, step=1, limit=1
                $region117: #{bottleneck_forward.1} parent=115 // loop_pre_header
                  _
                $region118: #{bottleneck_forward.1} parent=115 // loop_header
                  %s6656 = sphi 0, %s6660
                  %p6657 = scmp.ge.s32.totalorder %s6656, 1
                  %s6661 = sphi %s6566, %s6566
                  %s6662 = sphi %s6572, %s6572
                $region119: #{bottleneck_forward.1} parent=115 // loop_header_branch
                  %6659 = sbr.rel (%p6657) target = $region123
                $region120: #{bottleneck_forward.1} parent=115 // loop_body
                  _
                $region121: #{bottleneck_forward.1} parent=115 // loop_footer
                  %s6660 = sadd.s32 1, %s6656
                $region122: #{bottleneck_forward.1} parent=115 // loop_footer_branch
                  %6655 = sbr.rel target = $region118
                $region123: #{bottleneck_forward.1} parent=115 // loop_exit
                  _
                %s6664 = ssub.s32 16, 1
                loop: start=0, step=1, limit=1
                $region124: #{bottleneck_forward.1} parent=115 // loop_pre_header
                  _
                $region125: #{bottleneck_forward.1} parent=115 // loop_header
                  %s6666 = sphi 0, %s6670
                  %p6667 = scmp.ge.s32.totalorder %s6666, 1
                  %s6671 = sphi %s6566, %s6566
                  %s6672 = sphi %s6572, %s6572
                $region126: #{bottleneck_forward.1} parent=115 // loop_header_branch
                  %6669 = sbr.rel (%p6667) target = $region130
                $region127: #{bottleneck_forward.1} parent=115 // loop_body
                  %v6673 = vld [vmem:[%s6671] sm:%s6664]
                  %6674 = vst [vmem:[%s6672] sm:%s6664] %v6673
                  %v6675 = vld [vmem:[%s6671 + $0x4] sm:%s6664]
                  %6676 = vst [vmem:[%s6672 + $0x8] sm:%s6664] %v6675
                  %v6677 = vld [vmem:[%s6671 + $0x8] sm:%s6664]
                  %6678 = vst [vmem:[%s6672 + $0x10] sm:%s6664] %v6677
                  %v6679 = vld [vmem:[%s6671 + $0xc] sm:%s6664]
                  %6680 = vst [vmem:[%s6672 + $0x18] sm:%s6664] %v6679
                  %v6681 = vld [vmem:[%s6671 + $0x10] sm:%s6664]
                  %6682 = vst [vmem:[%s6672 + $0x20] sm:%s6664] %v6681
                  %v6683 = vld [vmem:[%s6671 + $0x14] sm:%s6664]
                  %6684 = vst [vmem:[%s6672 + $0x28] sm:%s6664] %v6683
                  %v6685 = vld [vmem:[%s6671 + $0x18] sm:%s6664]
                  %6686 = vst [vmem:[%s6672 + $0x30] sm:%s6664] %v6685
                  %v6687 = vld [vmem:[%s6671 + $0x1c] sm:%s6664]
                  %6688 = vst [vmem:[%s6672 + $0x38] sm:%s6664] %v6687
                  %v6689 = vld [vmem:[%s6671 + $0x20] sm:%s6664]
                  %6690 = vst [vmem:[%s6672 + $0x40] sm:%s6664] %v6689
                  %v6691 = vld [vmem:[%s6671 + $0x24] sm:%s6664]
                  %6692 = vst [vmem:[%s6672 + $0x48] sm:%s6664] %v6691
                  %v6693 = vld [vmem:[%s6671 + $0x28] sm:%s6664]
                  %6694 = vst [vmem:[%s6672 + $0x50] sm:%s6664] %v6693
                  %v6695 = vld [vmem:[%s6671 + $0x2c] sm:%s6664]
                  %6696 = vst [vmem:[%s6672 + $0x58] sm:%s6664] %v6695
                  %v6697 = vld [vmem:[%s6671 + $0x30] sm:%s6664]
                  %6698 = vst [vmem:[%s6672 + $0x60] sm:%s6664] %v6697
                  %v6699 = vld [vmem:[%s6671 + $0x34] sm:%s6664]
                  %6700 = vst [vmem:[%s6672 + $0x68] sm:%s6664] %v6699
                  %v6701 = vld [vmem:[%s6671 + $0x38] sm:%s6664]
                  %6702 = vst [vmem:[%s6672 + $0x70] sm:%s6664] %v6701
                  %v6703 = vld [vmem:[%s6671 + $0x3c] sm:%s6664]
                  %6704 = vst [vmem:[%s6672 + $0x78] sm:%s6664] %v6703
                  %v6705 = vld [vmem:[%s6671 + $0x40] sm:%s6664]
                  %6706 = vst [vmem:[%s6672 + $0x80] sm:%s6664] %v6705
                  %v6707 = vld [vmem:[%s6671 + $0x44] sm:%s6664]
                  %6708 = vst [vmem:[%s6672 + $0x88] sm:%s6664] %v6707
                  %v6709 = vld [vmem:[%s6671 + $0x48] sm:%s6664]
                  %6710 = vst [vmem:[%s6672 + $0x90] sm:%s6664] %v6709
                  %v6711 = vld [vmem:[%s6671 + $0x4c] sm:%s6664]
                  %6712 = vst [vmem:[%s6672 + $0x98] sm:%s6664] %v6711
                  %v6713 = vld [vmem:[%s6671 + $0x50] sm:%s6664]
                  %6714 = vst [vmem:[%s6672 + $0xa0] sm:%s6664] %v6713
                  %v6715 = vld [vmem:[%s6671 + $0x54] sm:%s6664]
                  %6716 = vst [vmem:[%s6672 + $0xa8] sm:%s6664] %v6715
                  %v6717 = vld [vmem:[%s6671 + $0x58] sm:%s6664]
                  %6718 = vst [vmem:[%s6672 + $0xb0] sm:%s6664] %v6717
                  %v6719 = vld [vmem:[%s6671 + $0x5c] sm:%s6664]
                  %6720 = vst [vmem:[%s6672 + $0xb8] sm:%s6664] %v6719
                  %v6721 = vld [vmem:[%s6671 + $0x60] sm:%s6664]
                  %6722 = vst [vmem:[%s6672 + $0xc0] sm:%s6664] %v6721
                  %v6723 = vld [vmem:[%s6671 + $0x64] sm:%s6664]
                  %6724 = vst [vmem:[%s6672 + $0xc8] sm:%s6664] %v6723
                  %v6725 = vld [vmem:[%s6671 + $0x68] sm:%s6664]
                  %6726 = vst [vmem:[%s6672 + $0xd0] sm:%s6664] %v6725
                  %v6727 = vld [vmem:[%s6671 + $0x6c] sm:%s6664]
                  %6728 = vst [vmem:[%s6672 + $0xd8] sm:%s6664] %v6727
                  %v6729 = vld [vmem:[%s6671 + $0x70] sm:%s6664]
                  %6730 = vst [vmem:[%s6672 + $0xe0] sm:%s6664] %v6729
                  %v6731 = vld [vmem:[%s6671 + $0x74] sm:%s6664]
                  %6732 = vst [vmem:[%s6672 + $0xe8] sm:%s6664] %v6731
                  %v6733 = vld [vmem:[%s6671 + $0x78] sm:%s6664]
                  %6734 = vst [vmem:[%s6672 + $0xf0] sm:%s6664] %v6733
                  %v6735 = vld [vmem:[%s6671 + $0x7c] sm:%s6664]
                  %6736 = vst [vmem:[%s6672 + $0xf8] sm:%s6664] %v6735
                $region128: #{bottleneck_forward.1} parent=115 // loop_footer
                  %s6670 = sadd.s32 1, %s6666
                $region129: #{bottleneck_forward.1} parent=115 // loop_footer_branch
                  %6665 = sbr.rel target = $region125
                $region130: #{bottleneck_forward.1} parent=115 // loop_exit
                  _
              $region116: #{bottleneck_forward.1} parent=100 // pred_fallthru
                _
            $region101: #{bottleneck_forward.1} parent=96 // pred_fallthru
              _
            // Predicated region
            $region102: #{bottleneck_forward.1} parent=96 // pred_check
              _
            $region103: #{bottleneck_forward.1} parent=96 // pred_check_branch
              %6578 = sbr.rel (0) target = $region105
            $region104: #{bottleneck_forward.1} parent=96 // pred_region
              %s6580 = ssub.s32 16, 1
              loop: start=0, step=1, limit=1
              $region106: #{bottleneck_forward.1} parent=104 // loop_pre_header
                _
              $region107: #{bottleneck_forward.1} parent=104 // loop_header
                %s6582 = sphi 0, %s6586
                %p6583 = scmp.ge.s32.totalorder %s6582, 1
                %s6587 = sphi %s6566, %s6566
                %s6588 = sphi %s6572, %s6572
              $region108: #{bottleneck_forward.1} parent=104 // loop_header_branch
                %6585 = sbr.rel (%p6583) target = $region112
              $region109: #{bottleneck_forward.1} parent=104 // loop_body
                %v6589 = vld [vmem:[%s6587] sm:%s6580]
                %6590 = vst [vmem:[%s6588] sm:%s6580] %v6589
                %v6591 = vld [vmem:[%s6587 + $0x4] sm:%s6580]
                %6592 = vst [vmem:[%s6588 + $0x8] sm:%s6580] %v6591
                %v6593 = vld [vmem:[%s6587 + $0x8] sm:%s6580]
                %6594 = vst [vmem:[%s6588 + $0x10] sm:%s6580] %v6593
                %v6595 = vld [vmem:[%s6587 + $0xc] sm:%s6580]
                %6596 = vst [vmem:[%s6588 + $0x18] sm:%s6580] %v6595
                %v6597 = vld [vmem:[%s6587 + $0x10] sm:%s6580]
                %6598 = vst [vmem:[%s6588 + $0x20] sm:%s6580] %v6597
                %v6599 = vld [vmem:[%s6587 + $0x14] sm:%s6580]
                %6600 = vst [vmem:[%s6588 + $0x28] sm:%s6580] %v6599
                %v6601 = vld [vmem:[%s6587 + $0x18] sm:%s6580]
                %6602 = vst [vmem:[%s6588 + $0x30] sm:%s6580] %v6601
                %v6603 = vld [vmem:[%s6587 + $0x1c] sm:%s6580]
                %6604 = vst [vmem:[%s6588 + $0x38] sm:%s6580] %v6603
                %v6605 = vld [vmem:[%s6587 + $0x20] sm:%s6580]
                %6606 = vst [vmem:[%s6588 + $0x40] sm:%s6580] %v6605
                %v6607 = vld [vmem:[%s6587 + $0x24] sm:%s6580]
                %6608 = vst [vmem:[%s6588 + $0x48] sm:%s6580] %v6607
                %v6609 = vld [vmem:[%s6587 + $0x28] sm:%s6580]
                %6610 = vst [vmem:[%s6588 + $0x50] sm:%s6580] %v6609
                %v6611 = vld [vmem:[%s6587 + $0x2c] sm:%s6580]
                %6612 = vst [vmem:[%s6588 + $0x58] sm:%s6580] %v6611
                %v6613 = vld [vmem:[%s6587 + $0x30] sm:%s6580]
                %6614 = vst [vmem:[%s6588 + $0x60] sm:%s6580] %v6613
                %v6615 = vld [vmem:[%s6587 + $0x34] sm:%s6580]
                %6616 = vst [vmem:[%s6588 + $0x68] sm:%s6580] %v6615
                %v6617 = vld [vmem:[%s6587 + $0x38] sm:%s6580]
                %6618 = vst [vmem:[%s6588 + $0x70] sm:%s6580] %v6617
                %v6619 = vld [vmem:[%s6587 + $0x3c] sm:%s6580]
                %6620 = vst [vmem:[%s6588 + $0x78] sm:%s6580] %v6619
                %v6621 = vld [vmem:[%s6587 + $0x40] sm:%s6580]
                %6622 = vst [vmem:[%s6588 + $0x80] sm:%s6580] %v6621
                %v6623 = vld [vmem:[%s6587 + $0x44] sm:%s6580]
                %6624 = vst [vmem:[%s6588 + $0x88] sm:%s6580] %v6623
                %v6625 = vld [vmem:[%s6587 + $0x48] sm:%s6580]
                %6626 = vst [vmem:[%s6588 + $0x90] sm:%s6580] %v6625
                %v6627 = vld [vmem:[%s6587 + $0x4c] sm:%s6580]
                %6628 = vst [vmem:[%s6588 + $0x98] sm:%s6580] %v6627
                %v6629 = vld [vmem:[%s6587 + $0x50] sm:%s6580]
                %6630 = vst [vmem:[%s6588 + $0xa0] sm:%s6580] %v6629
                %v6631 = vld [vmem:[%s6587 + $0x54] sm:%s6580]
                %6632 = vst [vmem:[%s6588 + $0xa8] sm:%s6580] %v6631
                %v6633 = vld [vmem:[%s6587 + $0x58] sm:%s6580]
                %6634 = vst [vmem:[%s6588 + $0xb0] sm:%s6580] %v6633
                %v6635 = vld [vmem:[%s6587 + $0x5c] sm:%s6580]
                %6636 = vst [vmem:[%s6588 + $0xb8] sm:%s6580] %v6635
                %v6637 = vld [vmem:[%s6587 + $0x60] sm:%s6580]
                %6638 = vst [vmem:[%s6588 + $0xc0] sm:%s6580] %v6637
                %v6639 = vld [vmem:[%s6587 + $0x64] sm:%s6580]
                %6640 = vst [vmem:[%s6588 + $0xc8] sm:%s6580] %v6639
                %v6641 = vld [vmem:[%s6587 + $0x68] sm:%s6580]
                %6642 = vst [vmem:[%s6588 + $0xd0] sm:%s6580] %v6641
                %v6643 = vld [vmem:[%s6587 + $0x6c] sm:%s6580]
                %6644 = vst [vmem:[%s6588 + $0xd8] sm:%s6580] %v6643
                %v6645 = vld [vmem:[%s6587 + $0x70] sm:%s6580]
                %6646 = vst [vmem:[%s6588 + $0xe0] sm:%s6580] %v6645
                %v6647 = vld [vmem:[%s6587 + $0x74] sm:%s6580]
                %6648 = vst [vmem:[%s6588 + $0xe8] sm:%s6580] %v6647
                %v6649 = vld [vmem:[%s6587 + $0x78] sm:%s6580]
                %6650 = vst [vmem:[%s6588 + $0xf0] sm:%s6580] %v6649
                %v6651 = vld [vmem:[%s6587 + $0x7c] sm:%s6580]
                %6652 = vst [vmem:[%s6588 + $0xf8] sm:%s6580] %v6651
              $region110: #{bottleneck_forward.1} parent=104 // loop_footer
                %s6586 = sadd.s32 1, %s6582
              $region111: #{bottleneck_forward.1} parent=104 // loop_footer_branch
                %6581 = sbr.rel target = $region107
              $region112: #{bottleneck_forward.1} parent=104 // loop_exit
                _
            $region105: #{bottleneck_forward.1} parent=96 // pred_fallthru
              _
          $region97: #{bottleneck_forward.1} parent=92 // pred_fallthru
            _
          %6737 = vnop
        $region93: #{bottleneck_forward.1} parent=84 // pred_fallthru
          _
      $region85: #{bottleneck_forward.1} parent=5 // pred_fallthru
        _
      %p6738 = scmp.le.s32.totalorder 2, %s13
      // Predicated region
      $region131: #{bottleneck_forward.1} parent=5 // pred_check
        %p6739 = pneg %p6738
      $region132: #{bottleneck_forward.1} parent=5 // pred_check_branch
        %6741 = sbr.rel (%p6739) target = $region134
      $region133: #{bottleneck_forward.1} parent=5 // pred_region
        %s6742 = ssub.s32 %s13, 2
        // Predicated region
        $region135: #{bottleneck_forward.1} parent=133 // pred_check
          %p6743 = pneg %p194
        $region136: #{bottleneck_forward.1} parent=133 // pred_check_branch
          %6745 = sbr.rel (%p6743) target = $region138
        $region137: #{bottleneck_forward.1} parent=133 // pred_region
          %s6746 = sand.u32 %s179, 1
          %s6747 = sand.u32 %s179, 1
          %s6748 = smul.addr %s6747, 128
          %s6749 = scalar_lea.vmem [#allocation5], %s6748
        $region138: #{bottleneck_forward.1} parent=133 // pred_fallthru
          _
      $region134: #{bottleneck_forward.1} parent=5 // pred_fallthru
        _
    $region6: #{bottleneck_forward.1} parent=1 // loop_footer
      %s17 = sadd.s32 1, %s13
    $region7: #{bottleneck_forward.1} parent=1 // loop_footer_branch
      %12 = sbr.rel target = $region3
    $region8: #{bottleneck_forward.1} parent=1 // loop_exit
      _

</llo_original>
